<compile_context>
chip_gen: v7x
topology: tpu7x:2x2x1
jax: 0.10.0
libtpu: 0.0.40
codegen_flags: <defaults>
</compile_context>

<pallas_src>
import functools

import jax
import jax.numpy as jnp
from jax import lax
from jax.experimental import pallas as pl
from jax.experimental.pallas import tpu as pltpu

# --------------------------------------------------------------------------------------
# Constants matching the PyTorch module
# --------------------------------------------------------------------------------------
NUM_CHANNELS = 64
NUM_DGRAM_BINS = 39
DGRAM_MIN_BIN = 3.25
DGRAM_MAX_BIN = 50.75
POLYMER_TYPES_NUM = 31          # residue_names.POLYMER_TYPES_NUM_WITH_UNKNOWN_AND_GAP
QUERY_DIM = 128
LN_EPS = 1e-5                   # torch.nn.LayerNorm default
NUM_GEO_CHANNELS = 6            # [dist2, pb_mask_2d, unit_x, unit_y, unit_z, bb_mask_2d]

# Synthetic dense-atom layout constants (protein_data_processing tables are not shipped
# with the module source; values follow the AF3 dense-atom convention).
NUM_DENSE_ATOMS = 24
N_IDX, CA_IDX, C_IDX, CB_IDX = 0, 1, 2, 3
GLY_ID = 7

# TODO(synk): real protein_data_processing.RESTYPE_RIGIDGROUP_DENSE_ATOM_IDX not provided;
#             synthetic table with only the backbone group populated.
RESTYPE_RIGIDGROUP_DENSE_ATOM_IDX = jnp.zeros((POLYMER_TYPES_NUM, 8, 3), jnp.int32)
RESTYPE_RIGIDGROUP_DENSE_ATOM_IDX = RESTYPE_RIGIDGROUP_DENSE_ATOM_IDX.at[:, 0, :].set(
    jnp.array([C_IDX, CA_IDX, N_IDX], jnp.int32))


def _round_up(x, m):
    return (x + m - 1) // m * m


def _tile_config():
    """Pick (row-tile size, vmem_limit_bytes) from the chip generation.

    v4/v5/v6 parts have 128 MiB physical VMEM -> larger tiles amortize the ~0.35us/step
    grid overhead.  v7x has 64 MiB per TensorCore -> keep the double-buffered working set
    around ~20 MiB and leave compiler headroom (don't carry the big-tile config over).
    """
    kind = ""
    try:
        kind = jax.devices()[0].device_kind.lower()
    except Exception:
        pass
    if any(tag in kind for tag in ("v4", "v5", "v6")):
        return 64, 80 * 1024 * 1024
    return 32, 40 * 1024 * 1024


# --------------------------------------------------------------------------------------
# Fused Pallas kernel: features -> 9 summed linears -> output LayerNorm
# --------------------------------------------------------------------------------------
def _pair_embed_kernel(geo_ref, q_ref, row_ref, col_ref, lo_ref, hi_ref,
                       wd_ref, ws_ref, wq_ref, c1_ref, c2_ref, og_ref, ob_ref,
                       out_ref):
    ti, tj, _ = q_ref.shape
    r = ti * tj
    f32 = jnp.float32

    # ---- per-pair geometric features (channel-last block, free reshape) ------------
    g = geo_ref[...].reshape(r, NUM_GEO_CHANNELS)          # f32 (r, 6)
    dist2 = g[:, 0:1]                                       # (r, 1), keep f32 (bin edges)
    pb2d = g[:, 1:2]                                        # pseudo-beta pair mask

    # distogram as a pure boolean one-hot; strict inequalities as in the torch reference.
    in_bin = jnp.logical_and(dist2 > lo_ref[...], dist2 < hi_ref[...])      # (r, 39)
    dgram = in_bin.astype(wd_ref.dtype)                     # exact 0/1 in bf16

    # ---- MXU projections -------------------------------------------------------------
    # emb 0: distogram; pseudo-beta pair mask applied post-matmul (cheaper than (r,39)).
    acc = pb2d * jnp.dot(dgram, wd_ref[...], preferred_element_type=f32)
    # embs 1,4,5,6,7: one K=6 dot (row 0 of ws zeroes out the dist^2 channel).
    acc = acc + jnp.dot(g, ws_ref[...], preferred_element_type=f32)

    # emb 8: LayerNorm(query) with the affine / mean folded into the projection weight.
    q = q_ref[...].reshape(r, QUERY_DIM)                    # native dtype (bf16 or f32)
    qw = jnp.dot(q, wq_ref[...], preferred_element_type=f32)               # (r, 64)
    ones_q = jnp.ones((QUERY_DIM, 1), dtype=q.dtype)
    s1 = jnp.dot(q, ones_q, preferred_element_type=f32)                    # sum(q)
    s2 = jnp.dot(q * q, ones_q, preferred_element_type=f32)                # sum(q^2)
    mu = s1 * (1.0 / QUERY_DIM)
    var = jnp.maximum(s2 * (1.0 / QUERY_DIM) - mu * mu, 0.0)
    inv_std = lax.rsqrt(var + LN_EPS)
    acc = acc + (qw - mu * c1_ref[...]) * inv_std + c2_ref[...]

    # embs 2,3: rank-1 aatype one-hot projections of residue j (row) and residue i (col).
    acc = (acc.reshape(ti, tj, NUM_CHANNELS)
           + row_ref[...] + col_ref[...]).reshape(r, NUM_CHANNELS)

    # ---- fused output LayerNorm (pairformer stack omitted, see module TODO) ----------
    ones_c = jnp.ones((NUM_CHANNELS, 1), dtype=f32)
    t1 = jnp.dot(acc, ones_c, preferred_element_type=f32)
    t2 = jnp.dot(acc * acc, ones_c, preferred_element_type=f32)
    mu2 = t1 * (1.0 / NUM_CHANNELS)
    var2 = jnp.maximum(t2 * (1.0 / NUM_CHANNELS) - mu2 * mu2, 0.0)
    out = (acc - mu2) * lax.rsqrt(var2 + LN_EPS) * og_ref[...] + ob_ref[...]
    out_ref[...] = out.reshape(ti, tj, NUM_CHANNELS).astype(out_ref.dtype)


def pallas_pair_embed(geo, query_embedding, row_term, col_term, params, out_dtype):
    """geo: (N,N,6) f32, query_embedding: (N,N,128), row/col_term: (1,N,64)/(N,1,64)."""
    n = query_embedding.shape[0]
    ti_max, vmem_limit = _tile_config()
    tj = min(128, _round_up(n, 8))          # sublane dim of every pair block (%8 == 0)
    ti = min(ti_max, _round_up(n, 8))       # outer dim; ti*tj pairs per grid step
    grid = (pl.cdiv(n, ti), pl.cdiv(n, tj))

    lower = jnp.square(jnp.linspace(DGRAM_MIN_BIN, DGRAM_MAX_BIN, NUM_DGRAM_BINS,
                                    dtype=jnp.float32))
    upper = jnp.concatenate([lower[1:], jnp.array([1e8], jnp.float32)])
    lower = lower[None, :]
    upper = upper[None, :]

    # Fold LayerNorm(query)'s affine + mean subtraction into the emb-8 weight.
    wq = params['w_query'].astype(jnp.float32)                               # (128, 64)
    wq_prime = (params['q_gamma'][:, None] * wq).astype(jnp.bfloat16)        # diag(g) W
    c1 = jnp.sum(wq_prime.astype(jnp.float32), axis=0, keepdims=True)        # 1^T W'
    c2 = (params['q_beta'] @ wq)[None, :].astype(jnp.float32)                # beta @ W

    wd = params['w_dgram'].astype(jnp.bfloat16)                              # (39, 64)
    # (6, 64): zero row for the dist^2 channel, then [pb2d, ux, uy, uz, bb2d] weights.
    ws6 = jnp.concatenate(
        [jnp.zeros((1, NUM_CHANNELS), jnp.float32),
         params['w_scalar'].astype(jnp.float32)], axis=0)

    out_itemsize = jnp.dtype(out_dtype).itemsize
    q_itemsize = jnp.dtype(query_embedding.dtype).itemsize
    cost = pl.CostEstimate(
        flops=2 * n * n * (NUM_DGRAM_BINS + NUM_GEO_CHANNELS + QUERY_DIM + 2)
        * NUM_CHANNELS,
        transcendentals=2 * n * n,
        bytes_accessed=n * n * (NUM_GEO_CHANNELS * 4 + QUERY_DIM * q_itemsize
                                + NUM_CHANNELS * out_itemsize))

    return pl.pallas_call(
        _pair_embed_kernel,
        out_shape=jax.ShapeDtypeStruct((n, n, NUM_CHANNELS), out_dtype),
        grid_spec=pltpu.PrefetchScalarGridSpec(
            num_scalar_prefetch=0,
            grid=grid,
            in_specs=[
                pl.BlockSpec((ti, tj, NUM_GEO_CHANNELS), lambda i, j: (i, j, 0)),
                pl.BlockSpec((ti, tj, QUERY_DIM), lambda i, j: (i, j, 0)),
                pl.BlockSpec((1, tj, NUM_CHANNELS), lambda i, j: (0, j, 0)),
                pl.BlockSpec((ti, 1, NUM_CHANNELS), lambda i, j: (i, 0, 0)),
                pl.BlockSpec((1, NUM_DGRAM_BINS), lambda i, j: (0, 0)),
                pl.BlockSpec((1, NUM_DGRAM_BINS), lambda i, j: (0, 0)),
                pl.BlockSpec((NUM_DGRAM_BINS, NUM_CHANNELS), lambda i, j: (0, 0)),
                pl.BlockSpec((NUM_GEO_CHANNELS, NUM_CHANNELS), lambda i, j: (0, 0)),
                pl.BlockSpec((QUERY_DIM, NUM_CHANNELS), lambda i, j: (0, 0)),
                pl.BlockSpec((1, NUM_CHANNELS), lambda i, j: (0, 0)),
                pl.BlockSpec((1, NUM_CHANNELS), lambda i, j: (0, 0)),
                pl.BlockSpec((1, NUM_CHANNELS), lambda i, j: (0, 0)),
                pl.BlockSpec((1, NUM_CHANNELS), lambda i, j: (0, 0)),
            ],
            out_specs=pl.BlockSpec((ti, tj, NUM_CHANNELS), lambda i, j: (i, j, 0)),
        ),
        compiler_params=pltpu.CompilerParams(
            dimension_semantics=("parallel", "parallel"),
            vmem_limit_bytes=vmem_limit),
        cost_estimate=cost,
    )(geo, query_embedding,
      row_term.astype(jnp.bfloat16), col_term.astype(jnp.bfloat16),
      lower, upper, wd, ws6, wq_prime, c1, c2,
      params['out_gamma'].reshape(1, NUM_CHANNELS).astype(jnp.float32),
      params['out_beta'].reshape(1, NUM_CHANNELS).astype(jnp.float32))


# --------------------------------------------------------------------------------------
# Plain-JAX glue: tiny per-residue geometric construction
# --------------------------------------------------------------------------------------
def pseudo_beta_fn(aatype, positions, mask):
    # TODO(synk): scoring.pseudo_beta_fn source not provided; standard CB-else-CA rule.
    is_gly = (aatype == GLY_ID)
    ca, cb = positions[:, CA_IDX], positions[:, CB_IDX]
    pb_pos = jnp.where(is_gly[:, None], ca, cb)
    pb_mask = jnp.where(is_gly, mask[:, CA_IDX], mask[:, CB_IDX]).astype(jnp.float32)
    return pb_pos, pb_mask


def make_backbone_rigid(positions, mask, group_indices):
    """positions (N, A, 3), mask (N, A), group_indices (N, G, 3) -> (rot, trans, mask)."""
    backbone = group_indices[:, 0]                               # (N, 3)
    c_i, b_i, a_i = backbone[:, 0], backbone[:, 1], backbone[:, 2]

    take_m = lambda idx: jnp.take_along_axis(mask, idx[:, None], axis=1)[:, 0]
    rigid_mask = take_m(a_i) * take_m(b_i) * take_m(c_i)

    take_p = lambda idx: jnp.take_along_axis(positions, idx[:, None, None], axis=1)[:, 0]
    pa, pb, pc = take_p(a_i), take_p(b_i), take_p(c_i)

    # Rot3Array.from_two_vectors(pc - pb, pa - pb)   (Gram-Schmidt)
    def _normalize(v):
        return v / jnp.sqrt(jnp.maximum(jnp.sum(v * v, -1, keepdims=True), 1e-12))
    e0 = _normalize(pc - pb)
    e1v = pa - pb
    e1 = _normalize(e1v - jnp.sum(e1v * e0, -1, keepdims=True) * e0)
    e2 = jnp.cross(e0, e1)
    rot = jnp.stack([e0, e1, e2], axis=-1)                       # columns e0, e1, e2
    return rot, pb, rigid_mask.astype(jnp.float32)


# --------------------------------------------------------------------------------------
# Full forward pass
# --------------------------------------------------------------------------------------
def single_template_embedding_forward(params, query_embedding, aatype, atom_positions,
                                       atom_mask, padding_mask_2d, multichain_mask_2d):
    dtype = query_embedding.dtype

    atom_mask = atom_mask.astype(jnp.float32)
    atom_positions = atom_positions.astype(jnp.float32) * atom_mask[..., None]
    mc = multichain_mask_2d.astype(jnp.float32)

    pb_pos, pb_mask = pseudo_beta_fn(aatype, atom_positions, atom_mask)
    pb2d = pb_mask[:, None] * pb_mask[None, :] * mc
    dist2 = jnp.sum(jnp.square(pb_pos[:, None, :] - pb_pos[None, :, :]), axis=-1)

    group_idx = RESTYPE_RIGIDGROUP_DENSE_ATOM_IDX[aatype]        # (N, 8, 3)
    rot, trans, backbone_mask = make_backbone_rigid(atom_positions, atom_mask, group_idx)
    bb2d = backbone_mask[:, None] * backbone_mask[None, :] * mc

    # rigid.inverse().apply_to_point(points): R_i^T (t_j - t_i), then normalize + mask
    diff = trans[None, :, :] - trans[:, None, :]                 # (N, N, 3)
    rigid_vec = jnp.einsum('iba,ijb->ija', rot, diff)
    inv_norm = lax.rsqrt(jnp.maximum(jnp.sum(rigid_vec * rigid_vec, -1, keepdims=True),
                                     1e-12))
    unit = rigid_vec * inv_norm * bb2d[..., None]

    # 6-channel per-pair geometry block consumed by the fused kernel (single XLA fusion).
    # dist2 stays f32 (bin edges reach ~2575 A^2 where bf16 ulp would flip bins).
    geo = jnp.concatenate([dist2[..., None], pb2d[..., None], unit, bb2d[..., None]],
                          axis=-1).astype(jnp.float32)           # (N, N, 6)

    # Rank-1 aatype one-hot projections: never materialize (N, N, 31) broadcasts.
    aa_onehot = jax.nn.one_hot(aatype, POLYMER_TYPES_NUM, dtype=jnp.float32)
    row_term = (aa_onehot @ params['w_aa_row'])[None, :, :]      # template_pair_embedding_2
    col_term = (aa_onehot @ params['w_aa_col'])[:, None, :]      # template_pair_embedding_3

    # TODO(synk): template_embedding_iteration (2x pairformer.PairformerBlock) omitted —
    #             its source was not provided; padding_mask_2d is only consumed there.
    del padding_mask_2d

    return pallas_pair_embed(geo, query_embedding, row_term, col_term, params, dtype)


# --------------------------------------------------------------------------------------
# Deterministic parameter init (shapes from the module __init__)
# --------------------------------------------------------------------------------------
def init_params(key):
    keys = jax.random.split(key, 9)

    def lin(k, d):  # bias-free Linear(d, 64), stored pre-transposed as (d, 64)
        return jax.random.normal(k, (d, NUM_CHANNELS), jnp.float32) * 0.02

    w0 = lin(keys[0], NUM_DGRAM_BINS)        # dgram
    w1 = lin(keys[1], 1)                     # pseudo_beta_mask_2d
    w2 = lin(keys[2], POLYMER_TYPES_NUM)     # aatype one-hot (row, residue j)
    w3 = lin(keys[3], POLYMER_TYPES_NUM)     # aatype one-hot (col, residue i)
    w4 = lin(keys[4], 1)                     # unit_x
    w5 = lin(keys[5], 1)                     # unit_y
    w6 = lin(keys[6], 1)                     # unit_z
    w7 = lin(keys[7], 1)                     # backbone_mask_2d
    w8 = lin(keys[8], QUERY_DIM)             # LayerNorm(query)

    return dict(
        w_dgram=w0,
        w_scalar=jnp.concatenate([w1, w4, w5, w6, w7], axis=0),   # (5, 64)
        w_aa_row=w2,
        w_aa_col=w3,
        w_query=w8,
        q_gamma=jnp.ones((QUERY_DIM,), jnp.float32),
        q_beta=jnp.zeros((QUERY_DIM,), jnp.float32),
        out_gamma=jnp.ones((NUM_CHANNELS,), jnp.float32),
        out_beta=jnp.zeros((NUM_CHANNELS,), jnp.float32),
    )


if __name__ == "__main__":
    key = jax.random.PRNGKey(0)
    k_q, k_aa, k_pos, k_mask, k_par = jax.random.split(key, 5)

    num_res = 16
    # bf16 query embedding / output: halves the dominant HBM streams (rec from review).
    query_embedding = jax.random.normal(
        k_q, (num_res, num_res, QUERY_DIM), jnp.float32).astype(jnp.bfloat16)
    aatype = jax.random.randint(k_aa, (num_res,), 0, 20).astype(jnp.int32)
    atom_positions = jax.random.normal(k_pos, (num_res, NUM_DENSE_ATOMS, 3),
                                       jnp.float32) * 5.0
    atom_mask = (jax.random.uniform(k_mask, (num_res, NUM_DENSE_ATOMS)) > 0.05
                 ).astype(jnp.float32)
    padding_mask_2d = jnp.ones((num_res, num_res), jnp.float32)
    multichain_mask_2d = jnp.ones((num_res, num_res), jnp.float32)

    params = init_params(k_par)

    fwd = jax.jit(functools.partial(single_template_embedding_forward, params))
    out = fwd(query_embedding, aatype, atom_positions, atom_mask,
              padding_mask_2d, multichain_mask_2d)
    jax.block_until_ready(out)

    assert out.shape == (num_res, num_res, NUM_CHANNELS)
    assert out.dtype == query_embedding.dtype
    assert jnp.all(jnp.isfinite(out.astype(jnp.float32)))
    print("KERNEL_OK")
</pallas_src>

<mosaic_0001>
module attributes {stable_mosaic.version = 11 : i64} {
  func.func @_pair_embed_kernel(%arg0: i32, %arg1: i32, %arg2: memref<16x16x6xf32, #tpu.memory_space<vmem>>, %arg3: memref<16x16x128xbf16, #tpu.memory_space<vmem>>, %arg4: memref<1x16x64xbf16, #tpu.memory_space<vmem>>, %arg5: memref<16x1x64xbf16, #tpu.memory_space<vmem>>, %arg6: memref<1x39xf32, #tpu.memory_space<vmem>>, %arg7: memref<1x39xf32, #tpu.memory_space<vmem>>, %arg8: memref<39x64xbf16, #tpu.memory_space<vmem>>, %arg9: memref<6x64xf32, #tpu.memory_space<vmem>>, %arg10: memref<128x64xbf16, #tpu.memory_space<vmem>>, %arg11: memref<1x64xf32, #tpu.memory_space<vmem>>, %arg12: memref<1x64xf32, #tpu.memory_space<vmem>>, %arg13: memref<1x64xf32, #tpu.memory_space<vmem>>, %arg14: memref<1x64xf32, #tpu.memory_space<vmem>>, %arg15: memref<16x16x64xbf16, #tpu.memory_space<vmem>>) attributes {dimension_semantics = [#tpu.dimension_semantics<parallel>, #tpu.dimension_semantics<parallel>], iteration_bounds = array<i64: 1, 1>, scalar_prefetch = 0 : i64, scratch_operands = 0 : i64, tpu.core_type = #tpu.core_type<tc>, window_params = [{transform_indices = @transform_0, window_bounds = array<i64: 16, 16, 6>}, {transform_indices = @transform_1, window_bounds = array<i64: 16, 16, 128>}, {transform_indices = @transform_2, window_bounds = array<i64: 1, 16, 64>}, {transform_indices = @transform_3, window_bounds = array<i64: 16, 1, 64>}, {pipeline_mode = #tpu.pipeline_mode<synchronous>, transform_indices = @transform_4, window_bounds = array<i64: 1, 39>}, {pipeline_mode = #tpu.pipeline_mode<synchronous>, transform_indices = @transform_5, window_bounds = array<i64: 1, 39>}, {pipeline_mode = #tpu.pipeline_mode<synchronous>, transform_indices = @transform_6, window_bounds = array<i64: 39, 64>}, {pipeline_mode = #tpu.pipeline_mode<synchronous>, transform_indices = @transform_7, window_bounds = array<i64: 6, 64>}, {pipeline_mode = #tpu.pipeline_mode<synchronous>, transform_indices = @transform_8, window_bounds = array<i64: 128, 64>}, {pipeline_mode = #tpu.pipeline_mode<synchronous>, transform_indices = @transform_9, window_bounds = array<i64: 1, 64>}, {pipeline_mode = #tpu.pipeline_mode<synchronous>, transform_indices = @transform_10, window_bounds = array<i64: 1, 64>}, {pipeline_mode = #tpu.pipeline_mode<synchronous>, transform_indices = @transform_11, window_bounds = array<i64: 1, 64>}, {pipeline_mode = #tpu.pipeline_mode<synchronous>, transform_indices = @transform_12, window_bounds = array<i64: 1, 64>}, {transform_indices = @transform_13, window_bounds = array<i64: 16, 16, 64>}]} {
    %c0 = arith.constant 0 : index
    %c0_0 = arith.constant 0 : index
    %c0_1 = arith.constant 0 : index
    %0 = vector.load %arg2[%c0, %c0_0, %c0_1] : memref<16x16x6xf32, #tpu.memory_space<vmem>>, vector<16x16x6xf32>
    %1 = vector.shape_cast %0 : vector<16x16x6xf32> to vector<256x6xf32>
    %2 = vector.extract_strided_slice %1 {offsets = [0, 0], sizes = [256, 1], strides = [1, 1]} : vector<256x6xf32> to vector<256x1xf32>
    %3 = vector.extract_strided_slice %1 {offsets = [0, 1], sizes = [256, 1], strides = [1, 1]} : vector<256x6xf32> to vector<256x1xf32>
    %c0_2 = arith.constant 0 : index
    %c0_3 = arith.constant 0 : index
    %4 = vector.load %arg6[%c0_2, %c0_3] : memref<1x39xf32, #tpu.memory_space<vmem>>, vector<1x39xf32>
    %5 = vector.broadcast %2 : vector<256x1xf32> to vector<256x39xf32>
    %6 = vector.broadcast %4 : vector<1x39xf32> to vector<256x39xf32>
    %7 = arith.cmpf ogt, %5, %6 : vector<256x39xf32>
    %c0_4 = arith.constant 0 : index
    %c0_5 = arith.constant 0 : index
    %8 = vector.load %arg7[%c0_4, %c0_5] : memref<1x39xf32, #tpu.memory_space<vmem>>, vector<1x39xf32>
    %9 = vector.broadcast %2 : vector<256x1xf32> to vector<256x39xf32>
    %10 = vector.broadcast %8 : vector<1x39xf32> to vector<256x39xf32>
    %11 = arith.cmpf olt, %9, %10 : vector<256x39xf32>
    %12 = arith.andi %7, %11 : vector<256x39xi1>
    %13 = arith.extui %12 : vector<256x39xi1> to vector<256x39xi32>
    %14 = arith.sitofp %13 : vector<256x39xi32> to vector<256x39xf32>
    %15 = arith.truncf %14 : vector<256x39xf32> to vector<256x39xbf16>
    %c0_6 = arith.constant 0 : index
    %c0_7 = arith.constant 0 : index
    %16 = vector.load %arg8[%c0_6, %c0_7] : memref<39x64xbf16, #tpu.memory_space<vmem>>, vector<39x64xbf16>
    %cst = arith.constant dense<0.000000e+00> : vector<256x64xf32>
    %17 = tpu.matmul %15, %16, %cst {dimension_numbers = #tpu.dot_dimension_numbers<[1], [0], [0], [1], [0, 0, 1, 1], [], []>} : vector<256x39xbf16>, vector<39x64xbf16>, vector<256x64xf32> -> vector<256x64xf32>
    %18 = vector.broadcast %3 : vector<256x1xf32> to vector<256x64xf32>
    %19 = arith.mulf %18, %17 : vector<256x64xf32>
    %c0_8 = arith.constant 0 : index
    %c0_9 = arith.constant 0 : index
    %20 = vector.load %arg9[%c0_8, %c0_9] : memref<6x64xf32, #tpu.memory_space<vmem>>, vector<6x64xf32>
    %cst_10 = arith.constant dense<0.000000e+00> : vector<256x64xf32>
    %21 = tpu.matmul %1, %20, %cst_10 {dimension_numbers = #tpu.dot_dimension_numbers<[1], [0], [0], [1], [0, 0, 1, 1], [], []>} : vector<256x6xf32>, vector<6x64xf32>, vector<256x64xf32> -> vector<256x64xf32>
    %22 = arith.addf %19, %21 : vector<256x64xf32>
    %c0_11 = arith.constant 0 : index
    %c0_12 = arith.constant 0 : index
    %c0_13 = arith.constant 0 : index
    %23 = vector.load %arg3[%c0_11, %c0_12, %c0_13] : memref<16x16x128xbf16, #tpu.memory_space<vmem>>, vector<16x16x128xbf16>
    %24 = vector.shape_cast %23 : vector<16x16x128xbf16> to vector<256x128xbf16>
    %c0_14 = arith.constant 0 : index
    %c0_15 = arith.constant 0 : index
    %25 = vector.load %arg10[%c0_14, %c0_15] : memref<128x64xbf16, #tpu.memory_space<vmem>>, vector<128x64xbf16>
    %cst_16 = arith.constant dense<0.000000e+00> : vector<256x64xf32>
    %26 = tpu.matmul %24, %25, %cst_16 {dimension_numbers = #tpu.dot_dimension_numbers<[1], [0], [0], [1], [0, 0, 1, 1], [], []>} : vector<256x128xbf16>, vector<128x64xbf16>, vector<256x64xf32> -> vector<256x64xf32>
    %cst_17 = arith.constant 1.000000e+00 : bf16
    %27 = vector.broadcast %cst_17 : bf16 to vector<128x1xbf16>
    %cst_18 = arith.constant dense<0.000000e+00> : vector<256x1xf32>
    %28 = tpu.matmul %24, %27, %cst_18 {dimension_numbers = #tpu.dot_dimension_numbers<[1], [0], [0], [1], [0, 0, 1, 1], [], []>} : vector<256x128xbf16>, vector<128x1xbf16>, vector<256x1xf32> -> vector<256x1xf32>
    %29 = arith.mulf %24, %24 : vector<256x128xbf16>
    %cst_19 = arith.constant dense<0.000000e+00> : vector<256x1xf32>
    %30 = tpu.matmul %29, %27, %cst_19 {dimension_numbers = #tpu.dot_dimension_numbers<[1], [0], [0], [1], [0, 0, 1, 1], [], []>} : vector<256x128xbf16>, vector<128x1xbf16>, vector<256x1xf32> -> vector<256x1xf32>
    %cst_20 = arith.constant 7.812500e-03 : f32
    %31 = vector.broadcast %cst_20 : f32 to vector<256x1xf32>
    %32 = arith.mulf %28, %31 : vector<256x1xf32>
    %cst_21 = arith.constant 7.812500e-03 : f32
    %33 = vector.broadcast %cst_21 : f32 to vector<256x1xf32>
    %34 = arith.mulf %30, %33 : vector<256x1xf32>
    %35 = arith.mulf %32, %32 : vector<256x1xf32>
    %36 = arith.subf %34, %35 : vector<256x1xf32>
    %cst_22 = arith.constant 0.000000e+00 : f32
    %37 = vector.broadcast %cst_22 : f32 to vector<256x1xf32>
    %38 = arith.maximumf %36, %37 : vector<256x1xf32>
    %cst_23 = arith.constant 9.99999974E-6 : f32
    %39 = vector.broadcast %cst_23 : f32 to vector<256x1xf32>
    %40 = arith.addf %38, %39 : vector<256x1xf32>
    %41 = math.rsqrt %40 : vector<256x1xf32>
    %c0_24 = arith.constant 0 : index
    %c0_25 = arith.constant 0 : index
    %42 = vector.load %arg11[%c0_24, %c0_25] : memref<1x64xf32, #tpu.memory_space<vmem>>, vector<1x64xf32>
    %43 = vector.broadcast %32 : vector<256x1xf32> to vector<256x64xf32>
    %44 = vector.broadcast %42 : vector<1x64xf32> to vector<256x64xf32>
    %45 = arith.mulf %43, %44 : vector<256x64xf32>
    %46 = arith.subf %26, %45 : vector<256x64xf32>
    %47 = vector.broadcast %41 : vector<256x1xf32> to vector<256x64xf32>
    %48 = arith.mulf %46, %47 : vector<256x64xf32>
    %49 = arith.addf %22, %48 : vector<256x64xf32>
    %c0_26 = arith.constant 0 : index
    %c0_27 = arith.constant 0 : index
    %50 = vector.load %arg12[%c0_26, %c0_27] : memref<1x64xf32, #tpu.memory_space<vmem>>, vector<1x64xf32>
    %51 = vector.broadcast %50 : vector<1x64xf32> to vector<256x64xf32>
    %52 = arith.addf %49, %51 : vector<256x64xf32>
    %53 = vector.shape_cast %52 : vector<256x64xf32> to vector<16x16x64xf32>
    %c0_28 = arith.constant 0 : index
    %c0_29 = arith.constant 0 : index
    %c0_30 = arith.constant 0 : index
    %54 = vector.load %arg4[%c0_28, %c0_29, %c0_30] : memref<1x16x64xbf16, #tpu.memory_space<vmem>>, vector<1x16x64xbf16>
    %55 = arith.extf %54 : vector<1x16x64xbf16> to vector<1x16x64xf32>
    %56 = vector.broadcast %55 : vector<1x16x64xf32> to vector<16x16x64xf32>
    %57 = arith.addf %53, %56 : vector<16x16x64xf32>
    %c0_31 = arith.constant 0 : index
    %c0_32 = arith.constant 0 : index
    %c0_33 = arith.constant 0 : index
    %58 = vector.load %arg5[%c0_31, %c0_32, %c0_33] : memref<16x1x64xbf16, #tpu.memory_space<vmem>>, vector<16x1x64xbf16>
    %59 = arith.extf %58 : vector<16x1x64xbf16> to vector<16x1x64xf32>
    %60 = vector.broadcast %59 : vector<16x1x64xf32> to vector<16x16x64xf32>
    %61 = arith.addf %57, %60 : vector<16x16x64xf32>
    %62 = vector.shape_cast %61 : vector<16x16x64xf32> to vector<256x64xf32>
    %cst_34 = arith.constant 1.000000e+00 : f32
    %63 = vector.broadcast %cst_34 : f32 to vector<64x1xf32>
    %cst_35 = arith.constant dense<0.000000e+00> : vector<256x1xf32>
    %64 = tpu.matmul %62, %63, %cst_35 {dimension_numbers = #tpu.dot_dimension_numbers<[1], [0], [0], [1], [0, 0, 1, 1], [], []>} : vector<256x64xf32>, vector<64x1xf32>, vector<256x1xf32> -> vector<256x1xf32>
    %65 = arith.mulf %62, %62 : vector<256x64xf32>
    %cst_36 = arith.constant dense<0.000000e+00> : vector<256x1xf32>
    %66 = tpu.matmul %65, %63, %cst_36 {dimension_numbers = #tpu.dot_dimension_numbers<[1], [0], [0], [1], [0, 0, 1, 1], [], []>} : vector<256x64xf32>, vector<64x1xf32>, vector<256x1xf32> -> vector<256x1xf32>
    %cst_37 = arith.constant 1.562500e-02 : f32
    %67 = vector.broadcast %cst_37 : f32 to vector<256x1xf32>
    %68 = arith.mulf %64, %67 : vector<256x1xf32>
    %cst_38 = arith.constant 1.562500e-02 : f32
    %69 = vector.broadcast %cst_38 : f32 to vector<256x1xf32>
    %70 = arith.mulf %66, %69 : vector<256x1xf32>
    %71 = arith.mulf %68, %68 : vector<256x1xf32>
    %72 = arith.subf %70, %71 : vector<256x1xf32>
    %cst_39 = arith.constant 0.000000e+00 : f32
    %73 = vector.broadcast %cst_39 : f32 to vector<256x1xf32>
    %74 = arith.maximumf %72, %73 : vector<256x1xf32>
    %75 = vector.broadcast %68 : vector<256x1xf32> to vector<256x64xf32>
    %76 = arith.subf %62, %75 : vector<256x64xf32>
    %cst_40 = arith.constant 9.99999974E-6 : f32
    %77 = vector.broadcast %cst_40 : f32 to vector<256x1xf32>
    %78 = arith.addf %74, %77 : vector<256x1xf32>
    %79 = math.rsqrt %78 : vector<256x1xf32>
    %80 = vector.broadcast %79 : vector<256x1xf32> to vector<256x64xf32>
    %81 = arith.mulf %76, %80 : vector<256x64xf32>
    %c0_41 = arith.constant 0 : index
    %c0_42 = arith.constant 0 : index
    %82 = vector.load %arg13[%c0_41, %c0_42] : memref<1x64xf32, #tpu.memory_space<vmem>>, vector<1x64xf32>
    %83 = vector.broadcast %82 : vector<1x64xf32> to vector<256x64xf32>
    %84 = arith.mulf %81, %83 : vector<256x64xf32>
    %c0_43 = arith.constant 0 : index
    %c0_44 = arith.constant 0 : index
    %85 = vector.load %arg14[%c0_43, %c0_44] : memref<1x64xf32, #tpu.memory_space<vmem>>, vector<1x64xf32>
    %86 = vector.broadcast %85 : vector<1x64xf32> to vector<256x64xf32>
    %87 = arith.addf %84, %86 : vector<256x64xf32>
    %88 = vector.shape_cast %87 : vector<256x64xf32> to vector<16x16x64xf32>
    %89 = arith.truncf %88 : vector<16x16x64xf32> to vector<16x16x64xbf16>
    %c0_45 = arith.constant 0 : index
    %c0_46 = arith.constant 0 : index
    %c0_47 = arith.constant 0 : index
    %90 = vector.load %arg15[%c0_45, %c0_46, %c0_47] : memref<16x16x64xbf16, #tpu.memory_space<vmem>>, vector<16x16x64xbf16>
    tpu.vector_store %arg15[%c0_45, %c0_46, %c0_47], %89 {strides = array<i32>} : memref<16x16x64xbf16, #tpu.memory_space<vmem>>, vector<16x16x64xbf16>,
    return
  }
  func.func @transform_0(%arg0: i32, %arg1: i32) -> (i32, i32, i32) {
    %c0_i32 = arith.constant 0 : i32
    %c0_i32_0 = arith.constant 0 : i32
    return %arg0, %arg1, %c0_i32 : i32, i32, i32
  }
  func.func @transform_1(%arg0: i32, %arg1: i32) -> (i32, i32, i32) {
    %c0_i32 = arith.constant 0 : i32
    %c0_i32_0 = arith.constant 0 : i32
    return %arg0, %arg1, %c0_i32 : i32, i32, i32
  }
  func.func @transform_2(%arg0: i32, %arg1: i32) -> (i32, i32, i32) {
    %c0_i32 = arith.constant 0 : i32
    %c0_i32_0 = arith.constant 0 : i32
    %c0_i32_1 = arith.constant 0 : i32
    return %c0_i32, %arg1, %c0_i32_0 : i32, i32, i32
  }
  func.func @transform_3(%arg0: i32, %arg1: i32) -> (i32, i32, i32) {
    %c0_i32 = arith.constant 0 : i32
    %c0_i32_0 = arith.constant 0 : i32
    %c0_i32_1 = arith.constant 0 : i32
    return %arg0, %c0_i32, %c0_i32_0 : i32, i32, i32
  }
  func.func @transform_4(%arg0: i32, %arg1: i32) -> (i32, i32) {
    %c0_i32 = arith.constant 0 : i32
    %c0_i32_0 = arith.constant 0 : i32
    %c0_i32_1 = arith.constant 0 : i32
    return %c0_i32, %c0_i32_0 : i32, i32
  }
  func.func @transform_5(%arg0: i32, %arg1: i32) -> (i32, i32) {
    %c0_i32 = arith.constant 0 : i32
    %c0_i32_0 = arith.constant 0 : i32
    %c0_i32_1 = arith.constant 0 : i32
    return %c0_i32, %c0_i32_0 : i32, i32
  }
  func.func @transform_6(%arg0: i32, %arg1: i32) -> (i32, i32) {
    %c0_i32 = arith.constant 0 : i32
    %c0_i32_0 = arith.constant 0 : i32
    %c0_i32_1 = arith.constant 0 : i32
    return %c0_i32, %c0_i32_0 : i32, i32
  }
  func.func @transform_7(%arg0: i32, %arg1: i32) -> (i32, i32) {
    %c0_i32 = arith.constant 0 : i32
    %c0_i32_0 = arith.constant 0 : i32
    %c0_i32_1 = arith.constant 0 : i32
    return %c0_i32, %c0_i32_0 : i32, i32
  }
  func.func @transform_8(%arg0: i32, %arg1: i32) -> (i32, i32) {
    %c0_i32 = arith.constant 0 : i32
    %c0_i32_0 = arith.constant 0 : i32
    %c0_i32_1 = arith.constant 0 : i32
    return %c0_i32, %c0_i32_0 : i32, i32
  }
  func.func @transform_9(%arg0: i32, %arg1: i32) -> (i32, i32) {
    %c0_i32 = arith.constant 0 : i32
    %c0_i32_0 = arith.constant 0 : i32
    %c0_i32_1 = arith.constant 0 : i32
    return %c0_i32, %c0_i32_0 : i32, i32
  }
  func.func @transform_10(%arg0: i32, %arg1: i32) -> (i32, i32) {
    %c0_i32 = arith.constant 0 : i32
    %c0_i32_0 = arith.constant 0 : i32
    %c0_i32_1 = arith.constant 0 : i32
    return %c0_i32, %c0_i32_0 : i32, i32
  }
  func.func @transform_11(%arg0: i32, %arg1: i32) -> (i32, i32) {
    %c0_i32 = arith.constant 0 : i32
    %c0_i32_0 = arith.constant 0 : i32
    %c0_i32_1 = arith.constant 0 : i32
    return %c0_i32, %c0_i32_0 : i32, i32
  }
  func.func @transform_12(%arg0: i32, %arg1: i32) -> (i32, i32) {
    %c0_i32 = arith.constant 0 : i32
    %c0_i32_0 = arith.constant 0 : i32
    %c0_i32_1 = arith.constant 0 : i32
    return %c0_i32, %c0_i32_0 : i32, i32
  }
  func.func @transform_13(%arg0: i32, %arg1: i32) -> (i32, i32, i32) {
    %c0_i32 = arith.constant 0 : i32
    %c0_i32_0 = arith.constant 0 : i32
    return %arg0, %arg1, %c0_i32 : i32, i32, i32
  }
}

</mosaic_0001>

<llo_original>
// kernel: single_template_embedding_forward.1
$region0: #{single_template_embedding_forward.1}
  #allocation0 [shape = 'u32[]', space=smem, size = 0x4, offset = 0x4, fixed_abs, tag = 'smem constant byte address 0x4 - core index']
  #allocation1 [shape = 'u32[144,128]{1,0:T(1,128)}', space=vmem, size = 0x12000, scoped, tag = 'internal scratch']
  %s0 = inlined_call_operand.vmem [shape: f32[16,16,6], index: 0, kind: input, shape index: {}]
  %s1 = inlined_call_operand.vmem [shape: bf16[16,16,128], index: 1, kind: input, shape index: {}]
  %s2 = inlined_call_operand.vmem [shape: bf16[1,16,64], index: 2, kind: input, shape index: {}]
  %s3 = inlined_call_operand.vmem [shape: bf16[16,1,64], index: 3, kind: input, shape index: {}]
  %s4 = inlined_call_operand.vmem [shape: f32[1,39], index: 4, kind: input, shape index: {}]
  %s5 = inlined_call_operand.vmem [shape: f32[1,39], index: 5, kind: input, shape index: {}]
  %s6 = inlined_call_operand.vmem [shape: bf16[39,64], index: 6, kind: input, shape index: {}]
  %s7 = inlined_call_operand.vmem [shape: f32[6,64], index: 7, kind: input, shape index: {}]
  %s8 = inlined_call_operand.vmem [shape: bf16[128,64], index: 8, kind: input, shape index: {}]
  %s9 = inlined_call_operand.vmem [shape: f32[1,64], index: 9, kind: input, shape index: {}]
  %s10 = inlined_call_operand.vmem [shape: f32[1,64], index: 10, kind: input, shape index: {}, may-alias: {10,12}]
  %s11 = inlined_call_operand.vmem [shape: f32[1,64], index: 11, kind: input, shape index: {}]
  %s12 = inlined_call_operand.vmem [shape: f32[1,64], index: 12, kind: input, shape index: {}, may-alias: {10,12}]
  %s13 = inlined_call_operand.hbm [shape: bf16[16,16,64], index: 13, kind: output, shape index: {}]
  %s14 = sld [smem:[#allocation0]]
  $region62: #{single_template_embedding_forward.1} parent=0
    _
  %s16 = ssub.s32 1, %s14
  %s17 = scalar_select 0, %s16, %s14
  $region1: #{single_template_embedding_forward.1} parent=0
    #allocation2 [shape = 'u8[65536]{0}', space=vmem, size = 0x10000, scoped, tag = 'output window, operand 0, single buffered']
    #allocation3 [shape = 's32[1]{0}', space=sflag, size = 0x4, scoped, tag = 'scoped memory for single_template_embedding_forward.1']
    %18 = vsyncpa [#allocation3], 0
    // Predicated region
    $region2: #{single_template_embedding_forward.1} parent=1 // pred_check
      _
    $region3: #{single_template_embedding_forward.1} parent=1 // pred_check_branch
      %20 = sbr.rel (0) target = $region5
    $region4: #{single_template_embedding_forward.1} parent=1 // pred_region
      _
    $region5: #{single_template_embedding_forward.1} parent=1 // pred_fallthru
      _
    // Predicated region
    $region6: #{single_template_embedding_forward.1} parent=1 // pred_check
      _
    $region7: #{single_template_embedding_forward.1} parent=1 // pred_check_branch
      %22 = sbr.rel (0) target = $region9
    $region8: #{single_template_embedding_forward.1} parent=1 // pred_region
      _
    $region9: #{single_template_embedding_forward.1} parent=1 // pred_fallthru
      _
    // Predicated region
    $region10: #{single_template_embedding_forward.1} parent=1 // pred_check
      _
    $region11: #{single_template_embedding_forward.1} parent=1 // pred_check_branch
      %24 = sbr.rel (0) target = $region13
    $region12: #{single_template_embedding_forward.1} parent=1 // pred_region
      _
    $region13: #{single_template_embedding_forward.1} parent=1 // pred_fallthru
      _
    // Predicated region
    $region14: #{single_template_embedding_forward.1} parent=1 // pred_check
      _
    $region15: #{single_template_embedding_forward.1} parent=1 // pred_check_branch
      %26 = sbr.rel (0) target = $region17
    $region16: #{single_template_embedding_forward.1} parent=1 // pred_region
      _
    $region17: #{single_template_embedding_forward.1} parent=1 // pred_fallthru
      _
    // Predicated region
    $region18: #{single_template_embedding_forward.1} parent=1 // pred_check
      _
    $region19: #{single_template_embedding_forward.1} parent=1 // pred_check_branch
      %28 = sbr.rel (0) target = $region21
    $region20: #{single_template_embedding_forward.1} parent=1 // pred_region
      _
    $region21: #{single_template_embedding_forward.1} parent=1 // pred_fallthru
      _
    // Predicated region
    $region22: #{single_template_embedding_forward.1} parent=1 // pred_check
      _
    $region23: #{single_template_embedding_forward.1} parent=1 // pred_check_branch
      %30 = sbr.rel (0) target = $region25
    $region24: #{single_template_embedding_forward.1} parent=1 // pred_region
      _
    $region25: #{single_template_embedding_forward.1} parent=1 // pred_fallthru
      _
    // Predicated region
    $region26: #{single_template_embedding_forward.1} parent=1 // pred_check
      _
    $region27: #{single_template_embedding_forward.1} parent=1 // pred_check_branch
      %32 = sbr.rel (0) target = $region29
    $region28: #{single_template_embedding_forward.1} parent=1 // pred_region
      _
    $region29: #{single_template_embedding_forward.1} parent=1 // pred_fallthru
      _
    // Predicated region
    $region30: #{single_template_embedding_forward.1} parent=1 // pred_check
      _
    $region31: #{single_template_embedding_forward.1} parent=1 // pred_check_branch
      %34 = sbr.rel (0) target = $region33
    $region32: #{single_template_embedding_forward.1} parent=1 // pred_region
      _
    $region33: #{single_template_embedding_forward.1} parent=1 // pred_fallthru
      _
    // Predicated region
    $region34: #{single_template_embedding_forward.1} parent=1 // pred_check
      _
    $region35: #{single_template_embedding_forward.1} parent=1 // pred_check_branch
      %36 = sbr.rel (0) target = $region37
    $region36: #{single_template_embedding_forward.1} parent=1 // pred_region
      _
    $region37: #{single_template_embedding_forward.1} parent=1 // pred_fallthru
      _
    // Predicated region
    $region38: #{single_template_embedding_forward.1} parent=1 // pred_check
      _
    $region39: #{single_template_embedding_forward.1} parent=1 // pred_check_branch
      %38 = sbr.rel (0) target = $region41
    $region40: #{single_template_embedding_forward.1} parent=1 // pred_region
      _
    $region41: #{single_template_embedding_forward.1} parent=1 // pred_fallthru
      _
    // Predicated region
    $region42: #{single_template_embedding_forward.1} parent=1 // pred_check
      _
    $region43: #{single_template_embedding_forward.1} parent=1 // pred_check_branch
      %40 = sbr.rel (0) target = $region45
    $region44: #{single_template_embedding_forward.1} parent=1 // pred_region
      _
    $region45: #{single_template_embedding_forward.1} parent=1 // pred_fallthru
      _
    // Predicated region
    $region46: #{single_template_embedding_forward.1} parent=1 // pred_check
      _
    $region47: #{single_template_embedding_forward.1} parent=1 // pred_check_branch
      %42 = sbr.rel (0) target = $region49
    $region48: #{single_template_embedding_forward.1} parent=1 // pred_region
      _
    $region49: #{single_template_embedding_forward.1} parent=1 // pred_fallthru
      _
    // Predicated region
    $region50: #{single_template_embedding_forward.1} parent=1 // pred_check
      _
    $region51: #{single_template_embedding_forward.1} parent=1 // pred_check_branch
      %44 = sbr.rel (0) target = $region53
    $region52: #{single_template_embedding_forward.1} parent=1 // pred_region
      _
    $region53: #{single_template_embedding_forward.1} parent=1 // pred_fallthru
      _
    %v47 = vld [vmem:[%s0] sm:$0xff]
    %v48 = vld [vmem:[%s0 + $0x8] sm:$0xff]
    %v49 = vld [vmem:[%s0 + $0x10] sm:$0xff]
    %v50 = vld [vmem:[%s0 + $0x18] sm:$0xff]
    %v51 = vld [vmem:[%s0 + $0x20] sm:$0xff]
    %v52 = vld [vmem:[%s0 + $0x28] sm:$0xff]
    %v53 = vld [vmem:[%s0 + $0x30] sm:$0xff]
    %v54 = vld [vmem:[%s0 + $0x38] sm:$0xff]
    %v55 = vld [vmem:[%s0 + $0x40] sm:$0xff]
    %v56 = vld [vmem:[%s0 + $0x48] sm:$0xff]
    %v57 = vld [vmem:[%s0 + $0x50] sm:$0xff]
    %v58 = vld [vmem:[%s0 + $0x58] sm:$0xff]
    %v59 = vld [vmem:[%s0 + $0x60] sm:$0xff]
    %v60 = vld [vmem:[%s0 + $0x68] sm:$0xff]
    %v61 = vld [vmem:[%s0 + $0x70] sm:$0xff]
    %v62 = vld [vmem:[%s0 + $0x78] sm:$0xff]
    %v63 = vld [vmem:[%s0 + $0x80] sm:$0xff]
    %v64 = vld [vmem:[%s0 + $0x88] sm:$0xff]
    %v65 = vld [vmem:[%s0 + $0x90] sm:$0xff]
    %v66 = vld [vmem:[%s0 + $0x98] sm:$0xff]
    %v67 = vld [vmem:[%s0 + $0xa0] sm:$0xff]
    %v68 = vld [vmem:[%s0 + $0xa8] sm:$0xff]
    %v69 = vld [vmem:[%s0 + $0xb0] sm:$0xff]
    %v70 = vld [vmem:[%s0 + $0xb8] sm:$0xff]
    %v71 = vld [vmem:[%s0 + $0xc0] sm:$0xff]
    %v72 = vld [vmem:[%s0 + $0xc8] sm:$0xff]
    %v73 = vld [vmem:[%s0 + $0xd0] sm:$0xff]
    %v74 = vld [vmem:[%s0 + $0xd8] sm:$0xff]
    %v75 = vld [vmem:[%s0 + $0xe0] sm:$0xff]
    %v76 = vld [vmem:[%s0 + $0xe8] sm:$0xff]
    %v77 = vld [vmem:[%s0 + $0xf0] sm:$0xff]
    %v78 = vld [vmem:[%s0 + $0xf8] sm:$0xff]
    %v79 = vld [vmem:[%s4] sm:$0x1]
    %81 = vset.pattern.permute.xlu0 0
    %82 = vperm.xlu0 %81, %v47
    %v83 = vpop.permute.xlu0 %82
    %86 = vset.pattern.permute.xlu0 0
    %87 = vperm.xlu0 %86, %v48
    %v88 = vpop.permute.xlu0 %87
    %91 = vset.pattern.permute.xlu0 0
    %92 = vperm.xlu0 %91, %v49
    %v93 = vpop.permute.xlu0 %92
    %96 = vset.pattern.permute.xlu0 0
    %97 = vperm.xlu0 %96, %v50
    %v98 = vpop.permute.xlu0 %97
    %101 = vset.pattern.permute.xlu0 0
    %102 = vperm.xlu0 %101, %v51
    %v103 = vpop.permute.xlu0 %102
    %106 = vset.pattern.permute.xlu0 0
    %107 = vperm.xlu0 %106, %v52
    %v108 = vpop.permute.xlu0 %107
    %111 = vset.pattern.permute.xlu0 0
    %112 = vperm.xlu0 %111, %v53
    %v113 = vpop.permute.xlu0 %112
    %116 = vset.pattern.permute.xlu0 0
    %117 = vperm.xlu0 %116, %v54
    %v118 = vpop.permute.xlu0 %117
    %121 = vset.pattern.permute.xlu0 0
    %122 = vperm.xlu0 %121, %v55
    %v123 = vpop.permute.xlu0 %122
    %126 = vset.pattern.permute.xlu0 0
    %127 = vperm.xlu0 %126, %v56
    %v128 = vpop.permute.xlu0 %127
    %131 = vset.pattern.permute.xlu0 0
    %132 = vperm.xlu0 %131, %v57
    %v133 = vpop.permute.xlu0 %132
    %136 = vset.pattern.permute.xlu0 0
    %137 = vperm.xlu0 %136, %v58
    %v138 = vpop.permute.xlu0 %137
    %141 = vset.pattern.permute.xlu0 0
    %142 = vperm.xlu0 %141, %v59
    %v143 = vpop.permute.xlu0 %142
    %146 = vset.pattern.permute.xlu0 0
    %147 = vperm.xlu0 %146, %v60
    %v148 = vpop.permute.xlu0 %147
    %151 = vset.pattern.permute.xlu0 0
    %152 = vperm.xlu0 %151, %v61
    %v153 = vpop.permute.xlu0 %152
    %156 = vset.pattern.permute.xlu0 0
    %157 = vperm.xlu0 %156, %v62
    %v158 = vpop.permute.xlu0 %157
    %161 = vset.pattern.permute.xlu0 0
    %162 = vperm.xlu0 %161, %v63
    %v163 = vpop.permute.xlu0 %162
    %166 = vset.pattern.permute.xlu0 0
    %167 = vperm.xlu0 %166, %v64
    %v168 = vpop.permute.xlu0 %167
    %171 = vset.pattern.permute.xlu0 0
    %172 = vperm.xlu0 %171, %v65
    %v173 = vpop.permute.xlu0 %172
    %176 = vset.pattern.permute.xlu0 0
    %177 = vperm.xlu0 %176, %v66
    %v178 = vpop.permute.xlu0 %177
    %181 = vset.pattern.permute.xlu0 0
    %182 = vperm.xlu0 %181, %v67
    %v183 = vpop.permute.xlu0 %182
    %186 = vset.pattern.permute.xlu0 0
    %187 = vperm.xlu0 %186, %v68
    %v188 = vpop.permute.xlu0 %187
    %191 = vset.pattern.permute.xlu0 0
    %192 = vperm.xlu0 %191, %v69
    %v193 = vpop.permute.xlu0 %192
    %196 = vset.pattern.permute.xlu0 0
    %197 = vperm.xlu0 %196, %v70
    %v198 = vpop.permute.xlu0 %197
    %201 = vset.pattern.permute.xlu0 0
    %202 = vperm.xlu0 %201, %v71
    %v203 = vpop.permute.xlu0 %202
    %206 = vset.pattern.permute.xlu0 0
    %207 = vperm.xlu0 %206, %v72
    %v208 = vpop.permute.xlu0 %207
    %211 = vset.pattern.permute.xlu0 0
    %212 = vperm.xlu0 %211, %v73
    %v213 = vpop.permute.xlu0 %212
    %216 = vset.pattern.permute.xlu0 0
    %217 = vperm.xlu0 %216, %v74
    %v218 = vpop.permute.xlu0 %217
    %221 = vset.pattern.permute.xlu0 0
    %222 = vperm.xlu0 %221, %v75
    %v223 = vpop.permute.xlu0 %222
    %226 = vset.pattern.permute.xlu0 0
    %227 = vperm.xlu0 %226, %v76
    %v228 = vpop.permute.xlu0 %227
    %231 = vset.pattern.permute.xlu0 0
    %232 = vperm.xlu0 %231, %v77
    %v233 = vpop.permute.xlu0 %232
    %236 = vset.pattern.permute.xlu0 0
    %237 = vperm.xlu0 %236, %v78
    %v238 = vpop.permute.xlu0 %237
    %v241 = vlaneseq
    %v242 = vshrl.u32 %v241, 7
    %v243 = vsub.s32 0, %v242
    %v244 = vrot.slane %v79, %v243
    %vm246 = vcmp.gt.f32.partialorder %v83, %v244
    %vm247 = vcmp.gt.f32.partialorder %v88, %v244
    %vm248 = vcmp.gt.f32.partialorder %v93, %v244
    %vm249 = vcmp.gt.f32.partialorder %v98, %v244
    %vm250 = vcmp.gt.f32.partialorder %v103, %v244
    %vm251 = vcmp.gt.f32.partialorder %v108, %v244
    %vm252 = vcmp.gt.f32.partialorder %v113, %v244
    %vm253 = vcmp.gt.f32.partialorder %v118, %v244
    %vm254 = vcmp.gt.f32.partialorder %v123, %v244
    %vm255 = vcmp.gt.f32.partialorder %v128, %v244
    %vm256 = vcmp.gt.f32.partialorder %v133, %v244
    %vm257 = vcmp.gt.f32.partialorder %v138, %v244
    %vm258 = vcmp.gt.f32.partialorder %v143, %v244
    %vm259 = vcmp.gt.f32.partialorder %v148, %v244
    %vm260 = vcmp.gt.f32.partialorder %v153, %v244
    %vm261 = vcmp.gt.f32.partialorder %v158, %v244
    %vm262 = vcmp.gt.f32.partialorder %v163, %v244
    %vm263 = vcmp.gt.f32.partialorder %v168, %v244
    %vm264 = vcmp.gt.f32.partialorder %v173, %v244
    %vm265 = vcmp.gt.f32.partialorder %v178, %v244
    %vm266 = vcmp.gt.f32.partialorder %v183, %v244
    %vm267 = vcmp.gt.f32.partialorder %v188, %v244
    %vm268 = vcmp.gt.f32.partialorder %v193, %v244
    %vm269 = vcmp.gt.f32.partialorder %v198, %v244
    %vm270 = vcmp.gt.f32.partialorder %v203, %v244
    %vm271 = vcmp.gt.f32.partialorder %v208, %v244
    %vm272 = vcmp.gt.f32.partialorder %v213, %v244
    %vm273 = vcmp.gt.f32.partialorder %v218, %v244
    %vm274 = vcmp.gt.f32.partialorder %v223, %v244
    %vm275 = vcmp.gt.f32.partialorder %v228, %v244
    %vm276 = vcmp.gt.f32.partialorder %v233, %v244
    %vm277 = vcmp.gt.f32.partialorder %v238, %v244
    %v278 = vld [vmem:[%s5] sm:$0x1]
    %v280 = vlaneseq
    %v281 = vshrl.u32 %v280, 7
    %v282 = vsub.s32 0, %v281
    %v283 = vrot.slane %v278, %v282
    %vm285 = vcmp.lt.f32.partialorder %v83, %v283
    %vm286 = vcmp.lt.f32.partialorder %v88, %v283
    %vm287 = vcmp.lt.f32.partialorder %v93, %v283
    %vm288 = vcmp.lt.f32.partialorder %v98, %v283
    %vm289 = vcmp.lt.f32.partialorder %v103, %v283
    %vm290 = vcmp.lt.f32.partialorder %v108, %v283
    %vm291 = vcmp.lt.f32.partialorder %v113, %v283
    %vm292 = vcmp.lt.f32.partialorder %v118, %v283
    %vm293 = vcmp.lt.f32.partialorder %v123, %v283
    %vm294 = vcmp.lt.f32.partialorder %v128, %v283
    %vm295 = vcmp.lt.f32.partialorder %v133, %v283
    %vm296 = vcmp.lt.f32.partialorder %v138, %v283
    %vm297 = vcmp.lt.f32.partialorder %v143, %v283
    %vm298 = vcmp.lt.f32.partialorder %v148, %v283
    %vm299 = vcmp.lt.f32.partialorder %v153, %v283
    %vm300 = vcmp.lt.f32.partialorder %v158, %v283
    %vm301 = vcmp.lt.f32.partialorder %v163, %v283
    %vm302 = vcmp.lt.f32.partialorder %v168, %v283
    %vm303 = vcmp.lt.f32.partialorder %v173, %v283
    %vm304 = vcmp.lt.f32.partialorder %v178, %v283
    %vm305 = vcmp.lt.f32.partialorder %v183, %v283
    %vm306 = vcmp.lt.f32.partialorder %v188, %v283
    %vm307 = vcmp.lt.f32.partialorder %v193, %v283
    %vm308 = vcmp.lt.f32.partialorder %v198, %v283
    %vm309 = vcmp.lt.f32.partialorder %v203, %v283
    %vm310 = vcmp.lt.f32.partialorder %v208, %v283
    %vm311 = vcmp.lt.f32.partialorder %v213, %v283
    %vm312 = vcmp.lt.f32.partialorder %v218, %v283
    %vm313 = vcmp.lt.f32.partialorder %v223, %v283
    %vm314 = vcmp.lt.f32.partialorder %v228, %v283
    %vm315 = vcmp.lt.f32.partialorder %v233, %v283
    %vm316 = vcmp.lt.f32.partialorder %v238, %v283
    %vm317 = vmand %vm246, %vm285
    %vm318 = vmand %vm247, %vm286
    %vm319 = vmand %vm248, %vm287
    %vm320 = vmand %vm249, %vm288
    %vm321 = vmand %vm250, %vm289
    %vm322 = vmand %vm251, %vm290
    %vm323 = vmand %vm252, %vm291
    %vm324 = vmand %vm253, %vm292
    %vm325 = vmand %vm254, %vm293
    %vm326 = vmand %vm255, %vm294
    %vm327 = vmand %vm256, %vm295
    %vm328 = vmand %vm257, %vm296
    %vm329 = vmand %vm258, %vm297
    %vm330 = vmand %vm259, %vm298
    %vm331 = vmand %vm260, %vm299
    %vm332 = vmand %vm261, %vm300
    %vm333 = vmand %vm262, %vm301
    %vm334 = vmand %vm263, %vm302
    %vm335 = vmand %vm264, %vm303
    %vm336 = vmand %vm265, %vm304
    %vm337 = vmand %vm266, %vm305
    %vm338 = vmand %vm267, %vm306
    %vm339 = vmand %vm268, %vm307
    %vm340 = vmand %vm269, %vm308
    %vm341 = vmand %vm270, %vm309
    %vm342 = vmand %vm271, %vm310
    %vm343 = vmand %vm272, %vm311
    %vm344 = vmand %vm273, %vm312
    %vm345 = vmand %vm274, %vm313
    %vm346 = vmand %vm275, %vm314
    %vm347 = vmand %vm276, %vm315
    %vm348 = vmand %vm277, %vm316
    %v349 = vsel %vm317, 1, 0
    %v350 = vsel %vm318, 1, 0
    %v351 = vsel %vm319, 1, 0
    %v352 = vsel %vm320, 1, 0
    %v353 = vsel %vm321, 1, 0
    %v354 = vsel %vm322, 1, 0
    %v355 = vsel %vm323, 1, 0
    %v356 = vsel %vm324, 1, 0
    %v357 = vsel %vm325, 1, 0
    %v358 = vsel %vm326, 1, 0
    %v359 = vsel %vm327, 1, 0
    %v360 = vsel %vm328, 1, 0
    %v361 = vsel %vm329, 1, 0
    %v362 = vsel %vm330, 1, 0
    %v363 = vsel %vm331, 1, 0
    %v364 = vsel %vm332, 1, 0
    %v365 = vsel %vm333, 1, 0
    %v366 = vsel %vm334, 1, 0
    %v367 = vsel %vm335, 1, 0
    %v368 = vsel %vm336, 1, 0
    %v369 = vsel %vm337, 1, 0
    %v370 = vsel %vm338, 1, 0
    %v371 = vsel %vm339, 1, 0
    %v372 = vsel %vm340, 1, 0
    %v373 = vsel %vm341, 1, 0
    %v374 = vsel %vm342, 1, 0
    %v375 = vsel %vm343, 1, 0
    %v376 = vsel %vm344, 1, 0
    %v377 = vsel %vm345, 1, 0
    %v378 = vsel %vm346, 1, 0
    %v379 = vsel %vm347, 1, 0
    %v380 = vsel %vm348, 1, 0
    %v381 = vcvt.s32.f32 %v349
    %v382 = vcvt.s32.f32 %v350
    %v383 = vcvt.s32.f32 %v351
    %v384 = vcvt.s32.f32 %v352
    %v385 = vcvt.s32.f32 %v353
    %v386 = vcvt.s32.f32 %v354
    %v387 = vcvt.s32.f32 %v355
    %v388 = vcvt.s32.f32 %v356
    %v389 = vcvt.s32.f32 %v357
    %v390 = vcvt.s32.f32 %v358
    %v391 = vcvt.s32.f32 %v359
    %v392 = vcvt.s32.f32 %v360
    %v393 = vcvt.s32.f32 %v361
    %v394 = vcvt.s32.f32 %v362
    %v395 = vcvt.s32.f32 %v363
    %v396 = vcvt.s32.f32 %v364
    %v397 = vcvt.s32.f32 %v365
    %v398 = vcvt.s32.f32 %v366
    %v399 = vcvt.s32.f32 %v367
    %v400 = vcvt.s32.f32 %v368
    %v401 = vcvt.s32.f32 %v369
    %v402 = vcvt.s32.f32 %v370
    %v403 = vcvt.s32.f32 %v371
    %v404 = vcvt.s32.f32 %v372
    %v405 = vcvt.s32.f32 %v373
    %v406 = vcvt.s32.f32 %v374
    %v407 = vcvt.s32.f32 %v375
    %v408 = vcvt.s32.f32 %v376
    %v409 = vcvt.s32.f32 %v377
    %v410 = vcvt.s32.f32 %v378
    %v411 = vcvt.s32.f32 %v379
    %v412 = vcvt.s32.f32 %v380
    %v413 = vpack.c.bf16 %v382, %v381
    %v414 = vpack.c.bf16 %v384, %v383
    %v415 = vpack.c.bf16 %v386, %v385
    %v416 = vpack.c.bf16 %v388, %v387
    %v417 = vpack.c.bf16 %v390, %v389
    %v418 = vpack.c.bf16 %v392, %v391
    %v419 = vpack.c.bf16 %v394, %v393
    %v420 = vpack.c.bf16 %v396, %v395
    %v421 = vpack.c.bf16 %v398, %v397
    %v422 = vpack.c.bf16 %v400, %v399
    %v423 = vpack.c.bf16 %v402, %v401
    %v424 = vpack.c.bf16 %v404, %v403
    %v425 = vpack.c.bf16 %v406, %v405
    %v426 = vpack.c.bf16 %v408, %v407
    %v427 = vpack.c.bf16 %v410, %v409
    %v428 = vpack.c.bf16 %v412, %v411
    %v429 = vld [vmem:[%s6] sm:$0xf]
    %v430 = vld [vmem:[%s6 + $0x4] sm:$0xf]
    %v431 = vld [vmem:[%s6 + $0x8] sm:$0xf]
    %v432 = vld [vmem:[%s6 + $0xc] sm:$0xf]
    %v433 = vld [vmem:[%s6 + $0x10] sm:$0xf]
    %v439 = vunpack.c.l.b16 %v429
    %v440 = vunpack.c.l.b16 %v430
    %v441 = vunpack.c.l.b16 %v431
    %v442 = vunpack.c.l.b16 %v432
    %v443 = vunpack.c.l.b16 %v433
    %v444 = vpack.c.b16 %v440, %v439
    %v445 = vpack.c.b16 %v442, %v441
    %v446 = vpack.c.b16 %v443, %v443
    %vm449 = vcmask 318464
    %v451 = vsel %vm449, %v413, 0
    %v454 = vsel %vm449, %v414, 0
    %v457 = vsel %vm449, %v415, 0
    %v460 = vsel %vm449, %v416, 0
    %v463 = vsel %vm449, %v417, 0
    %v466 = vsel %vm449, %v418, 0
    %v469 = vsel %vm449, %v419, 0
    %v472 = vsel %vm449, %v420, 0
    %v475 = vsel %vm449, %v421, 0
    %v478 = vsel %vm449, %v422, 0
    %v481 = vsel %vm449, %v423, 0
    %v484 = vsel %vm449, %v424, 0
    %v487 = vsel %vm449, %v425, 0
    %v490 = vsel %vm449, %v426, 0
    %v493 = vsel %vm449, %v427, 0
    %v496 = vsel %vm449, %v428, 0
    %vm498 = vcmask 1042432
    %vm499 = vcmask 1043456
    %v500 = vsel %vm498, 4294967295, 65535
    %v501 = vsel %vm499, %v500, 0
    %v503 = vand.u32 %v446, %v501
    %505 = vmatprep.subr.bf16.mxu0 0
    %506 = vmatpush1.bf16.msra.mxu0 %v444
    %507 = vmatprep.subr.bf16.mxu0 0
    %508 = vmatpush1.bf16.msra.mxu0 %v445
    %509 = vmatprep.subr.bf16.mxu0 0
    %510 = vmatpush1.bf16.msra.mxu0 %v503
    %511 = vmatprep.subr.bf16.mxu0 0
    %512 = vmatpush1.bf16.msra.mxu0 0
    %513 = vmatprep.subr.bf16.mxu0 0
    %514 = vmatpush1.bf16.msra.mxu0 0
    %515 = vmatprep.subr.bf16.mxu0 0
    %516 = vmatpush1.bf16.msra.mxu0 0
    %517 = vmatprep.subr.bf16.mxu0 0
    %518 = vmatpush1.bf16.msra.mxu0 0
    %519 = vmatprep.subr.bf16.mxu0 0
    %520 = vmatpush1.bf16.msra.mxu0 0
    %521 = vmatprep.subr.bf16.mxu0 0
    %522 = vmatpush1.bf16.msra.mxu0 0
    %523 = vmatprep.subr.bf16.mxu0 0
    %524 = vmatpush1.bf16.msra.mxu0 0
    %525 = vmatprep.subr.bf16.mxu0 0
    %526 = vmatpush1.bf16.msra.mxu0 0
    %527 = vmatprep.subr.bf16.mxu0 0
    %528 = vmatpush1.bf16.msra.mxu0 0
    %529 = vmatprep.subr.bf16.mxu0 0
    %530 = vmatpush1.bf16.msra.mxu0 0
    %531 = vmatprep.subr.bf16.mxu0 0
    %532 = vmatpush1.bf16.msra.mxu0 0
    %533 = vmatprep.subr.bf16.mxu0 0
    %534 = vmatpush1.bf16.msra.mxu0 0
    %535 = vmatprep.subr.bf16.mxu0 0
    %536 = vmatpush1.bf16.msra.mxu0 0
    %537 = vmatprep.mubr.bf16.mxu0 0
    %538 = vmatmul.mubr.bf16.gmra.mrb[0].mxu0 %v451
    %v539 = vpop.f32.mrb[0].mxu0
    %v540 = vadd.f32 0.0, %v539
    %v541 = vpop.f32.mrb[0].mxu0
    %v542 = vpop.f32.mrb[0].mxu0
    %v543 = vadd.f32 0.0, %v542
    %v544 = vpop.f32.mrb[0].mxu0
    %545 = vmatprep.mubr.bf16.mxu0 0
    %546 = vmatmul.mubr.bf16.gmra.mrb[0].mxu0 %v454
    %v547 = vpop.f32.mrb[0].mxu0
    %v548 = vadd.f32 0.0, %v547
    %v549 = vpop.f32.mrb[0].mxu0
    %v550 = vpop.f32.mrb[0].mxu0
    %v551 = vadd.f32 0.0, %v550
    %v552 = vpop.f32.mrb[0].mxu0
    %553 = vmatprep.mubr.bf16.mxu0 0
    %554 = vmatmul.mubr.bf16.gmra.mrb[0].mxu0 %v457
    %v555 = vpop.f32.mrb[0].mxu0
    %v556 = vadd.f32 0.0, %v555
    %v557 = vpop.f32.mrb[0].mxu0
    %v558 = vpop.f32.mrb[0].mxu0
    %v559 = vadd.f32 0.0, %v558
    %v560 = vpop.f32.mrb[0].mxu0
    %561 = vmatprep.mubr.bf16.mxu0 0
    %562 = vmatmul.mubr.bf16.gmra.mrb[0].mxu0 %v460
    %v563 = vpop.f32.mrb[0].mxu0
    %v564 = vadd.f32 0.0, %v563
    %v565 = vpop.f32.mrb[0].mxu0
    %v566 = vpop.f32.mrb[0].mxu0
    %v567 = vadd.f32 0.0, %v566
    %v568 = vpop.f32.mrb[0].mxu0
    %569 = vmatprep.mubr.bf16.mxu0 0
    %570 = vmatmul.mubr.bf16.gmra.mrb[0].mxu0 %v463
    %v571 = vpop.f32.mrb[0].mxu0
    %v572 = vadd.f32 0.0, %v571
    %v573 = vpop.f32.mrb[0].mxu0
    %v574 = vpop.f32.mrb[0].mxu0
    %v575 = vadd.f32 0.0, %v574
    %v576 = vpop.f32.mrb[0].mxu0
    %577 = vmatprep.mubr.bf16.mxu0 0
    %578 = vmatmul.mubr.bf16.gmra.mrb[0].mxu0 %v466
    %v579 = vpop.f32.mrb[0].mxu0
    %v580 = vadd.f32 0.0, %v579
    %v581 = vpop.f32.mrb[0].mxu0
    %v582 = vpop.f32.mrb[0].mxu0
    %v583 = vadd.f32 0.0, %v582
    %v584 = vpop.f32.mrb[0].mxu0
    %585 = vmatprep.mubr.bf16.mxu0 0
    %586 = vmatmul.mubr.bf16.gmra.mrb[0].mxu0 %v469
    %v587 = vpop.f32.mrb[0].mxu0
    %v588 = vadd.f32 0.0, %v587
    %v589 = vpop.f32.mrb[0].mxu0
    %v590 = vpop.f32.mrb[0].mxu0
    %v591 = vadd.f32 0.0, %v590
    %v592 = vpop.f32.mrb[0].mxu0
    %593 = vmatprep.mubr.bf16.mxu0 0
    %594 = vmatmul.mubr.bf16.gmra.mrb[0].mxu0 %v472
    %v595 = vpop.f32.mrb[0].mxu0
    %v596 = vadd.f32 0.0, %v595
    %v597 = vpop.f32.mrb[0].mxu0
    %v598 = vpop.f32.mrb[0].mxu0
    %v599 = vadd.f32 0.0, %v598
    %v600 = vpop.f32.mrb[0].mxu0
    %601 = vmatprep.mubr.bf16.mxu0 0
    %602 = vmatmul.mubr.bf16.gmra.mrb[0].mxu0 %v475
    %v603 = vpop.f32.mrb[0].mxu0
    %v604 = vadd.f32 0.0, %v603
    %v605 = vpop.f32.mrb[0].mxu0
    %v606 = vpop.f32.mrb[0].mxu0
    %v607 = vadd.f32 0.0, %v606
    %v608 = vpop.f32.mrb[0].mxu0
    %609 = vmatprep.mubr.bf16.mxu0 0
    %610 = vmatmul.mubr.bf16.gmra.mrb[0].mxu0 %v478
    %v611 = vpop.f32.mrb[0].mxu0
    %v612 = vadd.f32 0.0, %v611
    %v613 = vpop.f32.mrb[0].mxu0
    %v614 = vpop.f32.mrb[0].mxu0
    %v615 = vadd.f32 0.0, %v614
    %v616 = vpop.f32.mrb[0].mxu0
    %617 = vmatprep.mubr.bf16.mxu0 0
    %618 = vmatmul.mubr.bf16.gmra.mrb[0].mxu0 %v481
    %v619 = vpop.f32.mrb[0].mxu0
    %v620 = vadd.f32 0.0, %v619
    %v621 = vpop.f32.mrb[0].mxu0
    %v622 = vpop.f32.mrb[0].mxu0
    %v623 = vadd.f32 0.0, %v622
    %v624 = vpop.f32.mrb[0].mxu0
    %625 = vmatprep.mubr.bf16.mxu0 0
    %626 = vmatmul.mubr.bf16.gmra.mrb[0].mxu0 %v484
    %v627 = vpop.f32.mrb[0].mxu0
    %v628 = vadd.f32 0.0, %v627
    %v629 = vpop.f32.mrb[0].mxu0
    %v630 = vpop.f32.mrb[0].mxu0
    %v631 = vadd.f32 0.0, %v630
    %v632 = vpop.f32.mrb[0].mxu0
    %633 = vmatprep.mubr.bf16.mxu0 0
    %634 = vmatmul.mubr.bf16.gmra.mrb[0].mxu0 %v487
    %v635 = vpop.f32.mrb[0].mxu0
    %v636 = vadd.f32 0.0, %v635
    %v637 = vpop.f32.mrb[0].mxu0
    %v638 = vpop.f32.mrb[0].mxu0
    %v639 = vadd.f32 0.0, %v638
    %v640 = vpop.f32.mrb[0].mxu0
    %641 = vmatprep.mubr.bf16.mxu0 0
    %642 = vmatmul.mubr.bf16.gmra.mrb[0].mxu0 %v490
    %v643 = vpop.f32.mrb[0].mxu0
    %v644 = vadd.f32 0.0, %v643
    %v645 = vpop.f32.mrb[0].mxu0
    %v646 = vpop.f32.mrb[0].mxu0
    %v647 = vadd.f32 0.0, %v646
    %v648 = vpop.f32.mrb[0].mxu0
    %649 = vmatprep.mubr.bf16.mxu0 0
    %650 = vmatmul.mubr.bf16.gmra.mrb[0].mxu0 %v493
    %v651 = vpop.f32.mrb[0].mxu0
    %v652 = vadd.f32 0.0, %v651
    %v653 = vpop.f32.mrb[0].mxu0
    %v654 = vpop.f32.mrb[0].mxu0
    %v655 = vadd.f32 0.0, %v654
    %v656 = vpop.f32.mrb[0].mxu0
    %657 = vmatprep.mubr.bf16.mxu0 0
    %658 = vmatmul.mubr.bf16.gmra.mrb[0].mxu0 %v496
    %v659 = vpop.f32.mrb[0].mxu0
    %v660 = vadd.f32 0.0, %v659
    %v661 = vpop.f32.mrb[0].mxu0
    %v662 = vpop.f32.mrb[0].mxu0
    %v663 = vadd.f32 0.0, %v662
    %v664 = vpop.f32.mrb[0].mxu0
    %665 = vdwg.mxu0
    %666 = vset.pattern.permute.xlu0 1
    %667 = vperm.xlu0 %666, %v47
    %v668 = vpop.permute.xlu0 %667
    %670 = vset.pattern.permute.xlu0 1
    %671 = vperm.xlu0 %670, %v48
    %v672 = vpop.permute.xlu0 %671
    %674 = vset.pattern.permute.xlu0 1
    %675 = vperm.xlu0 %674, %v49
    %v676 = vpop.permute.xlu0 %675
    %678 = vset.pattern.permute.xlu0 1
    %679 = vperm.xlu0 %678, %v50
    %v680 = vpop.permute.xlu0 %679
    %682 = vset.pattern.permute.xlu0 1
    %683 = vperm.xlu0 %682, %v51
    %v684 = vpop.permute.xlu0 %683
    %686 = vset.pattern.permute.xlu0 1
    %687 = vperm.xlu0 %686, %v52
    %v688 = vpop.permute.xlu0 %687
    %690 = vset.pattern.permute.xlu0 1
    %691 = vperm.xlu0 %690, %v53
    %v692 = vpop.permute.xlu0 %691
    %694 = vset.pattern.permute.xlu0 1
    %695 = vperm.xlu0 %694, %v54
    %v696 = vpop.permute.xlu0 %695
    %698 = vset.pattern.permute.xlu0 1
    %699 = vperm.xlu0 %698, %v55
    %v700 = vpop.permute.xlu0 %699
    %702 = vset.pattern.permute.xlu0 1
    %703 = vperm.xlu0 %702, %v56
    %v704 = vpop.permute.xlu0 %703
    %706 = vset.pattern.permute.xlu0 1
    %707 = vperm.xlu0 %706, %v57
    %v708 = vpop.permute.xlu0 %707
    %710 = vset.pattern.permute.xlu0 1
    %711 = vperm.xlu0 %710, %v58
    %v712 = vpop.permute.xlu0 %711
    %714 = vset.pattern.permute.xlu0 1
    %715 = vperm.xlu0 %714, %v59
    %v716 = vpop.permute.xlu0 %715
    %718 = vset.pattern.permute.xlu0 1
    %719 = vperm.xlu0 %718, %v60
    %v720 = vpop.permute.xlu0 %719
    %722 = vset.pattern.permute.xlu0 1
    %723 = vperm.xlu0 %722, %v61
    %v724 = vpop.permute.xlu0 %723
    %726 = vset.pattern.permute.xlu0 1
    %727 = vperm.xlu0 %726, %v62
    %v728 = vpop.permute.xlu0 %727
    %730 = vset.pattern.permute.xlu0 1
    %731 = vperm.xlu0 %730, %v63
    %v732 = vpop.permute.xlu0 %731
    %734 = vset.pattern.permute.xlu0 1
    %735 = vperm.xlu0 %734, %v64
    %v736 = vpop.permute.xlu0 %735
    %738 = vset.pattern.permute.xlu0 1
    %739 = vperm.xlu0 %738, %v65
    %v740 = vpop.permute.xlu0 %739
    %742 = vset.pattern.permute.xlu0 1
    %743 = vperm.xlu0 %742, %v66
    %v744 = vpop.permute.xlu0 %743
    %746 = vset.pattern.permute.xlu0 1
    %747 = vperm.xlu0 %746, %v67
    %v748 = vpop.permute.xlu0 %747
    %750 = vset.pattern.permute.xlu0 1
    %751 = vperm.xlu0 %750, %v68
    %v752 = vpop.permute.xlu0 %751
    %754 = vset.pattern.permute.xlu0 1
    %755 = vperm.xlu0 %754, %v69
    %v756 = vpop.permute.xlu0 %755
    %758 = vset.pattern.permute.xlu0 1
    %759 = vperm.xlu0 %758, %v70
    %v760 = vpop.permute.xlu0 %759
    %762 = vset.pattern.permute.xlu0 1
    %763 = vperm.xlu0 %762, %v71
    %v764 = vpop.permute.xlu0 %763
    %766 = vset.pattern.permute.xlu0 1
    %767 = vperm.xlu0 %766, %v72
    %v768 = vpop.permute.xlu0 %767
    %770 = vset.pattern.permute.xlu0 1
    %771 = vperm.xlu0 %770, %v73
    %v772 = vpop.permute.xlu0 %771
    %774 = vset.pattern.permute.xlu0 1
    %775 = vperm.xlu0 %774, %v74
    %v776 = vpop.permute.xlu0 %775
    %778 = vset.pattern.permute.xlu0 1
    %779 = vperm.xlu0 %778, %v75
    %v780 = vpop.permute.xlu0 %779
    %782 = vset.pattern.permute.xlu0 1
    %783 = vperm.xlu0 %782, %v76
    %v784 = vpop.permute.xlu0 %783
    %786 = vset.pattern.permute.xlu0 1
    %787 = vperm.xlu0 %786, %v77
    %v788 = vpop.permute.xlu0 %787
    %790 = vset.pattern.permute.xlu0 1
    %791 = vperm.xlu0 %790, %v78
    %v792 = vpop.permute.xlu0 %791
    %v794 = vmul.f32 %v668, %v540
    %v795 = vmul.f32 %v672, %v543
    %v796 = vmul.f32 %v676, %v548
    %v797 = vmul.f32 %v680, %v551
    %v798 = vmul.f32 %v684, %v556
    %v799 = vmul.f32 %v688, %v559
    %v800 = vmul.f32 %v692, %v564
    %v801 = vmul.f32 %v696, %v567
    %v802 = vmul.f32 %v700, %v572
    %v803 = vmul.f32 %v704, %v575
    %v804 = vmul.f32 %v708, %v580
    %v805 = vmul.f32 %v712, %v583
    %v806 = vmul.f32 %v716, %v588
    %v807 = vmul.f32 %v720, %v591
    %v808 = vmul.f32 %v724, %v596
    %v809 = vmul.f32 %v728, %v599
    %v810 = vmul.f32 %v732, %v604
    %v811 = vmul.f32 %v736, %v607
    %v812 = vmul.f32 %v740, %v612
    %v813 = vmul.f32 %v744, %v615
    %v814 = vmul.f32 %v748, %v620
    %v815 = vmul.f32 %v752, %v623
    %v816 = vmul.f32 %v756, %v628
    %v817 = vmul.f32 %v760, %v631
    %v818 = vmul.f32 %v764, %v636
    %v819 = vmul.f32 %v768, %v639
    %v820 = vmul.f32 %v772, %v644
    %v821 = vmul.f32 %v776, %v647
    %v822 = vmul.f32 %v780, %v652
    %v823 = vmul.f32 %v784, %v655
    %v824 = vmul.f32 %v788, %v660
    %v825 = vmul.f32 %v792, %v663
    %v826 = vld [vmem:[%s7] sm:$0x3f]
    %vm827 = vcmask 48128
    %v828 = vsel %vm827, %v47, 0
    %v830 = vsel %vm827, %v48, 0
    %v832 = vsel %vm827, %v49, 0
    %v834 = vsel %vm827, %v50, 0
    %v836 = vsel %vm827, %v51, 0
    %v838 = vsel %vm827, %v52, 0
    %v840 = vsel %vm827, %v53, 0
    %v842 = vsel %vm827, %v54, 0
    %v844 = vsel %vm827, %v55, 0
    %v846 = vsel %vm827, %v56, 0
    %v848 = vsel %vm827, %v57, 0
    %v850 = vsel %vm827, %v58, 0
    %v852 = vsel %vm827, %v59, 0
    %v854 = vsel %vm827, %v60, 0
    %v856 = vsel %vm827, %v61, 0
    %v858 = vsel %vm827, %v62, 0
    %v860 = vsel %vm827, %v63, 0
    %v862 = vsel %vm827, %v64, 0
    %v864 = vsel %vm827, %v65, 0
    %v866 = vsel %vm827, %v66, 0
    %v868 = vsel %vm827, %v67, 0
    %v870 = vsel %vm827, %v68, 0
    %v872 = vsel %vm827, %v69, 0
    %v874 = vsel %vm827, %v70, 0
    %v876 = vsel %vm827, %v71, 0
    %v878 = vsel %vm827, %v72, 0
    %v880 = vsel %vm827, %v73, 0
    %v882 = vsel %vm827, %v74, 0
    %v884 = vsel %vm827, %v75, 0
    %v886 = vsel %vm827, %v76, 0
    %v888 = vsel %vm827, %v77, 0
    %v890 = vsel %vm827, %v78, 0
    %vm892 = vcmask 1045504
    %v894 = vsel %vm892, %v826, 0
    %896 = vmatprep.subr.mxu0 0.0
    %897 = vmatpush1.msra.mxu0 %v894
    %898 = vmatprep.subr.mxu0 0.0
    %899 = vmatpush1.msra.mxu0 0.0
    %900 = vmatprep.subr.mxu0 0.0
    %901 = vmatpush1.msra.mxu0 0.0
    %902 = vmatprep.subr.mxu0 0.0
    %903 = vmatpush1.msra.mxu0 0.0
    %904 = vmatprep.subr.mxu0 0.0
    %905 = vmatpush1.msra.mxu0 0.0
    %906 = vmatprep.subr.mxu0 0.0
    %907 = vmatpush1.msra.mxu0 0.0
    %908 = vmatprep.subr.mxu0 0.0
    %909 = vmatpush1.msra.mxu0 0.0
    %910 = vmatprep.subr.mxu0 0.0
    %911 = vmatpush1.msra.mxu0 0.0
    %912 = vmatprep.subr.mxu0 0.0
    %913 = vmatpush1.msra.mxu0 0.0
    %914 = vmatprep.subr.mxu0 0.0
    %915 = vmatpush1.msra.mxu0 0.0
    %916 = vmatprep.subr.mxu0 0.0
    %917 = vmatpush1.msra.mxu0 0.0
    %918 = vmatprep.subr.mxu0 0.0
    %919 = vmatpush1.msra.mxu0 0.0
    %920 = vmatprep.subr.mxu0 0.0
    %921 = vmatpush1.msra.mxu0 0.0
    %922 = vmatprep.subr.mxu0 0.0
    %923 = vmatpush1.msra.mxu0 0.0
    %924 = vmatprep.subr.mxu0 0.0
    %925 = vmatpush1.msra.mxu0 0.0
    %926 = vmatprep.subr.mxu0 0.0
    %927 = vmatpush1.msra.mxu0 0.0
    %928 = vmatprep.subr.mxu0 0.0
    %929 = vmatpush1.msra.mxu0 0.0
    %930 = vmatprep.subr.mxu0 0.0
    %931 = vmatpush1.msra.mxu0 0.0
    %932 = vmatprep.subr.mxu0 0.0
    %933 = vmatpush1.msra.mxu0 0.0
    %934 = vmatprep.subr.mxu0 0.0
    %935 = vmatpush1.msra.mxu0 0.0
    %936 = vmatprep.subr.mxu0 0.0
    %937 = vmatpush1.msra.mxu0 0.0
    %938 = vmatprep.subr.mxu0 0.0
    %939 = vmatpush1.msra.mxu0 0.0
    %940 = vmatprep.subr.mxu0 0.0
    %941 = vmatpush1.msra.mxu0 0.0
    %942 = vmatprep.subr.mxu0 0.0
    %943 = vmatpush1.msra.mxu0 0.0
    %944 = vmatprep.subr.mxu0 0.0
    %945 = vmatpush1.msra.mxu0 0.0
    %946 = vmatprep.subr.mxu0 0.0
    %947 = vmatpush1.msra.mxu0 0.0
    %948 = vmatprep.subr.mxu0 0.0
    %949 = vmatpush1.msra.mxu0 0.0
    %950 = vmatprep.subr.mxu0 0.0
    %951 = vmatpush1.msra.mxu0 0.0
    %952 = vmatprep.subr.mxu0 0.0
    %953 = vmatpush1.msra.mxu0 0.0
    %954 = vmatprep.subr.mxu0 0.0
    %955 = vmatpush1.msra.mxu0 0.0
    %956 = vmatprep.subr.mxu0 0.0
    %957 = vmatpush1.msra.mxu0 0.0
    %958 = vmatprep.subr.mxu0 0.0
    %959 = vmatpush1.msra.mxu0 0.0
    %960 = vmatprep.mubr.f32.mxu0 0.0
    %961 = vmatmul.mubr.f32.gmra.mrb[0].mxu0 %v828
    %v962 = vpop.f32.mrb[0].mxu0
    %v963 = vadd.f32 0.0, %v962
    %v964 = vpop.f32.mrb[0].mxu0
    %965 = vmatprep.mubr.f32.mxu0 0.0
    %966 = vmatmul.mubr.f32.gmra.mrb[0].mxu0 %v830
    %v967 = vpop.f32.mrb[0].mxu0
    %v968 = vadd.f32 0.0, %v967
    %v969 = vpop.f32.mrb[0].mxu0
    %970 = vmatprep.mubr.f32.mxu0 0.0
    %971 = vmatmul.mubr.f32.gmra.mrb[0].mxu0 %v832
    %v972 = vpop.f32.mrb[0].mxu0
    %v973 = vadd.f32 0.0, %v972
    %v974 = vpop.f32.mrb[0].mxu0
    %975 = vmatprep.mubr.f32.mxu0 0.0
    %976 = vmatmul.mubr.f32.gmra.mrb[0].mxu0 %v834
    %v977 = vpop.f32.mrb[0].mxu0
    %v978 = vadd.f32 0.0, %v977
    %v979 = vpop.f32.mrb[0].mxu0
    %980 = vmatprep.mubr.f32.mxu0 0.0
    %981 = vmatmul.mubr.f32.gmra.mrb[0].mxu0 %v836
    %v982 = vpop.f32.mrb[0].mxu0
    %v983 = vadd.f32 0.0, %v982
    %v984 = vpop.f32.mrb[0].mxu0
    %985 = vmatprep.mubr.f32.mxu0 0.0
    %986 = vmatmul.mubr.f32.gmra.mrb[0].mxu0 %v838
    %v987 = vpop.f32.mrb[0].mxu0
    %v988 = vadd.f32 0.0, %v987
    %v989 = vpop.f32.mrb[0].mxu0
    %990 = vmatprep.mubr.f32.mxu0 0.0
    %991 = vmatmul.mubr.f32.gmra.mrb[0].mxu0 %v840
    %v992 = vpop.f32.mrb[0].mxu0
    %v993 = vadd.f32 0.0, %v992
    %v994 = vpop.f32.mrb[0].mxu0
    %995 = vmatprep.mubr.f32.mxu0 0.0
    %996 = vmatmul.mubr.f32.gmra.mrb[0].mxu0 %v842
    %v997 = vpop.f32.mrb[0].mxu0
    %v998 = vadd.f32 0.0, %v997
    %v999 = vpop.f32.mrb[0].mxu0
    %1000 = vmatprep.mubr.f32.mxu0 0.0
    %1001 = vmatmul.mubr.f32.gmra.mrb[0].mxu0 %v844
    %v1002 = vpop.f32.mrb[0].mxu0
    %v1003 = vadd.f32 0.0, %v1002
    %v1004 = vpop.f32.mrb[0].mxu0
    %1005 = vmatprep.mubr.f32.mxu0 0.0
    %1006 = vmatmul.mubr.f32.gmra.mrb[0].mxu0 %v846
    %v1007 = vpop.f32.mrb[0].mxu0
    %v1008 = vadd.f32 0.0, %v1007
    %v1009 = vpop.f32.mrb[0].mxu0
    %1010 = vmatprep.mubr.f32.mxu0 0.0
    %1011 = vmatmul.mubr.f32.gmra.mrb[0].mxu0 %v848
    %v1012 = vpop.f32.mrb[0].mxu0
    %v1013 = vadd.f32 0.0, %v1012
    %v1014 = vpop.f32.mrb[0].mxu0
    %1015 = vmatprep.mubr.f32.mxu0 0.0
    %1016 = vmatmul.mubr.f32.gmra.mrb[0].mxu0 %v850
    %v1017 = vpop.f32.mrb[0].mxu0
    %v1018 = vadd.f32 0.0, %v1017
    %v1019 = vpop.f32.mrb[0].mxu0
    %1020 = vmatprep.mubr.f32.mxu0 0.0
    %1021 = vmatmul.mubr.f32.gmra.mrb[0].mxu0 %v852
    %v1022 = vpop.f32.mrb[0].mxu0
    %v1023 = vadd.f32 0.0, %v1022
    %v1024 = vpop.f32.mrb[0].mxu0
    %1025 = vmatprep.mubr.f32.mxu0 0.0
    %1026 = vmatmul.mubr.f32.gmra.mrb[0].mxu0 %v854
    %v1027 = vpop.f32.mrb[0].mxu0
    %v1028 = vadd.f32 0.0, %v1027
    %v1029 = vpop.f32.mrb[0].mxu0
    %1030 = vmatprep.mubr.f32.mxu0 0.0
    %1031 = vmatmul.mubr.f32.gmra.mrb[0].mxu0 %v856
    %v1032 = vpop.f32.mrb[0].mxu0
    %v1033 = vadd.f32 0.0, %v1032
    %v1034 = vpop.f32.mrb[0].mxu0
    %1035 = vmatprep.mubr.f32.mxu0 0.0
    %1036 = vmatmul.mubr.f32.gmra.mrb[0].mxu0 %v858
    %v1037 = vpop.f32.mrb[0].mxu0
    %v1038 = vadd.f32 0.0, %v1037
    %v1039 = vpop.f32.mrb[0].mxu0
    %1040 = vmatprep.mubr.f32.mxu0 0.0
    %1041 = vmatmul.mubr.f32.gmra.mrb[0].mxu0 %v860
    %v1042 = vpop.f32.mrb[0].mxu0
    %v1043 = vadd.f32 0.0, %v1042
    %v1044 = vpop.f32.mrb[0].mxu0
    %1045 = vmatprep.mubr.f32.mxu0 0.0
    %1046 = vmatmul.mubr.f32.gmra.mrb[0].mxu0 %v862
    %v1047 = vpop.f32.mrb[0].mxu0
    %v1048 = vadd.f32 0.0, %v1047
    %v1049 = vpop.f32.mrb[0].mxu0
    %1050 = vmatprep.mubr.f32.mxu0 0.0
    %1051 = vmatmul.mubr.f32.gmra.mrb[0].mxu0 %v864
    %v1052 = vpop.f32.mrb[0].mxu0
    %v1053 = vadd.f32 0.0, %v1052
    %v1054 = vpop.f32.mrb[0].mxu0
    %1055 = vmatprep.mubr.f32.mxu0 0.0
    %1056 = vmatmul.mubr.f32.gmra.mrb[0].mxu0 %v866
    %v1057 = vpop.f32.mrb[0].mxu0
    %v1058 = vadd.f32 0.0, %v1057
    %v1059 = vpop.f32.mrb[0].mxu0
    %1060 = vmatprep.mubr.f32.mxu0 0.0
    %1061 = vmatmul.mubr.f32.gmra.mrb[0].mxu0 %v868
    %v1062 = vpop.f32.mrb[0].mxu0
    %v1063 = vadd.f32 0.0, %v1062
    %v1064 = vpop.f32.mrb[0].mxu0
    %1065 = vmatprep.mubr.f32.mxu0 0.0
    %1066 = vmatmul.mubr.f32.gmra.mrb[0].mxu0 %v870
    %v1067 = vpop.f32.mrb[0].mxu0
    %v1068 = vadd.f32 0.0, %v1067
    %v1069 = vpop.f32.mrb[0].mxu0
    %1070 = vmatprep.mubr.f32.mxu0 0.0
    %1071 = vmatmul.mubr.f32.gmra.mrb[0].mxu0 %v872
    %v1072 = vpop.f32.mrb[0].mxu0
    %v1073 = vadd.f32 0.0, %v1072
    %v1074 = vpop.f32.mrb[0].mxu0
    %1075 = vmatprep.mubr.f32.mxu0 0.0
    %1076 = vmatmul.mubr.f32.gmra.mrb[0].mxu0 %v874
    %v1077 = vpop.f32.mrb[0].mxu0
    %v1078 = vadd.f32 0.0, %v1077
    %v1079 = vpop.f32.mrb[0].mxu0
    %1080 = vmatprep.mubr.f32.mxu0 0.0
    %1081 = vmatmul.mubr.f32.gmra.mrb[0].mxu0 %v876
    %v1082 = vpop.f32.mrb[0].mxu0
    %v1083 = vadd.f32 0.0, %v1082
    %v1084 = vpop.f32.mrb[0].mxu0
    %1085 = vmatprep.mubr.f32.mxu0 0.0
    %1086 = vmatmul.mubr.f32.gmra.mrb[0].mxu0 %v878
    %v1087 = vpop.f32.mrb[0].mxu0
    %v1088 = vadd.f32 0.0, %v1087
    %v1089 = vpop.f32.mrb[0].mxu0
    %1090 = vmatprep.mubr.f32.mxu0 0.0
    %1091 = vmatmul.mubr.f32.gmra.mrb[0].mxu0 %v880
    %v1092 = vpop.f32.mrb[0].mxu0
    %v1093 = vadd.f32 0.0, %v1092
    %v1094 = vpop.f32.mrb[0].mxu0
    %1095 = vmatprep.mubr.f32.mxu0 0.0
    %1096 = vmatmul.mubr.f32.gmra.mrb[0].mxu0 %v882
    %v1097 = vpop.f32.mrb[0].mxu0
    %v1098 = vadd.f32 0.0, %v1097
    %v1099 = vpop.f32.mrb[0].mxu0
    %1100 = vmatprep.mubr.f32.mxu0 0.0
    %1101 = vmatmul.mubr.f32.gmra.mrb[0].mxu0 %v884
    %v1102 = vpop.f32.mrb[0].mxu0
    %v1103 = vadd.f32 0.0, %v1102
    %v1104 = vpop.f32.mrb[0].mxu0
    %1105 = vmatprep.mubr.f32.mxu0 0.0
    %1106 = vmatmul.mubr.f32.gmra.mrb[0].mxu0 %v886
    %v1107 = vpop.f32.mrb[0].mxu0
    %v1108 = vadd.f32 0.0, %v1107
    %v1109 = vpop.f32.mrb[0].mxu0
    %1110 = vmatprep.mubr.f32.mxu0 0.0
    %1111 = vmatmul.mubr.f32.gmra.mrb[0].mxu0 %v888
    %v1112 = vpop.f32.mrb[0].mxu0
    %v1113 = vadd.f32 0.0, %v1112
    %v1114 = vpop.f32.mrb[0].mxu0
    %1115 = vmatprep.mubr.f32.mxu0 0.0
    %1116 = vmatmul.mubr.f32.gmra.mrb[0].mxu0 %v890
    %v1117 = vpop.f32.mrb[0].mxu0
    %v1118 = vadd.f32 0.0, %v1117
    %v1119 = vpop.f32.mrb[0].mxu0
    %1120 = vdwg.mxu0
    %v1121 = vadd.f32 %v794, %v963
    %v1122 = vadd.f32 %v795, %v968
    %v1123 = vadd.f32 %v796, %v973
    %v1124 = vadd.f32 %v797, %v978
    %v1125 = vadd.f32 %v798, %v983
    %v1126 = vadd.f32 %v799, %v988
    %v1127 = vadd.f32 %v800, %v993
    %v1128 = vadd.f32 %v801, %v998
    %v1129 = vadd.f32 %v802, %v1003
    %v1130 = vadd.f32 %v803, %v1008
    %v1131 = vadd.f32 %v804, %v1013
    %v1132 = vadd.f32 %v805, %v1018
    %v1133 = vadd.f32 %v806, %v1023
    %v1134 = vadd.f32 %v807, %v1028
    %v1135 = vadd.f32 %v808, %v1033
    %v1136 = vadd.f32 %v809, %v1038
    %v1137 = vadd.f32 %v810, %v1043
    %v1138 = vadd.f32 %v811, %v1048
    %v1139 = vadd.f32 %v812, %v1053
    %v1140 = vadd.f32 %v813, %v1058
    %v1141 = vadd.f32 %v814, %v1063
    %v1142 = vadd.f32 %v815, %v1068
    %v1143 = vadd.f32 %v816, %v1073
    %v1144 = vadd.f32 %v817, %v1078
    %v1145 = vadd.f32 %v818, %v1083
    %v1146 = vadd.f32 %v819, %v1088
    %v1147 = vadd.f32 %v820, %v1093
    %v1148 = vadd.f32 %v821, %v1098
    %v1149 = vadd.f32 %v822, %v1103
    %v1150 = vadd.f32 %v823, %v1108
    %v1151 = vadd.f32 %v824, %v1113
    %v1152 = vadd.f32 %v825, %v1118
    %v1153 = vld [vmem:[%s1] sm:$0xf]
    %v1154 = vld [vmem:[%s1 + $0x4] sm:$0xf]
    %v1155 = vld [vmem:[%s1 + $0x8] sm:$0xf]
    %v1156 = vld [vmem:[%s1 + $0xc] sm:$0xf]
    %v1157 = vld [vmem:[%s1 + $0x10] sm:$0xf]
    %v1158 = vld [vmem:[%s1 + $0x14] sm:$0xf]
    %v1159 = vld [vmem:[%s1 + $0x18] sm:$0xf]
    %v1160 = vld [vmem:[%s1 + $0x1c] sm:$0xf]
    %v1161 = vld [vmem:[%s1 + $0x20] sm:$0xf]
    %v1162 = vld [vmem:[%s1 + $0x24] sm:$0xf]
    %v1163 = vld [vmem:[%s1 + $0x28] sm:$0xf]
    %v1164 = vld [vmem:[%s1 + $0x2c] sm:$0xf]
    %v1165 = vld [vmem:[%s1 + $0x30] sm:$0xf]
    %v1166 = vld [vmem:[%s1 + $0x34] sm:$0xf]
    %v1167 = vld [vmem:[%s1 + $0x38] sm:$0xf]
    %v1168 = vld [vmem:[%s1 + $0x3c] sm:$0xf]
    %v1169 = vld [vmem:[%s1 + $0x40] sm:$0xf]
    %v1170 = vld [vmem:[%s1 + $0x44] sm:$0xf]
    %v1171 = vld [vmem:[%s1 + $0x48] sm:$0xf]
    %v1172 = vld [vmem:[%s1 + $0x4c] sm:$0xf]
    %v1173 = vld [vmem:[%s1 + $0x50] sm:$0xf]
    %v1174 = vld [vmem:[%s1 + $0x54] sm:$0xf]
    %v1175 = vld [vmem:[%s1 + $0x58] sm:$0xf]
    %v1176 = vld [vmem:[%s1 + $0x5c] sm:$0xf]
    %v1177 = vld [vmem:[%s1 + $0x60] sm:$0xf]
    %v1178 = vld [vmem:[%s1 + $0x64] sm:$0xf]
    %v1179 = vld [vmem:[%s1 + $0x68] sm:$0xf]
    %v1180 = vld [vmem:[%s1 + $0x6c] sm:$0xf]
    %v1181 = vld [vmem:[%s1 + $0x70] sm:$0xf]
    %v1182 = vld [vmem:[%s1 + $0x74] sm:$0xf]
    %v1183 = vld [vmem:[%s1 + $0x78] sm:$0xf]
    %v1184 = vld [vmem:[%s1 + $0x7c] sm:$0xf]
    %v1185 = vld [vmem:[%s8] sm:$0xf]
    %v1186 = vld [vmem:[%s8 + $0x4] sm:$0xf]
    %v1187 = vld [vmem:[%s8 + $0x8] sm:$0xf]
    %v1188 = vld [vmem:[%s8 + $0xc] sm:$0xf]
    %v1189 = vld [vmem:[%s8 + $0x10] sm:$0xf]
    %v1190 = vld [vmem:[%s8 + $0x14] sm:$0xf]
    %v1191 = vld [vmem:[%s8 + $0x18] sm:$0xf]
    %v1192 = vld [vmem:[%s8 + $0x1c] sm:$0xf]
    %v1193 = vld [vmem:[%s8 + $0x20] sm:$0xf]
    %v1194 = vld [vmem:[%s8 + $0x24] sm:$0xf]
    %v1195 = vld [vmem:[%s8 + $0x28] sm:$0xf]
    %v1196 = vld [vmem:[%s8 + $0x2c] sm:$0xf]
    %v1197 = vld [vmem:[%s8 + $0x30] sm:$0xf]
    %v1198 = vld [vmem:[%s8 + $0x34] sm:$0xf]
    %v1199 = vld [vmem:[%s8 + $0x38] sm:$0xf]
    %v1200 = vld [vmem:[%s8 + $0x3c] sm:$0xf]
    %v1233 = vunpack.c.l.b16 %v1153
    %v1234 = vunpack.c.l.b16 %v1154
    %v1235 = vunpack.c.l.b16 %v1155
    %v1236 = vunpack.c.l.b16 %v1156
    %v1237 = vunpack.c.l.b16 %v1157
    %v1238 = vunpack.c.l.b16 %v1158
    %v1239 = vunpack.c.l.b16 %v1159
    %v1240 = vunpack.c.l.b16 %v1160
    %v1241 = vunpack.c.l.b16 %v1161
    %v1242 = vunpack.c.l.b16 %v1162
    %v1243 = vunpack.c.l.b16 %v1163
    %v1244 = vunpack.c.l.b16 %v1164
    %v1245 = vunpack.c.l.b16 %v1165
    %v1246 = vunpack.c.l.b16 %v1166
    %v1247 = vunpack.c.l.b16 %v1167
    %v1248 = vunpack.c.l.b16 %v1168
    %v1249 = vunpack.c.l.b16 %v1169
    %v1250 = vunpack.c.l.b16 %v1170
    %v1251 = vunpack.c.l.b16 %v1171
    %v1252 = vunpack.c.l.b16 %v1172
    %v1253 = vunpack.c.l.b16 %v1173
    %v1254 = vunpack.c.l.b16 %v1174
    %v1255 = vunpack.c.l.b16 %v1175
    %v1256 = vunpack.c.l.b16 %v1176
    %v1257 = vunpack.c.l.b16 %v1177
    %v1258 = vunpack.c.l.b16 %v1178
    %v1259 = vunpack.c.l.b16 %v1179
    %v1260 = vunpack.c.l.b16 %v1180
    %v1261 = vunpack.c.l.b16 %v1181
    %v1262 = vunpack.c.l.b16 %v1182
    %v1263 = vunpack.c.l.b16 %v1183
    %v1264 = vunpack.c.l.b16 %v1184
    %v1265 = vpack.c.b16 %v1234, %v1233
    %v1266 = vpack.c.b16 %v1236, %v1235
    %v1267 = vpack.c.b16 %v1238, %v1237
    %v1268 = vpack.c.b16 %v1240, %v1239
    %v1269 = vpack.c.b16 %v1242, %v1241
    %v1270 = vpack.c.b16 %v1244, %v1243
    %v1271 = vpack.c.b16 %v1246, %v1245
    %v1272 = vpack.c.b16 %v1248, %v1247
    %v1273 = vpack.c.b16 %v1250, %v1249
    %v1274 = vpack.c.b16 %v1252, %v1251
    %v1275 = vpack.c.b16 %v1254, %v1253
    %v1276 = vpack.c.b16 %v1256, %v1255
    %v1277 = vpack.c.b16 %v1258, %v1257
    %v1278 = vpack.c.b16 %v1260, %v1259
    %v1279 = vpack.c.b16 %v1262, %v1261
    %v1280 = vpack.c.b16 %v1264, %v1263
    %v1313 = vunpack.c.l.b16 %v1185
    %v1314 = vunpack.c.l.b16 %v1186
    %v1315 = vunpack.c.l.b16 %v1187
    %v1316 = vunpack.c.l.b16 %v1188
    %v1317 = vunpack.c.l.b16 %v1189
    %v1318 = vunpack.c.l.b16 %v1190
    %v1319 = vunpack.c.l.b16 %v1191
    %v1320 = vunpack.c.l.b16 %v1192
    %v1321 = vunpack.c.l.b16 %v1193
    %v1322 = vunpack.c.l.b16 %v1194
    %v1323 = vunpack.c.l.b16 %v1195
    %v1324 = vunpack.c.l.b16 %v1196
    %v1325 = vunpack.c.l.b16 %v1197
    %v1326 = vunpack.c.l.b16 %v1198
    %v1327 = vunpack.c.l.b16 %v1199
    %v1328 = vunpack.c.l.b16 %v1200
    %v1329 = vpack.c.b16 %v1314, %v1313
    %v1330 = vpack.c.b16 %v1316, %v1315
    %v1331 = vpack.c.b16 %v1318, %v1317
    %v1332 = vpack.c.b16 %v1320, %v1319
    %v1333 = vpack.c.b16 %v1322, %v1321
    %v1334 = vpack.c.b16 %v1324, %v1323
    %v1335 = vpack.c.b16 %v1326, %v1325
    %v1336 = vpack.c.b16 %v1328, %v1327
    %1345 = vmatprep.subr.bf16.mxu0 0
    %1346 = vmatpush1.bf16.msra.mxu0 %v1329
    %1347 = vmatprep.subr.bf16.mxu0 0
    %1348 = vmatpush1.bf16.msra.mxu0 %v1330
    %1349 = vmatprep.subr.bf16.mxu0 0
    %1350 = vmatpush1.bf16.msra.mxu0 %v1331
    %1351 = vmatprep.subr.bf16.mxu0 0
    %1352 = vmatpush1.bf16.msra.mxu0 %v1332
    %1353 = vmatprep.subr.bf16.mxu0 0
    %1354 = vmatpush1.bf16.msra.mxu0 %v1333
    %1355 = vmatprep.subr.bf16.mxu0 0
    %1356 = vmatpush1.bf16.msra.mxu0 %v1334
    %1357 = vmatprep.subr.bf16.mxu0 0
    %1358 = vmatpush1.bf16.msra.mxu0 %v1335
    %1359 = vmatprep.subr.bf16.mxu0 0
    %1360 = vmatpush1.bf16.msra.mxu0 %v1336
    %1361 = vmatprep.subr.bf16.mxu0 0
    %1362 = vmatpush1.bf16.msra.mxu0 0
    %1363 = vmatprep.subr.bf16.mxu0 0
    %1364 = vmatpush1.bf16.msra.mxu0 0
    %1365 = vmatprep.subr.bf16.mxu0 0
    %1366 = vmatpush1.bf16.msra.mxu0 0
    %1367 = vmatprep.subr.bf16.mxu0 0
    %1368 = vmatpush1.bf16.msra.mxu0 0
    %1369 = vmatprep.subr.bf16.mxu0 0
    %1370 = vmatpush1.bf16.msra.mxu0 0
    %1371 = vmatprep.subr.bf16.mxu0 0
    %1372 = vmatpush1.bf16.msra.mxu0 0
    %1373 = vmatprep.subr.bf16.mxu0 0
    %1374 = vmatpush1.bf16.msra.mxu0 0
    %1375 = vmatprep.subr.bf16.mxu0 0
    %1376 = vmatpush1.bf16.msra.mxu0 0
    %1377 = vmatprep.mubr.bf16.mxu0 0
    %1378 = vmatmul.mubr.bf16.gmra.mrb[0].mxu0 %v1265
    %v1379 = vpop.f32.mrb[0].mxu0
    %v1380 = vadd.f32 0.0, %v1379
    %v1381 = vpop.f32.mrb[0].mxu0
    %v1382 = vpop.f32.mrb[0].mxu0
    %v1383 = vadd.f32 0.0, %v1382
    %v1384 = vpop.f32.mrb[0].mxu0
    %1385 = vmatprep.mubr.bf16.mxu0 0
    %1386 = vmatmul.mubr.bf16.gmra.mrb[0].mxu0 %v1266
    %v1387 = vpop.f32.mrb[0].mxu0
    %v1388 = vadd.f32 0.0, %v1387
    %v1389 = vpop.f32.mrb[0].mxu0
    %v1390 = vpop.f32.mrb[0].mxu0
    %v1391 = vadd.f32 0.0, %v1390
    %v1392 = vpop.f32.mrb[0].mxu0
    %1393 = vmatprep.mubr.bf16.mxu0 0
    %1394 = vmatmul.mubr.bf16.gmra.mrb[0].mxu0 %v1267
    %v1395 = vpop.f32.mrb[0].mxu0
    %v1396 = vadd.f32 0.0, %v1395
    %v1397 = vpop.f32.mrb[0].mxu0
    %v1398 = vpop.f32.mrb[0].mxu0
    %v1399 = vadd.f32 0.0, %v1398
    %v1400 = vpop.f32.mrb[0].mxu0
    %1401 = vmatprep.mubr.bf16.mxu0 0
    %1402 = vmatmul.mubr.bf16.gmra.mrb[0].mxu0 %v1268
    %v1403 = vpop.f32.mrb[0].mxu0
    %v1404 = vadd.f32 0.0, %v1403
    %v1405 = vpop.f32.mrb[0].mxu0
    %v1406 = vpop.f32.mrb[0].mxu0
    %v1407 = vadd.f32 0.0, %v1406
    %v1408 = vpop.f32.mrb[0].mxu0
    %1409 = vmatprep.mubr.bf16.mxu0 0
    %1410 = vmatmul.mubr.bf16.gmra.mrb[0].mxu0 %v1269
    %v1411 = vpop.f32.mrb[0].mxu0
    %v1412 = vadd.f32 0.0, %v1411
    %v1413 = vpop.f32.mrb[0].mxu0
    %v1414 = vpop.f32.mrb[0].mxu0
    %v1415 = vadd.f32 0.0, %v1414
    %v1416 = vpop.f32.mrb[0].mxu0
    %1417 = vmatprep.mubr.bf16.mxu0 0
    %1418 = vmatmul.mubr.bf16.gmra.mrb[0].mxu0 %v1270
    %v1419 = vpop.f32.mrb[0].mxu0
    %v1420 = vadd.f32 0.0, %v1419
    %v1421 = vpop.f32.mrb[0].mxu0
    %v1422 = vpop.f32.mrb[0].mxu0
    %v1423 = vadd.f32 0.0, %v1422
    %v1424 = vpop.f32.mrb[0].mxu0
    %1425 = vmatprep.mubr.bf16.mxu0 0
    %1426 = vmatmul.mubr.bf16.gmra.mrb[0].mxu0 %v1271
    %v1427 = vpop.f32.mrb[0].mxu0
    %v1428 = vadd.f32 0.0, %v1427
    %v1429 = vpop.f32.mrb[0].mxu0
    %v1430 = vpop.f32.mrb[0].mxu0
    %v1431 = vadd.f32 0.0, %v1430
    %v1432 = vpop.f32.mrb[0].mxu0
    %1433 = vmatprep.mubr.bf16.mxu0 0
    %1434 = vmatmul.mubr.bf16.gmra.mrb[0].mxu0 %v1272
    %v1435 = vpop.f32.mrb[0].mxu0
    %v1436 = vadd.f32 0.0, %v1435
    %v1437 = vpop.f32.mrb[0].mxu0
    %v1438 = vpop.f32.mrb[0].mxu0
    %v1439 = vadd.f32 0.0, %v1438
    %v1440 = vpop.f32.mrb[0].mxu0
    %1441 = vmatprep.mubr.bf16.mxu0 0
    %1442 = vmatmul.mubr.bf16.gmra.mrb[0].mxu0 %v1273
    %v1443 = vpop.f32.mrb[0].mxu0
    %v1444 = vadd.f32 0.0, %v1443
    %v1445 = vpop.f32.mrb[0].mxu0
    %v1446 = vpop.f32.mrb[0].mxu0
    %v1447 = vadd.f32 0.0, %v1446
    %v1448 = vpop.f32.mrb[0].mxu0
    %1449 = vmatprep.mubr.bf16.mxu0 0
    %1450 = vmatmul.mubr.bf16.gmra.mrb[0].mxu0 %v1274
    %v1451 = vpop.f32.mrb[0].mxu0
    %v1452 = vadd.f32 0.0, %v1451
    %v1453 = vpop.f32.mrb[0].mxu0
    %v1454 = vpop.f32.mrb[0].mxu0
    %v1455 = vadd.f32 0.0, %v1454
    %v1456 = vpop.f32.mrb[0].mxu0
    %1457 = vmatprep.mubr.bf16.mxu0 0
    %1458 = vmatmul.mubr.bf16.gmra.mrb[0].mxu0 %v1275
    %v1459 = vpop.f32.mrb[0].mxu0
    %v1460 = vadd.f32 0.0, %v1459
    %v1461 = vpop.f32.mrb[0].mxu0
    %v1462 = vpop.f32.mrb[0].mxu0
    %v1463 = vadd.f32 0.0, %v1462
    %v1464 = vpop.f32.mrb[0].mxu0
    %1465 = vmatprep.mubr.bf16.mxu0 0
    %1466 = vmatmul.mubr.bf16.gmra.mrb[0].mxu0 %v1276
    %v1467 = vpop.f32.mrb[0].mxu0
    %v1468 = vadd.f32 0.0, %v1467
    %v1469 = vpop.f32.mrb[0].mxu0
    %v1470 = vpop.f32.mrb[0].mxu0
    %v1471 = vadd.f32 0.0, %v1470
    %v1472 = vpop.f32.mrb[0].mxu0
    %1473 = vmatprep.mubr.bf16.mxu0 0
    %1474 = vmatmul.mubr.bf16.gmra.mrb[0].mxu0 %v1277
    %v1475 = vpop.f32.mrb[0].mxu0
    %v1476 = vadd.f32 0.0, %v1475
    %v1477 = vpop.f32.mrb[0].mxu0
    %v1478 = vpop.f32.mrb[0].mxu0
    %v1479 = vadd.f32 0.0, %v1478
    %v1480 = vpop.f32.mrb[0].mxu0
    %1481 = vmatprep.mubr.bf16.mxu0 0
    %1482 = vmatmul.mubr.bf16.gmra.mrb[0].mxu0 %v1278
    %v1483 = vpop.f32.mrb[0].mxu0
    %v1484 = vadd.f32 0.0, %v1483
    %v1485 = vpop.f32.mrb[0].mxu0
    %v1486 = vpop.f32.mrb[0].mxu0
    %v1487 = vadd.f32 0.0, %v1486
    %v1488 = vpop.f32.mrb[0].mxu0
    %1489 = vmatprep.mubr.bf16.mxu0 0
    %1490 = vmatmul.mubr.bf16.gmra.mrb[0].mxu0 %v1279
    %v1491 = vpop.f32.mrb[0].mxu0
    %v1492 = vadd.f32 0.0, %v1491
    %v1493 = vpop.f32.mrb[0].mxu0
    %v1494 = vpop.f32.mrb[0].mxu0
    %v1495 = vadd.f32 0.0, %v1494
    %v1496 = vpop.f32.mrb[0].mxu0
    %1497 = vmatprep.mubr.bf16.mxu0 0
    %1498 = vmatmul.mubr.bf16.gmra.mrb[0].mxu0 %v1280
    %v1499 = vpop.f32.mrb[0].mxu0
    %v1500 = vadd.f32 0.0, %v1499
    %v1501 = vpop.f32.mrb[0].mxu0
    %v1502 = vpop.f32.mrb[0].mxu0
    %v1503 = vadd.f32 0.0, %v1502
    %v1504 = vpop.f32.mrb[0].mxu0
    %1505 = vdwg.mxu0
    %1506 = vmatprep.subr.bf16.mxu0 0
    %1507 = vmatpush1.bf16.msra.mxu0 1065369472
    %1508 = vmatprep.subr.bf16.mxu0 0
    %1509 = vmatpush1.bf16.msra.mxu0 1065369472
    %1510 = vmatprep.subr.bf16.mxu0 0
    %1511 = vmatpush1.bf16.msra.mxu0 1065369472
    %1512 = vmatprep.subr.bf16.mxu0 0
    %1513 = vmatpush1.bf16.msra.mxu0 1065369472
    %1514 = vmatprep.subr.bf16.mxu0 0
    %1515 = vmatpush1.bf16.msra.mxu0 1065369472
    %1516 = vmatprep.subr.bf16.mxu0 0
    %1517 = vmatpush1.bf16.msra.mxu0 1065369472
    %1518 = vmatprep.subr.bf16.mxu0 0
    %1519 = vmatpush1.bf16.msra.mxu0 1065369472
    %1520 = vmatprep.subr.bf16.mxu0 0
    %1521 = vmatpush1.bf16.msra.mxu0 1065369472
    %1522 = vmatprep.subr.bf16.mxu0 0
    %1523 = vmatpush1.bf16.msra.mxu0 0
    %1524 = vmatprep.subr.bf16.mxu0 0
    %1525 = vmatpush1.bf16.msra.mxu0 0
    %1526 = vmatprep.subr.bf16.mxu0 0
    %1527 = vmatpush1.bf16.msra.mxu0 0
    %1528 = vmatprep.subr.bf16.mxu0 0
    %1529 = vmatpush1.bf16.msra.mxu0 0
    %1530 = vmatprep.subr.bf16.mxu0 0
    %1531 = vmatpush1.bf16.msra.mxu0 0
    %1532 = vmatprep.subr.bf16.mxu0 0
    %1533 = vmatpush1.bf16.msra.mxu0 0
    %1534 = vmatprep.subr.bf16.mxu0 0
    %1535 = vmatpush1.bf16.msra.mxu0 0
    %1536 = vmatprep.subr.bf16.mxu0 0
    %1537 = vmatpush1.bf16.msra.mxu0 0
    %1538 = vmatprep.mubr.bf16.mxu0 0
    %1539 = vmatmul.mubr.bf16.gmra.mrb[0].mxu0 %v1265
    %v1540 = vpop.f32.mrb[0].mxu0
    %v1541 = vadd.f32 0.0, %v1540
    %v1542 = vpop.f32.mrb[0].mxu0
    %v1543 = vpop.f32.mrb[0].mxu0
    %v1544 = vadd.f32 0.0, %v1543
    %v1545 = vpop.f32.mrb[0].mxu0
    %1546 = vmatprep.mubr.bf16.mxu0 0
    %1547 = vmatmul.mubr.bf16.gmra.mrb[0].mxu0 %v1266
    %v1548 = vpop.f32.mrb[0].mxu0
    %v1549 = vadd.f32 0.0, %v1548
    %v1550 = vpop.f32.mrb[0].mxu0
    %v1551 = vpop.f32.mrb[0].mxu0
    %v1552 = vadd.f32 0.0, %v1551
    %v1553 = vpop.f32.mrb[0].mxu0
    %1554 = vmatprep.mubr.bf16.mxu0 0
    %1555 = vmatmul.mubr.bf16.gmra.mrb[0].mxu0 %v1267
    %v1556 = vpop.f32.mrb[0].mxu0
    %v1557 = vadd.f32 0.0, %v1556
    %v1558 = vpop.f32.mrb[0].mxu0
    %v1559 = vpop.f32.mrb[0].mxu0
    %v1560 = vadd.f32 0.0, %v1559
    %v1561 = vpop.f32.mrb[0].mxu0
    %1562 = vmatprep.mubr.bf16.mxu0 0
    %1563 = vmatmul.mubr.bf16.gmra.mrb[0].mxu0 %v1268
    %v1564 = vpop.f32.mrb[0].mxu0
    %v1565 = vadd.f32 0.0, %v1564
    %v1566 = vpop.f32.mrb[0].mxu0
    %v1567 = vpop.f32.mrb[0].mxu0
    %v1568 = vadd.f32 0.0, %v1567
    %v1569 = vpop.f32.mrb[0].mxu0
    %1570 = vmatprep.mubr.bf16.mxu0 0
    %1571 = vmatmul.mubr.bf16.gmra.mrb[0].mxu0 %v1269
    %v1572 = vpop.f32.mrb[0].mxu0
    %v1573 = vadd.f32 0.0, %v1572
    %v1574 = vpop.f32.mrb[0].mxu0
    %v1575 = vpop.f32.mrb[0].mxu0
    %v1576 = vadd.f32 0.0, %v1575
    %v1577 = vpop.f32.mrb[0].mxu0
    %1578 = vmatprep.mubr.bf16.mxu0 0
    %1579 = vmatmul.mubr.bf16.gmra.mrb[0].mxu0 %v1270
    %v1580 = vpop.f32.mrb[0].mxu0
    %v1581 = vadd.f32 0.0, %v1580
    %v1582 = vpop.f32.mrb[0].mxu0
    %v1583 = vpop.f32.mrb[0].mxu0
    %v1584 = vadd.f32 0.0, %v1583
    %v1585 = vpop.f32.mrb[0].mxu0
    %1586 = vmatprep.mubr.bf16.mxu0 0
    %1587 = vmatmul.mubr.bf16.gmra.mrb[0].mxu0 %v1271
    %v1588 = vpop.f32.mrb[0].mxu0
    %v1589 = vadd.f32 0.0, %v1588
    %v1590 = vpop.f32.mrb[0].mxu0
    %v1591 = vpop.f32.mrb[0].mxu0
    %v1592 = vadd.f32 0.0, %v1591
    %v1593 = vpop.f32.mrb[0].mxu0
    %1594 = vmatprep.mubr.bf16.mxu0 0
    %1595 = vmatmul.mubr.bf16.gmra.mrb[0].mxu0 %v1272
    %v1596 = vpop.f32.mrb[0].mxu0
    %v1597 = vadd.f32 0.0, %v1596
    %v1598 = vpop.f32.mrb[0].mxu0
    %v1599 = vpop.f32.mrb[0].mxu0
    %v1600 = vadd.f32 0.0, %v1599
    %v1601 = vpop.f32.mrb[0].mxu0
    %1602 = vmatprep.mubr.bf16.mxu0 0
    %1603 = vmatmul.mubr.bf16.gmra.mrb[0].mxu0 %v1273
    %v1604 = vpop.f32.mrb[0].mxu0
    %v1605 = vadd.f32 0.0, %v1604
    %v1606 = vpop.f32.mrb[0].mxu0
    %v1607 = vpop.f32.mrb[0].mxu0
    %v1608 = vadd.f32 0.0, %v1607
    %v1609 = vpop.f32.mrb[0].mxu0
    %1610 = vmatprep.mubr.bf16.mxu0 0
    %1611 = vmatmul.mubr.bf16.gmra.mrb[0].mxu0 %v1274
    %v1612 = vpop.f32.mrb[0].mxu0
    %v1613 = vadd.f32 0.0, %v1612
    %v1614 = vpop.f32.mrb[0].mxu0
    %v1615 = vpop.f32.mrb[0].mxu0
    %v1616 = vadd.f32 0.0, %v1615
    %v1617 = vpop.f32.mrb[0].mxu0
    %1618 = vmatprep.mubr.bf16.mxu0 0
    %1619 = vmatmul.mubr.bf16.gmra.mrb[0].mxu0 %v1275
    %v1620 = vpop.f32.mrb[0].mxu0
    %v1621 = vadd.f32 0.0, %v1620
    %v1622 = vpop.f32.mrb[0].mxu0
    %v1623 = vpop.f32.mrb[0].mxu0
    %v1624 = vadd.f32 0.0, %v1623
    %v1625 = vpop.f32.mrb[0].mxu0
    %1626 = vmatprep.mubr.bf16.mxu0 0
    %1627 = vmatmul.mubr.bf16.gmra.mrb[0].mxu0 %v1276
    %v1628 = vpop.f32.mrb[0].mxu0
    %v1629 = vadd.f32 0.0, %v1628
    %v1630 = vpop.f32.mrb[0].mxu0
    %v1631 = vpop.f32.mrb[0].mxu0
    %v1632 = vadd.f32 0.0, %v1631
    %v1633 = vpop.f32.mrb[0].mxu0
    %1634 = vmatprep.mubr.bf16.mxu0 0
    %1635 = vmatmul.mubr.bf16.gmra.mrb[0].mxu0 %v1277
    %v1636 = vpop.f32.mrb[0].mxu0
    %v1637 = vadd.f32 0.0, %v1636
    %v1638 = vpop.f32.mrb[0].mxu0
    %v1639 = vpop.f32.mrb[0].mxu0
    %v1640 = vadd.f32 0.0, %v1639
    %v1641 = vpop.f32.mrb[0].mxu0
    %1642 = vmatprep.mubr.bf16.mxu0 0
    %1643 = vmatmul.mubr.bf16.gmra.mrb[0].mxu0 %v1278
    %v1644 = vpop.f32.mrb[0].mxu0
    %v1645 = vadd.f32 0.0, %v1644
    %v1646 = vpop.f32.mrb[0].mxu0
    %v1647 = vpop.f32.mrb[0].mxu0
    %v1648 = vadd.f32 0.0, %v1647
    %v1649 = vpop.f32.mrb[0].mxu0
    %1650 = vmatprep.mubr.bf16.mxu0 0
    %1651 = vmatmul.mubr.bf16.gmra.mrb[0].mxu0 %v1279
    %v1652 = vpop.f32.mrb[0].mxu0
    %v1653 = vadd.f32 0.0, %v1652
    %v1654 = vpop.f32.mrb[0].mxu0
    %v1655 = vpop.f32.mrb[0].mxu0
    %v1656 = vadd.f32 0.0, %v1655
    %v1657 = vpop.f32.mrb[0].mxu0
    %1658 = vmatprep.mubr.bf16.mxu0 0
    %1659 = vmatmul.mubr.bf16.gmra.mrb[0].mxu0 %v1280
    %v1660 = vpop.f32.mrb[0].mxu0
    %v1661 = vadd.f32 0.0, %v1660
    %v1662 = vpop.f32.mrb[0].mxu0
    %v1663 = vpop.f32.mrb[0].mxu0
    %v1664 = vadd.f32 0.0, %v1663
    %v1665 = vpop.f32.mrb[0].mxu0
    %1666 = vdwg.mxu0
    %v1667 = vmul.bf16 %v1153, %v1153
    %v1668 = vmul.bf16 %v1154, %v1154
    %v1669 = vmul.bf16 %v1155, %v1155
    %v1670 = vmul.bf16 %v1156, %v1156
    %v1671 = vmul.bf16 %v1157, %v1157
    %v1672 = vmul.bf16 %v1158, %v1158
    %v1673 = vmul.bf16 %v1159, %v1159
    %v1674 = vmul.bf16 %v1160, %v1160
    %v1675 = vmul.bf16 %v1161, %v1161
    %v1676 = vmul.bf16 %v1162, %v1162
    %v1677 = vmul.bf16 %v1163, %v1163
    %v1678 = vmul.bf16 %v1164, %v1164
    %v1679 = vmul.bf16 %v1165, %v1165
    %v1680 = vmul.bf16 %v1166, %v1166
    %v1681 = vmul.bf16 %v1167, %v1167
    %v1682 = vmul.bf16 %v1168, %v1168
    %v1683 = vmul.bf16 %v1169, %v1169
    %v1684 = vmul.bf16 %v1170, %v1170
    %v1685 = vmul.bf16 %v1171, %v1171
    %v1686 = vmul.bf16 %v1172, %v1172
    %v1687 = vmul.bf16 %v1173, %v1173
    %v1688 = vmul.bf16 %v1174, %v1174
    %v1689 = vmul.bf16 %v1175, %v1175
    %v1690 = vmul.bf16 %v1176, %v1176
    %v1691 = vmul.bf16 %v1177, %v1177
    %v1692 = vmul.bf16 %v1178, %v1178
    %v1693 = vmul.bf16 %v1179, %v1179
    %v1694 = vmul.bf16 %v1180, %v1180
    %v1695 = vmul.bf16 %v1181, %v1181
    %v1696 = vmul.bf16 %v1182, %v1182
    %v1697 = vmul.bf16 %v1183, %v1183
    %v1698 = vmul.bf16 %v1184, %v1184
    %v1731 = vunpack.c.l.b16 %v1667
    %v1732 = vunpack.c.l.b16 %v1668
    %v1733 = vunpack.c.l.b16 %v1669
    %v1734 = vunpack.c.l.b16 %v1670
    %v1735 = vunpack.c.l.b16 %v1671
    %v1736 = vunpack.c.l.b16 %v1672
    %v1737 = vunpack.c.l.b16 %v1673
    %v1738 = vunpack.c.l.b16 %v1674
    %v1739 = vunpack.c.l.b16 %v1675
    %v1740 = vunpack.c.l.b16 %v1676
    %v1741 = vunpack.c.l.b16 %v1677
    %v1742 = vunpack.c.l.b16 %v1678
    %v1743 = vunpack.c.l.b16 %v1679
    %v1744 = vunpack.c.l.b16 %v1680
    %v1745 = vunpack.c.l.b16 %v1681
    %v1746 = vunpack.c.l.b16 %v1682
    %v1747 = vunpack.c.l.b16 %v1683
    %v1748 = vunpack.c.l.b16 %v1684
    %v1749 = vunpack.c.l.b16 %v1685
    %v1750 = vunpack.c.l.b16 %v1686
    %v1751 = vunpack.c.l.b16 %v1687
    %v1752 = vunpack.c.l.b16 %v1688
    %v1753 = vunpack.c.l.b16 %v1689
    %v1754 = vunpack.c.l.b16 %v1690
    %v1755 = vunpack.c.l.b16 %v1691
    %v1756 = vunpack.c.l.b16 %v1692
    %v1757 = vunpack.c.l.b16 %v1693
    %v1758 = vunpack.c.l.b16 %v1694
    %v1759 = vunpack.c.l.b16 %v1695
    %v1760 = vunpack.c.l.b16 %v1696
    %v1761 = vunpack.c.l.b16 %v1697
    %v1762 = vunpack.c.l.b16 %v1698
    %v1763 = vpack.c.b16 %v1732, %v1731
    %v1764 = vpack.c.b16 %v1734, %v1733
    %v1765 = vpack.c.b16 %v1736, %v1735
    %v1766 = vpack.c.b16 %v1738, %v1737
    %v1767 = vpack.c.b16 %v1740, %v1739
    %v1768 = vpack.c.b16 %v1742, %v1741
    %v1769 = vpack.c.b16 %v1744, %v1743
    %v1770 = vpack.c.b16 %v1746, %v1745
    %v1771 = vpack.c.b16 %v1748, %v1747
    %v1772 = vpack.c.b16 %v1750, %v1749
    %v1773 = vpack.c.b16 %v1752, %v1751
    %v1774 = vpack.c.b16 %v1754, %v1753
    %v1775 = vpack.c.b16 %v1756, %v1755
    %v1776 = vpack.c.b16 %v1758, %v1757
    %v1777 = vpack.c.b16 %v1760, %v1759
    %v1778 = vpack.c.b16 %v1762, %v1761
    %1795 = vmatprep.subr.bf16.mxu0 0
    %1796 = vmatpush1.bf16.msra.mxu0 1065369472
    %1797 = vmatprep.subr.bf16.mxu0 0
    %1798 = vmatpush1.bf16.msra.mxu0 1065369472
    %1799 = vmatprep.subr.bf16.mxu0 0
    %1800 = vmatpush1.bf16.msra.mxu0 1065369472
    %1801 = vmatprep.subr.bf16.mxu0 0
    %1802 = vmatpush1.bf16.msra.mxu0 1065369472
    %1803 = vmatprep.subr.bf16.mxu0 0
    %1804 = vmatpush1.bf16.msra.mxu0 1065369472
    %1805 = vmatprep.subr.bf16.mxu0 0
    %1806 = vmatpush1.bf16.msra.mxu0 1065369472
    %1807 = vmatprep.subr.bf16.mxu0 0
    %1808 = vmatpush1.bf16.msra.mxu0 1065369472
    %1809 = vmatprep.subr.bf16.mxu0 0
    %1810 = vmatpush1.bf16.msra.mxu0 1065369472
    %1811 = vmatprep.subr.bf16.mxu0 0
    %1812 = vmatpush1.bf16.msra.mxu0 0
    %1813 = vmatprep.subr.bf16.mxu0 0
    %1814 = vmatpush1.bf16.msra.mxu0 0
    %1815 = vmatprep.subr.bf16.mxu0 0
    %1816 = vmatpush1.bf16.msra.mxu0 0
    %1817 = vmatprep.subr.bf16.mxu0 0
    %1818 = vmatpush1.bf16.msra.mxu0 0
    %1819 = vmatprep.subr.bf16.mxu0 0
    %1820 = vmatpush1.bf16.msra.mxu0 0
    %1821 = vmatprep.subr.bf16.mxu0 0
    %1822 = vmatpush1.bf16.msra.mxu0 0
    %1823 = vmatprep.subr.bf16.mxu0 0
    %1824 = vmatpush1.bf16.msra.mxu0 0
    %1825 = vmatprep.subr.bf16.mxu0 0
    %1826 = vmatpush1.bf16.msra.mxu0 0
    %1827 = vmatprep.mubr.bf16.mxu0 0
    %1828 = vmatmul.mubr.bf16.gmra.mrb[0].mxu0 %v1763
    %v1829 = vpop.f32.mrb[0].mxu0
    %v1830 = vadd.f32 0.0, %v1829
    %v1831 = vpop.f32.mrb[0].mxu0
    %v1832 = vpop.f32.mrb[0].mxu0
    %v1833 = vadd.f32 0.0, %v1832
    %v1834 = vpop.f32.mrb[0].mxu0
    %1835 = vmatprep.mubr.bf16.mxu0 0
    %1836 = vmatmul.mubr.bf16.gmra.mrb[0].mxu0 %v1764
    %v1837 = vpop.f32.mrb[0].mxu0
    %v1838 = vadd.f32 0.0, %v1837
    %v1839 = vpop.f32.mrb[0].mxu0
    %v1840 = vpop.f32.mrb[0].mxu0
    %v1841 = vadd.f32 0.0, %v1840
    %v1842 = vpop.f32.mrb[0].mxu0
    %1843 = vmatprep.mubr.bf16.mxu0 0
    %1844 = vmatmul.mubr.bf16.gmra.mrb[0].mxu0 %v1765
    %v1845 = vpop.f32.mrb[0].mxu0
    %v1846 = vadd.f32 0.0, %v1845
    %v1847 = vpop.f32.mrb[0].mxu0
    %v1848 = vpop.f32.mrb[0].mxu0
    %v1849 = vadd.f32 0.0, %v1848
    %v1850 = vpop.f32.mrb[0].mxu0
    %1851 = vmatprep.mubr.bf16.mxu0 0
    %1852 = vmatmul.mubr.bf16.gmra.mrb[0].mxu0 %v1766
    %v1853 = vpop.f32.mrb[0].mxu0
    %v1854 = vadd.f32 0.0, %v1853
    %v1855 = vpop.f32.mrb[0].mxu0
    %v1856 = vpop.f32.mrb[0].mxu0
    %v1857 = vadd.f32 0.0, %v1856
    %v1858 = vpop.f32.mrb[0].mxu0
    %1859 = vmatprep.mubr.bf16.mxu0 0
    %1860 = vmatmul.mubr.bf16.gmra.mrb[0].mxu0 %v1767
    %v1861 = vpop.f32.mrb[0].mxu0
    %v1862 = vadd.f32 0.0, %v1861
    %v1863 = vpop.f32.mrb[0].mxu0
    %v1864 = vpop.f32.mrb[0].mxu0
    %v1865 = vadd.f32 0.0, %v1864
    %v1866 = vpop.f32.mrb[0].mxu0
    %1867 = vmatprep.mubr.bf16.mxu0 0
    %1868 = vmatmul.mubr.bf16.gmra.mrb[0].mxu0 %v1768
    %v1869 = vpop.f32.mrb[0].mxu0
    %v1870 = vadd.f32 0.0, %v1869
    %v1871 = vpop.f32.mrb[0].mxu0
    %v1872 = vpop.f32.mrb[0].mxu0
    %v1873 = vadd.f32 0.0, %v1872
    %v1874 = vpop.f32.mrb[0].mxu0
    %1875 = vmatprep.mubr.bf16.mxu0 0
    %1876 = vmatmul.mubr.bf16.gmra.mrb[0].mxu0 %v1769
    %v1877 = vpop.f32.mrb[0].mxu0
    %v1878 = vadd.f32 0.0, %v1877
    %v1879 = vpop.f32.mrb[0].mxu0
    %v1880 = vpop.f32.mrb[0].mxu0
    %v1881 = vadd.f32 0.0, %v1880
    %v1882 = vpop.f32.mrb[0].mxu0
    %1883 = vmatprep.mubr.bf16.mxu0 0
    %1884 = vmatmul.mubr.bf16.gmra.mrb[0].mxu0 %v1770
    %v1885 = vpop.f32.mrb[0].mxu0
    %v1886 = vadd.f32 0.0, %v1885
    %v1887 = vpop.f32.mrb[0].mxu0
    %v1888 = vpop.f32.mrb[0].mxu0
    %v1889 = vadd.f32 0.0, %v1888
    %v1890 = vpop.f32.mrb[0].mxu0
    %1891 = vmatprep.mubr.bf16.mxu0 0
    %1892 = vmatmul.mubr.bf16.gmra.mrb[0].mxu0 %v1771
    %v1893 = vpop.f32.mrb[0].mxu0
    %v1894 = vadd.f32 0.0, %v1893
    %v1895 = vpop.f32.mrb[0].mxu0
    %v1896 = vpop.f32.mrb[0].mxu0
    %v1897 = vadd.f32 0.0, %v1896
    %v1898 = vpop.f32.mrb[0].mxu0
    %1899 = vmatprep.mubr.bf16.mxu0 0
    %1900 = vmatmul.mubr.bf16.gmra.mrb[0].mxu0 %v1772
    %v1901 = vpop.f32.mrb[0].mxu0
    %v1902 = vadd.f32 0.0, %v1901
    %v1903 = vpop.f32.mrb[0].mxu0
    %v1904 = vpop.f32.mrb[0].mxu0
    %v1905 = vadd.f32 0.0, %v1904
    %v1906 = vpop.f32.mrb[0].mxu0
    %1907 = vmatprep.mubr.bf16.mxu0 0
    %1908 = vmatmul.mubr.bf16.gmra.mrb[0].mxu0 %v1773
    %v1909 = vpop.f32.mrb[0].mxu0
    %v1910 = vadd.f32 0.0, %v1909
    %v1911 = vpop.f32.mrb[0].mxu0
    %v1912 = vpop.f32.mrb[0].mxu0
    %v1913 = vadd.f32 0.0, %v1912
    %v1914 = vpop.f32.mrb[0].mxu0
    %1915 = vmatprep.mubr.bf16.mxu0 0
    %1916 = vmatmul.mubr.bf16.gmra.mrb[0].mxu0 %v1774
    %v1917 = vpop.f32.mrb[0].mxu0
    %v1918 = vadd.f32 0.0, %v1917
    %v1919 = vpop.f32.mrb[0].mxu0
    %v1920 = vpop.f32.mrb[0].mxu0
    %v1921 = vadd.f32 0.0, %v1920
    %v1922 = vpop.f32.mrb[0].mxu0
    %1923 = vmatprep.mubr.bf16.mxu0 0
    %1924 = vmatmul.mubr.bf16.gmra.mrb[0].mxu0 %v1775
    %v1925 = vpop.f32.mrb[0].mxu0
    %v1926 = vadd.f32 0.0, %v1925
    %v1927 = vpop.f32.mrb[0].mxu0
    %v1928 = vpop.f32.mrb[0].mxu0
    %v1929 = vadd.f32 0.0, %v1928
    %v1930 = vpop.f32.mrb[0].mxu0
    %1931 = vmatprep.mubr.bf16.mxu0 0
    %1932 = vmatmul.mubr.bf16.gmra.mrb[0].mxu0 %v1776
    %v1933 = vpop.f32.mrb[0].mxu0
    %v1934 = vadd.f32 0.0, %v1933
    %v1935 = vpop.f32.mrb[0].mxu0
    %v1936 = vpop.f32.mrb[0].mxu0
    %v1937 = vadd.f32 0.0, %v1936
    %v1938 = vpop.f32.mrb[0].mxu0
    %1939 = vmatprep.mubr.bf16.mxu0 0
    %1940 = vmatmul.mubr.bf16.gmra.mrb[0].mxu0 %v1777
    %v1941 = vpop.f32.mrb[0].mxu0
    %v1942 = vadd.f32 0.0, %v1941
    %v1943 = vpop.f32.mrb[0].mxu0
    %v1944 = vpop.f32.mrb[0].mxu0
    %v1945 = vadd.f32 0.0, %v1944
    %v1946 = vpop.f32.mrb[0].mxu0
    %1947 = vmatprep.mubr.bf16.mxu0 0
    %1948 = vmatmul.mubr.bf16.gmra.mrb[0].mxu0 %v1778
    %v1949 = vpop.f32.mrb[0].mxu0
    %v1950 = vadd.f32 0.0, %v1949
    %v1951 = vpop.f32.mrb[0].mxu0
    %v1952 = vpop.f32.mrb[0].mxu0
    %v1953 = vadd.f32 0.0, %v1952
    %v1954 = vpop.f32.mrb[0].mxu0
    %1955 = vdwg.mxu0
    %v1956 = vmul.f32 %v1541, 0.0078125
    %v1957 = vmul.f32 %v1544, 0.0078125
    %v1958 = vmul.f32 %v1549, 0.0078125
    %v1959 = vmul.f32 %v1552, 0.0078125
    %v1960 = vmul.f32 %v1557, 0.0078125
    %v1961 = vmul.f32 %v1560, 0.0078125
    %v1962 = vmul.f32 %v1565, 0.0078125
    %v1963 = vmul.f32 %v1568, 0.0078125
    %v1964 = vmul.f32 %v1573, 0.0078125
    %v1965 = vmul.f32 %v1576, 0.0078125
    %v1966 = vmul.f32 %v1581, 0.0078125
    %v1967 = vmul.f32 %v1584, 0.0078125
    %v1968 = vmul.f32 %v1589, 0.0078125
    %v1969 = vmul.f32 %v1592, 0.0078125
    %v1970 = vmul.f32 %v1597, 0.0078125
    %v1971 = vmul.f32 %v1600, 0.0078125
    %v1972 = vmul.f32 %v1605, 0.0078125
    %v1973 = vmul.f32 %v1608, 0.0078125
    %v1974 = vmul.f32 %v1613, 0.0078125
    %v1975 = vmul.f32 %v1616, 0.0078125
    %v1976 = vmul.f32 %v1621, 0.0078125
    %v1977 = vmul.f32 %v1624, 0.0078125
    %v1978 = vmul.f32 %v1629, 0.0078125
    %v1979 = vmul.f32 %v1632, 0.0078125
    %v1980 = vmul.f32 %v1637, 0.0078125
    %v1981 = vmul.f32 %v1640, 0.0078125
    %v1982 = vmul.f32 %v1645, 0.0078125
    %v1983 = vmul.f32 %v1648, 0.0078125
    %v1984 = vmul.f32 %v1653, 0.0078125
    %v1985 = vmul.f32 %v1656, 0.0078125
    %v1986 = vmul.f32 %v1661, 0.0078125
    %v1987 = vmul.f32 %v1664, 0.0078125
    %v1988 = vmul.f32 %v1830, 0.0078125
    %v1989 = vmul.f32 %v1833, 0.0078125
    %v1990 = vmul.f32 %v1838, 0.0078125
    %v1991 = vmul.f32 %v1841, 0.0078125
    %v1992 = vmul.f32 %v1846, 0.0078125
    %v1993 = vmul.f32 %v1849, 0.0078125
    %v1994 = vmul.f32 %v1854, 0.0078125
    %v1995 = vmul.f32 %v1857, 0.0078125
    %v1996 = vmul.f32 %v1862, 0.0078125
    %v1997 = vmul.f32 %v1865, 0.0078125
    %v1998 = vmul.f32 %v1870, 0.0078125
    %v1999 = vmul.f32 %v1873, 0.0078125
    %v2000 = vmul.f32 %v1878, 0.0078125
    %v2001 = vmul.f32 %v1881, 0.0078125
    %v2002 = vmul.f32 %v1886, 0.0078125
    %v2003 = vmul.f32 %v1889, 0.0078125
    %v2004 = vmul.f32 %v1894, 0.0078125
    %v2005 = vmul.f32 %v1897, 0.0078125
    %v2006 = vmul.f32 %v1902, 0.0078125
    %v2007 = vmul.f32 %v1905, 0.0078125
    %v2008 = vmul.f32 %v1910, 0.0078125
    %v2009 = vmul.f32 %v1913, 0.0078125
    %v2010 = vmul.f32 %v1918, 0.0078125
    %v2011 = vmul.f32 %v1921, 0.0078125
    %v2012 = vmul.f32 %v1926, 0.0078125
    %v2013 = vmul.f32 %v1929, 0.0078125
    %v2014 = vmul.f32 %v1934, 0.0078125
    %v2015 = vmul.f32 %v1937, 0.0078125
    %v2016 = vmul.f32 %v1942, 0.0078125
    %v2017 = vmul.f32 %v1945, 0.0078125
    %v2018 = vmul.f32 %v1950, 0.0078125
    %v2019 = vmul.f32 %v1953, 0.0078125
    %v2020 = vmul.f32 %v1956, %v1956
    %v2021 = vmul.f32 %v1957, %v1957
    %v2022 = vmul.f32 %v1958, %v1958
    %v2023 = vmul.f32 %v1959, %v1959
    %v2024 = vmul.f32 %v1960, %v1960
    %v2025 = vmul.f32 %v1961, %v1961
    %v2026 = vmul.f32 %v1962, %v1962
    %v2027 = vmul.f32 %v1963, %v1963
    %v2028 = vmul.f32 %v1964, %v1964
    %v2029 = vmul.f32 %v1965, %v1965
    %v2030 = vmul.f32 %v1966, %v1966
    %v2031 = vmul.f32 %v1967, %v1967
    %v2032 = vmul.f32 %v1968, %v1968
    %v2033 = vmul.f32 %v1969, %v1969
    %v2034 = vmul.f32 %v1970, %v1970
    %v2035 = vmul.f32 %v1971, %v1971
    %v2036 = vmul.f32 %v1972, %v1972
    %v2037 = vmul.f32 %v1973, %v1973
    %v2038 = vmul.f32 %v1974, %v1974
    %v2039 = vmul.f32 %v1975, %v1975
    %v2040 = vmul.f32 %v1976, %v1976
    %v2041 = vmul.f32 %v1977, %v1977
    %v2042 = vmul.f32 %v1978, %v1978
    %v2043 = vmul.f32 %v1979, %v1979
    %v2044 = vmul.f32 %v1980, %v1980
    %v2045 = vmul.f32 %v1981, %v1981
    %v2046 = vmul.f32 %v1982, %v1982
    %v2047 = vmul.f32 %v1983, %v1983
    %v2048 = vmul.f32 %v1984, %v1984
    %v2049 = vmul.f32 %v1985, %v1985
    %v2050 = vmul.f32 %v1986, %v1986
    %v2051 = vmul.f32 %v1987, %v1987
    %v2052 = vsub.f32 %v1988, %v2020
    %v2053 = vsub.f32 %v1989, %v2021
    %v2054 = vsub.f32 %v1990, %v2022
    %v2055 = vsub.f32 %v1991, %v2023
    %v2056 = vsub.f32 %v1992, %v2024
    %v2057 = vsub.f32 %v1993, %v2025
    %v2058 = vsub.f32 %v1994, %v2026
    %v2059 = vsub.f32 %v1995, %v2027
    %v2060 = vsub.f32 %v1996, %v2028
    %v2061 = vsub.f32 %v1997, %v2029
    %v2062 = vsub.f32 %v1998, %v2030
    %v2063 = vsub.f32 %v1999, %v2031
    %v2064 = vsub.f32 %v2000, %v2032
    %v2065 = vsub.f32 %v2001, %v2033
    %v2066 = vsub.f32 %v2002, %v2034
    %v2067 = vsub.f32 %v2003, %v2035
    %v2068 = vsub.f32 %v2004, %v2036
    %v2069 = vsub.f32 %v2005, %v2037
    %v2070 = vsub.f32 %v2006, %v2038
    %v2071 = vsub.f32 %v2007, %v2039
    %v2072 = vsub.f32 %v2008, %v2040
    %v2073 = vsub.f32 %v2009, %v2041
    %v2074 = vsub.f32 %v2010, %v2042
    %v2075 = vsub.f32 %v2011, %v2043
    %v2076 = vsub.f32 %v2012, %v2044
    %v2077 = vsub.f32 %v2013, %v2045
    %v2078 = vsub.f32 %v2014, %v2046
    %v2079 = vsub.f32 %v2015, %v2047
    %v2080 = vsub.f32 %v2016, %v2048
    %v2081 = vsub.f32 %v2017, %v2049
    %v2082 = vsub.f32 %v2018, %v2050
    %v2083 = vsub.f32 %v2019, %v2051
    %v2084 = vmax.f32 %v2052, 0.0
    %v2085 = vmax.f32 %v2053, 0.0
    %v2086 = vmax.f32 %v2054, 0.0
    %v2087 = vmax.f32 %v2055, 0.0
    %v2088 = vmax.f32 %v2056, 0.0
    %v2089 = vmax.f32 %v2057, 0.0
    %v2090 = vmax.f32 %v2058, 0.0
    %v2091 = vmax.f32 %v2059, 0.0
    %v2092 = vmax.f32 %v2060, 0.0
    %v2093 = vmax.f32 %v2061, 0.0
    %v2094 = vmax.f32 %v2062, 0.0
    %v2095 = vmax.f32 %v2063, 0.0
    %v2096 = vmax.f32 %v2064, 0.0
    %v2097 = vmax.f32 %v2065, 0.0
    %v2098 = vmax.f32 %v2066, 0.0
    %v2099 = vmax.f32 %v2067, 0.0
    %v2100 = vmax.f32 %v2068, 0.0
    %v2101 = vmax.f32 %v2069, 0.0
    %v2102 = vmax.f32 %v2070, 0.0
    %v2103 = vmax.f32 %v2071, 0.0
    %v2104 = vmax.f32 %v2072, 0.0
    %v2105 = vmax.f32 %v2073, 0.0
    %v2106 = vmax.f32 %v2074, 0.0
    %v2107 = vmax.f32 %v2075, 0.0
    %v2108 = vmax.f32 %v2076, 0.0
    %v2109 = vmax.f32 %v2077, 0.0
    %v2110 = vmax.f32 %v2078, 0.0
    %v2111 = vmax.f32 %v2079, 0.0
    %v2112 = vmax.f32 %v2080, 0.0
    %v2113 = vmax.f32 %v2081, 0.0
    %v2114 = vmax.f32 %v2082, 0.0
    %v2115 = vmax.f32 %v2083, 0.0
    %v2116 = vadd.f32 %v2084, 1e-05
    %v2117 = vadd.f32 %v2085, 1e-05
    %v2118 = vadd.f32 %v2086, 1e-05
    %v2119 = vadd.f32 %v2087, 1e-05
    %v2120 = vadd.f32 %v2088, 1e-05
    %v2121 = vadd.f32 %v2089, 1e-05
    %v2122 = vadd.f32 %v2090, 1e-05
    %v2123 = vadd.f32 %v2091, 1e-05
    %v2124 = vadd.f32 %v2092, 1e-05
    %v2125 = vadd.f32 %v2093, 1e-05
    %v2126 = vadd.f32 %v2094, 1e-05
    %v2127 = vadd.f32 %v2095, 1e-05
    %v2128 = vadd.f32 %v2096, 1e-05
    %v2129 = vadd.f32 %v2097, 1e-05
    %v2130 = vadd.f32 %v2098, 1e-05
    %v2131 = vadd.f32 %v2099, 1e-05
    %v2132 = vadd.f32 %v2100, 1e-05
    %v2133 = vadd.f32 %v2101, 1e-05
    %v2134 = vadd.f32 %v2102, 1e-05
    %v2135 = vadd.f32 %v2103, 1e-05
    %v2136 = vadd.f32 %v2104, 1e-05
    %v2137 = vadd.f32 %v2105, 1e-05
    %v2138 = vadd.f32 %v2106, 1e-05
    %v2139 = vadd.f32 %v2107, 1e-05
    %v2140 = vadd.f32 %v2108, 1e-05
    %v2141 = vadd.f32 %v2109, 1e-05
    %v2142 = vadd.f32 %v2110, 1e-05
    %v2143 = vadd.f32 %v2111, 1e-05
    %v2144 = vadd.f32 %v2112, 1e-05
    %v2145 = vadd.f32 %v2113, 1e-05
    %v2146 = vadd.f32 %v2114, 1e-05
    %v2147 = vadd.f32 %v2115, 1e-05
    %v2148 = vrsqrt.pop %v2116
    %v2149 = vrsqrt.pop %v2117
    %v2150 = vrsqrt.pop %v2118
    %v2151 = vrsqrt.pop %v2119
    %v2152 = vrsqrt.pop %v2120
    %v2153 = vrsqrt.pop %v2121
    %v2154 = vrsqrt.pop %v2122
    %v2155 = vrsqrt.pop %v2123
    %v2156 = vrsqrt.pop %v2124
    %v2157 = vrsqrt.pop %v2125
    %v2158 = vrsqrt.pop %v2126
    %v2159 = vrsqrt.pop %v2127
    %v2160 = vrsqrt.pop %v2128
    %v2161 = vrsqrt.pop %v2129
    %v2162 = vrsqrt.pop %v2130
    %v2163 = vrsqrt.pop %v2131
    %v2164 = vrsqrt.pop %v2132
    %v2165 = vrsqrt.pop %v2133
    %v2166 = vrsqrt.pop %v2134
    %v2167 = vrsqrt.pop %v2135
    %v2168 = vrsqrt.pop %v2136
    %v2169 = vrsqrt.pop %v2137
    %v2170 = vrsqrt.pop %v2138
    %v2171 = vrsqrt.pop %v2139
    %v2172 = vrsqrt.pop %v2140
    %v2173 = vrsqrt.pop %v2141
    %v2174 = vrsqrt.pop %v2142
    %v2175 = vrsqrt.pop %v2143
    %v2176 = vrsqrt.pop %v2144
    %v2177 = vrsqrt.pop %v2145
    %v2178 = vrsqrt.pop %v2146
    %v2179 = vrsqrt.pop %v2147
    %v2180 = vld [vmem:[%s9] sm:$0x1]
    %2182 = vset.pattern.permute.xlu0 0
    %2183 = vperm.xlu0 %2182, %v1956
    %v2184 = vpop.permute.xlu0 %2183
    %2187 = vset.pattern.permute.xlu0 0
    %2188 = vperm.xlu0 %2187, %v1957
    %v2189 = vpop.permute.xlu0 %2188
    %2192 = vset.pattern.permute.xlu0 0
    %2193 = vperm.xlu0 %2192, %v1958
    %v2194 = vpop.permute.xlu0 %2193
    %2197 = vset.pattern.permute.xlu0 0
    %2198 = vperm.xlu0 %2197, %v1959
    %v2199 = vpop.permute.xlu0 %2198
    %2202 = vset.pattern.permute.xlu0 0
    %2203 = vperm.xlu0 %2202, %v1960
    %v2204 = vpop.permute.xlu0 %2203
    %2207 = vset.pattern.permute.xlu0 0
    %2208 = vperm.xlu0 %2207, %v1961
    %v2209 = vpop.permute.xlu0 %2208
    %2212 = vset.pattern.permute.xlu0 0
    %2213 = vperm.xlu0 %2212, %v1962
    %v2214 = vpop.permute.xlu0 %2213
    %2217 = vset.pattern.permute.xlu0 0
    %2218 = vperm.xlu0 %2217, %v1963
    %v2219 = vpop.permute.xlu0 %2218
    %2222 = vset.pattern.permute.xlu0 0
    %2223 = vperm.xlu0 %2222, %v1964
    %v2224 = vpop.permute.xlu0 %2223
    %2227 = vset.pattern.permute.xlu0 0
    %2228 = vperm.xlu0 %2227, %v1965
    %v2229 = vpop.permute.xlu0 %2228
    %2232 = vset.pattern.permute.xlu0 0
    %2233 = vperm.xlu0 %2232, %v1966
    %v2234 = vpop.permute.xlu0 %2233
    %2237 = vset.pattern.permute.xlu0 0
    %2238 = vperm.xlu0 %2237, %v1967
    %v2239 = vpop.permute.xlu0 %2238
    %2242 = vset.pattern.permute.xlu0 0
    %2243 = vperm.xlu0 %2242, %v1968
    %v2244 = vpop.permute.xlu0 %2243
    %2247 = vset.pattern.permute.xlu0 0
    %2248 = vperm.xlu0 %2247, %v1969
    %v2249 = vpop.permute.xlu0 %2248
    %2252 = vset.pattern.permute.xlu0 0
    %2253 = vperm.xlu0 %2252, %v1970
    %v2254 = vpop.permute.xlu0 %2253
    %2257 = vset.pattern.permute.xlu0 0
    %2258 = vperm.xlu0 %2257, %v1971
    %v2259 = vpop.permute.xlu0 %2258
    %2262 = vset.pattern.permute.xlu0 0
    %2263 = vperm.xlu0 %2262, %v1972
    %v2264 = vpop.permute.xlu0 %2263
    %2267 = vset.pattern.permute.xlu0 0
    %2268 = vperm.xlu0 %2267, %v1973
    %v2269 = vpop.permute.xlu0 %2268
    %2272 = vset.pattern.permute.xlu0 0
    %2273 = vperm.xlu0 %2272, %v1974
    %v2274 = vpop.permute.xlu0 %2273
    %2277 = vset.pattern.permute.xlu0 0
    %2278 = vperm.xlu0 %2277, %v1975
    %v2279 = vpop.permute.xlu0 %2278
    %2282 = vset.pattern.permute.xlu0 0
    %2283 = vperm.xlu0 %2282, %v1976
    %v2284 = vpop.permute.xlu0 %2283
    %2287 = vset.pattern.permute.xlu0 0
    %2288 = vperm.xlu0 %2287, %v1977
    %v2289 = vpop.permute.xlu0 %2288
    %2292 = vset.pattern.permute.xlu0 0
    %2293 = vperm.xlu0 %2292, %v1978
    %v2294 = vpop.permute.xlu0 %2293
    %2297 = vset.pattern.permute.xlu0 0
    %2298 = vperm.xlu0 %2297, %v1979
    %v2299 = vpop.permute.xlu0 %2298
    %2302 = vset.pattern.permute.xlu0 0
    %2303 = vperm.xlu0 %2302, %v1980
    %v2304 = vpop.permute.xlu0 %2303
    %2307 = vset.pattern.permute.xlu0 0
    %2308 = vperm.xlu0 %2307, %v1981
    %v2309 = vpop.permute.xlu0 %2308
    %2312 = vset.pattern.permute.xlu0 0
    %2313 = vperm.xlu0 %2312, %v1982
    %v2314 = vpop.permute.xlu0 %2313
    %2317 = vset.pattern.permute.xlu0 0
    %2318 = vperm.xlu0 %2317, %v1983
    %v2319 = vpop.permute.xlu0 %2318
    %2322 = vset.pattern.permute.xlu0 0
    %2323 = vperm.xlu0 %2322, %v1984
    %v2324 = vpop.permute.xlu0 %2323
    %2327 = vset.pattern.permute.xlu0 0
    %2328 = vperm.xlu0 %2327, %v1985
    %v2329 = vpop.permute.xlu0 %2328
    %2332 = vset.pattern.permute.xlu0 0
    %2333 = vperm.xlu0 %2332, %v1986
    %v2334 = vpop.permute.xlu0 %2333
    %2337 = vset.pattern.permute.xlu0 0
    %2338 = vperm.xlu0 %2337, %v1987
    %v2339 = vpop.permute.xlu0 %2338
    %v2342 = vlaneseq
    %v2343 = vshrl.u32 %v2342, 7
    %v2344 = vsub.s32 0, %v2343
    %v2345 = vrot.slane %v2180, %v2344
    %v2347 = vmul.f32 %v2184, %v2345
    %v2348 = vmul.f32 %v2189, %v2345
    %v2349 = vmul.f32 %v2194, %v2345
    %v2350 = vmul.f32 %v2199, %v2345
    %v2351 = vmul.f32 %v2204, %v2345
    %v2352 = vmul.f32 %v2209, %v2345
    %v2353 = vmul.f32 %v2214, %v2345
    %v2354 = vmul.f32 %v2219, %v2345
    %v2355 = vmul.f32 %v2224, %v2345
    %v2356 = vmul.f32 %v2229, %v2345
    %v2357 = vmul.f32 %v2234, %v2345
    %v2358 = vmul.f32 %v2239, %v2345
    %v2359 = vmul.f32 %v2244, %v2345
    %v2360 = vmul.f32 %v2249, %v2345
    %v2361 = vmul.f32 %v2254, %v2345
    %v2362 = vmul.f32 %v2259, %v2345
    %v2363 = vmul.f32 %v2264, %v2345
    %v2364 = vmul.f32 %v2269, %v2345
    %v2365 = vmul.f32 %v2274, %v2345
    %v2366 = vmul.f32 %v2279, %v2345
    %v2367 = vmul.f32 %v2284, %v2345
    %v2368 = vmul.f32 %v2289, %v2345
    %v2369 = vmul.f32 %v2294, %v2345
    %v2370 = vmul.f32 %v2299, %v2345
    %v2371 = vmul.f32 %v2304, %v2345
    %v2372 = vmul.f32 %v2309, %v2345
    %v2373 = vmul.f32 %v2314, %v2345
    %v2374 = vmul.f32 %v2319, %v2345
    %v2375 = vmul.f32 %v2324, %v2345
    %v2376 = vmul.f32 %v2329, %v2345
    %v2377 = vmul.f32 %v2334, %v2345
    %v2378 = vmul.f32 %v2339, %v2345
    %v2379 = vsub.f32 %v1380, %v2347
    %v2380 = vsub.f32 %v1383, %v2348
    %v2381 = vsub.f32 %v1388, %v2349
    %v2382 = vsub.f32 %v1391, %v2350
    %v2383 = vsub.f32 %v1396, %v2351
    %v2384 = vsub.f32 %v1399, %v2352
    %v2385 = vsub.f32 %v1404, %v2353
    %v2386 = vsub.f32 %v1407, %v2354
    %v2387 = vsub.f32 %v1412, %v2355
    %v2388 = vsub.f32 %v1415, %v2356
    %v2389 = vsub.f32 %v1420, %v2357
    %v2390 = vsub.f32 %v1423, %v2358
    %v2391 = vsub.f32 %v1428, %v2359
    %v2392 = vsub.f32 %v1431, %v2360
    %v2393 = vsub.f32 %v1436, %v2361
    %v2394 = vsub.f32 %v1439, %v2362
    %v2395 = vsub.f32 %v1444, %v2363
    %v2396 = vsub.f32 %v1447, %v2364
    %v2397 = vsub.f32 %v1452, %v2365
    %v2398 = vsub.f32 %v1455, %v2366
    %v2399 = vsub.f32 %v1460, %v2367
    %v2400 = vsub.f32 %v1463, %v2368
    %v2401 = vsub.f32 %v1468, %v2369
    %v2402 = vsub.f32 %v1471, %v2370
    %v2403 = vsub.f32 %v1476, %v2371
    %v2404 = vsub.f32 %v1479, %v2372
    %v2405 = vsub.f32 %v1484, %v2373
    %v2406 = vsub.f32 %v1487, %v2374
    %v2407 = vsub.f32 %v1492, %v2375
    %v2408 = vsub.f32 %v1495, %v2376
    %v2409 = vsub.f32 %v1500, %v2377
    %v2410 = vsub.f32 %v1503, %v2378
    %2412 = vset.pattern.permute.xlu0 0
    %2413 = vperm.xlu0 %2412, %v2148
    %v2414 = vpop.permute.xlu0 %2413
    %2417 = vset.pattern.permute.xlu0 0
    %2418 = vperm.xlu0 %2417, %v2149
    %v2419 = vpop.permute.xlu0 %2418
    %2422 = vset.pattern.permute.xlu0 0
    %2423 = vperm.xlu0 %2422, %v2150
    %v2424 = vpop.permute.xlu0 %2423
    %2427 = vset.pattern.permute.xlu0 0
    %2428 = vperm.xlu0 %2427, %v2151
    %v2429 = vpop.permute.xlu0 %2428
    %2432 = vset.pattern.permute.xlu0 0
    %2433 = vperm.xlu0 %2432, %v2152
    %v2434 = vpop.permute.xlu0 %2433
    %2437 = vset.pattern.permute.xlu0 0
    %2438 = vperm.xlu0 %2437, %v2153
    %v2439 = vpop.permute.xlu0 %2438
    %2442 = vset.pattern.permute.xlu0 0
    %2443 = vperm.xlu0 %2442, %v2154
    %v2444 = vpop.permute.xlu0 %2443
    %2447 = vset.pattern.permute.xlu0 0
    %2448 = vperm.xlu0 %2447, %v2155
    %v2449 = vpop.permute.xlu0 %2448
    %2452 = vset.pattern.permute.xlu0 0
    %2453 = vperm.xlu0 %2452, %v2156
    %v2454 = vpop.permute.xlu0 %2453
    %2457 = vset.pattern.permute.xlu0 0
    %2458 = vperm.xlu0 %2457, %v2157
    %v2459 = vpop.permute.xlu0 %2458
    %2462 = vset.pattern.permute.xlu0 0
    %2463 = vperm.xlu0 %2462, %v2158
    %v2464 = vpop.permute.xlu0 %2463
    %2467 = vset.pattern.permute.xlu0 0
    %2468 = vperm.xlu0 %2467, %v2159
    %v2469 = vpop.permute.xlu0 %2468
    %2472 = vset.pattern.permute.xlu0 0
    %2473 = vperm.xlu0 %2472, %v2160
    %v2474 = vpop.permute.xlu0 %2473
    %2477 = vset.pattern.permute.xlu0 0
    %2478 = vperm.xlu0 %2477, %v2161
    %v2479 = vpop.permute.xlu0 %2478
    %2482 = vset.pattern.permute.xlu0 0
    %2483 = vperm.xlu0 %2482, %v2162
    %v2484 = vpop.permute.xlu0 %2483
    %2487 = vset.pattern.permute.xlu0 0
    %2488 = vperm.xlu0 %2487, %v2163
    %v2489 = vpop.permute.xlu0 %2488
    %2492 = vset.pattern.permute.xlu0 0
    %2493 = vperm.xlu0 %2492, %v2164
    %v2494 = vpop.permute.xlu0 %2493
    %2497 = vset.pattern.permute.xlu0 0
    %2498 = vperm.xlu0 %2497, %v2165
    %v2499 = vpop.permute.xlu0 %2498
    %2502 = vset.pattern.permute.xlu0 0
    %2503 = vperm.xlu0 %2502, %v2166
    %v2504 = vpop.permute.xlu0 %2503
    %2507 = vset.pattern.permute.xlu0 0
    %2508 = vperm.xlu0 %2507, %v2167
    %v2509 = vpop.permute.xlu0 %2508
    %2512 = vset.pattern.permute.xlu0 0
    %2513 = vperm.xlu0 %2512, %v2168
    %v2514 = vpop.permute.xlu0 %2513
    %2517 = vset.pattern.permute.xlu0 0
    %2518 = vperm.xlu0 %2517, %v2169
    %v2519 = vpop.permute.xlu0 %2518
    %2522 = vset.pattern.permute.xlu0 0
    %2523 = vperm.xlu0 %2522, %v2170
    %v2524 = vpop.permute.xlu0 %2523
    %2527 = vset.pattern.permute.xlu0 0
    %2528 = vperm.xlu0 %2527, %v2171
    %v2529 = vpop.permute.xlu0 %2528
    %2532 = vset.pattern.permute.xlu0 0
    %2533 = vperm.xlu0 %2532, %v2172
    %v2534 = vpop.permute.xlu0 %2533
    %2537 = vset.pattern.permute.xlu0 0
    %2538 = vperm.xlu0 %2537, %v2173
    %v2539 = vpop.permute.xlu0 %2538
    %2542 = vset.pattern.permute.xlu0 0
    %2543 = vperm.xlu0 %2542, %v2174
    %v2544 = vpop.permute.xlu0 %2543
    %2547 = vset.pattern.permute.xlu0 0
    %2548 = vperm.xlu0 %2547, %v2175
    %v2549 = vpop.permute.xlu0 %2548
    %2552 = vset.pattern.permute.xlu0 0
    %2553 = vperm.xlu0 %2552, %v2176
    %v2554 = vpop.permute.xlu0 %2553
    %2557 = vset.pattern.permute.xlu0 0
    %2558 = vperm.xlu0 %2557, %v2177
    %v2559 = vpop.permute.xlu0 %2558
    %2562 = vset.pattern.permute.xlu0 0
    %2563 = vperm.xlu0 %2562, %v2178
    %v2564 = vpop.permute.xlu0 %2563
    %2567 = vset.pattern.permute.xlu0 0
    %2568 = vperm.xlu0 %2567, %v2179
    %v2569 = vpop.permute.xlu0 %2568
    %v2571 = vmul.f32 %v2379, %v2414
    %v2572 = vmul.f32 %v2380, %v2419
    %v2573 = vmul.f32 %v2381, %v2424
    %v2574 = vmul.f32 %v2382, %v2429
    %v2575 = vmul.f32 %v2383, %v2434
    %v2576 = vmul.f32 %v2384, %v2439
    %v2577 = vmul.f32 %v2385, %v2444
    %v2578 = vmul.f32 %v2386, %v2449
    %v2579 = vmul.f32 %v2387, %v2454
    %v2580 = vmul.f32 %v2388, %v2459
    %v2581 = vmul.f32 %v2389, %v2464
    %v2582 = vmul.f32 %v2390, %v2469
    %v2583 = vmul.f32 %v2391, %v2474
    %v2584 = vmul.f32 %v2392, %v2479
    %v2585 = vmul.f32 %v2393, %v2484
    %v2586 = vmul.f32 %v2394, %v2489
    %v2587 = vmul.f32 %v2395, %v2494
    %v2588 = vmul.f32 %v2396, %v2499
    %v2589 = vmul.f32 %v2397, %v2504
    %v2590 = vmul.f32 %v2398, %v2509
    %v2591 = vmul.f32 %v2399, %v2514
    %v2592 = vmul.f32 %v2400, %v2519
    %v2593 = vmul.f32 %v2401, %v2524
    %v2594 = vmul.f32 %v2402, %v2529
    %v2595 = vmul.f32 %v2403, %v2534
    %v2596 = vmul.f32 %v2404, %v2539
    %v2597 = vmul.f32 %v2405, %v2544
    %v2598 = vmul.f32 %v2406, %v2549
    %v2599 = vmul.f32 %v2407, %v2554
    %v2600 = vmul.f32 %v2408, %v2559
    %v2601 = vmul.f32 %v2409, %v2564
    %v2602 = vmul.f32 %v2410, %v2569
    %v2603 = vadd.f32 %v1121, %v2571
    %v2604 = vadd.f32 %v1122, %v2572
    %v2605 = vadd.f32 %v1123, %v2573
    %v2606 = vadd.f32 %v1124, %v2574
    %v2607 = vadd.f32 %v1125, %v2575
    %v2608 = vadd.f32 %v1126, %v2576
    %v2609 = vadd.f32 %v1127, %v2577
    %v2610 = vadd.f32 %v1128, %v2578
    %v2611 = vadd.f32 %v1129, %v2579
    %v2612 = vadd.f32 %v1130, %v2580
    %v2613 = vadd.f32 %v1131, %v2581
    %v2614 = vadd.f32 %v1132, %v2582
    %v2615 = vadd.f32 %v1133, %v2583
    %v2616 = vadd.f32 %v1134, %v2584
    %v2617 = vadd.f32 %v1135, %v2585
    %v2618 = vadd.f32 %v1136, %v2586
    %v2619 = vadd.f32 %v1137, %v2587
    %v2620 = vadd.f32 %v1138, %v2588
    %v2621 = vadd.f32 %v1139, %v2589
    %v2622 = vadd.f32 %v1140, %v2590
    %v2623 = vadd.f32 %v1141, %v2591
    %v2624 = vadd.f32 %v1142, %v2592
    %v2625 = vadd.f32 %v1143, %v2593
    %v2626 = vadd.f32 %v1144, %v2594
    %v2627 = vadd.f32 %v1145, %v2595
    %v2628 = vadd.f32 %v1146, %v2596
    %v2629 = vadd.f32 %v1147, %v2597
    %v2630 = vadd.f32 %v1148, %v2598
    %v2631 = vadd.f32 %v1149, %v2599
    %v2632 = vadd.f32 %v1150, %v2600
    %v2633 = vadd.f32 %v1151, %v2601
    %v2634 = vadd.f32 %v1152, %v2602
    %v2635 = vld [vmem:[%s10] sm:$0x1]
    %v2637 = vlaneseq
    %v2638 = vshrl.u32 %v2637, 7
    %v2639 = vsub.s32 0, %v2638
    %v2640 = vrot.slane %v2635, %v2639
    %v2642 = vadd.f32 %v2603, %v2640
    %v2643 = vadd.f32 %v2604, %v2640
    %v2644 = vadd.f32 %v2605, %v2640
    %v2645 = vadd.f32 %v2606, %v2640
    %v2646 = vadd.f32 %v2607, %v2640
    %v2647 = vadd.f32 %v2608, %v2640
    %v2648 = vadd.f32 %v2609, %v2640
    %v2649 = vadd.f32 %v2610, %v2640
    %v2650 = vadd.f32 %v2611, %v2640
    %v2651 = vadd.f32 %v2612, %v2640
    %v2652 = vadd.f32 %v2613, %v2640
    %v2653 = vadd.f32 %v2614, %v2640
    %v2654 = vadd.f32 %v2615, %v2640
    %v2655 = vadd.f32 %v2616, %v2640
    %v2656 = vadd.f32 %v2617, %v2640
    %v2657 = vadd.f32 %v2618, %v2640
    %v2658 = vadd.f32 %v2619, %v2640
    %v2659 = vadd.f32 %v2620, %v2640
    %v2660 = vadd.f32 %v2621, %v2640
    %v2661 = vadd.f32 %v2622, %v2640
    %v2662 = vadd.f32 %v2623, %v2640
    %v2663 = vadd.f32 %v2624, %v2640
    %v2664 = vadd.f32 %v2625, %v2640
    %v2665 = vadd.f32 %v2626, %v2640
    %v2666 = vadd.f32 %v2627, %v2640
    %v2667 = vadd.f32 %v2628, %v2640
    %v2668 = vadd.f32 %v2629, %v2640
    %v2669 = vadd.f32 %v2630, %v2640
    %v2670 = vadd.f32 %v2631, %v2640
    %v2671 = vadd.f32 %v2632, %v2640
    %v2672 = vadd.f32 %v2633, %v2640
    %v2673 = vadd.f32 %v2634, %v2640
    %v2674 = vld [vmem:[%s2] sm:$0xf]
    %v2675 = vld [vmem:[%s2 + $0x4] sm:$0xf]
    %v2676 = vunpack.c.l.bf16 %v2674
    %v2677 = vunpack.c.l.bf16 %v2675
    %v2678 = vadd.f32 %v2642, %v2676
    %v2679 = vadd.f32 %v2643, %v2677
    %v2680 = vadd.f32 %v2644, %v2676
    %v2681 = vadd.f32 %v2645, %v2677
    %v2682 = vadd.f32 %v2646, %v2676
    %v2683 = vadd.f32 %v2647, %v2677
    %v2684 = vadd.f32 %v2648, %v2676
    %v2685 = vadd.f32 %v2649, %v2677
    %v2686 = vadd.f32 %v2650, %v2676
    %v2687 = vadd.f32 %v2651, %v2677
    %v2688 = vadd.f32 %v2652, %v2676
    %v2689 = vadd.f32 %v2653, %v2677
    %v2690 = vadd.f32 %v2654, %v2676
    %v2691 = vadd.f32 %v2655, %v2677
    %v2692 = vadd.f32 %v2656, %v2676
    %v2693 = vadd.f32 %v2657, %v2677
    %v2694 = vadd.f32 %v2658, %v2676
    %v2695 = vadd.f32 %v2659, %v2677
    %v2696 = vadd.f32 %v2660, %v2676
    %v2697 = vadd.f32 %v2661, %v2677
    %v2698 = vadd.f32 %v2662, %v2676
    %v2699 = vadd.f32 %v2663, %v2677
    %v2700 = vadd.f32 %v2664, %v2676
    %v2701 = vadd.f32 %v2665, %v2677
    %v2702 = vadd.f32 %v2666, %v2676
    %v2703 = vadd.f32 %v2667, %v2677
    %v2704 = vadd.f32 %v2668, %v2676
    %v2705 = vadd.f32 %v2669, %v2677
    %v2706 = vadd.f32 %v2670, %v2676
    %v2707 = vadd.f32 %v2671, %v2677
    %v2708 = vadd.f32 %v2672, %v2676
    %v2709 = vadd.f32 %v2673, %v2677
    %v2710 = vld [vmem:[%s3] sm:$0x1]
    %v2711 = vld [vmem:[%s3 + $0x1] sm:$0x1]
    %v2712 = vld [vmem:[%s3 + $0x2] sm:$0x1]
    %v2713 = vld [vmem:[%s3 + $0x3] sm:$0x1]
    %v2714 = vld [vmem:[%s3 + $0x4] sm:$0x1]
    %v2715 = vld [vmem:[%s3 + $0x5] sm:$0x1]
    %v2716 = vld [vmem:[%s3 + $0x6] sm:$0x1]
    %v2717 = vld [vmem:[%s3 + $0x7] sm:$0x1]
    %v2718 = vld [vmem:[%s3 + $0x8] sm:$0x1]
    %v2719 = vld [vmem:[%s3 + $0x9] sm:$0x1]
    %v2720 = vld [vmem:[%s3 + $0xa] sm:$0x1]
    %v2721 = vld [vmem:[%s3 + $0xb] sm:$0x1]
    %v2722 = vld [vmem:[%s3 + $0xc] sm:$0x1]
    %v2723 = vld [vmem:[%s3 + $0xd] sm:$0x1]
    %v2724 = vld [vmem:[%s3 + $0xe] sm:$0x1]
    %v2725 = vld [vmem:[%s3 + $0xf] sm:$0x1]
    %v2726 = vunpack.c.l.bf16 %v2710
    %v2727 = vunpack.c.l.bf16 %v2711
    %v2728 = vunpack.c.l.bf16 %v2712
    %v2729 = vunpack.c.l.bf16 %v2713
    %v2730 = vunpack.c.l.bf16 %v2714
    %v2731 = vunpack.c.l.bf16 %v2715
    %v2732 = vunpack.c.l.bf16 %v2716
    %v2733 = vunpack.c.l.bf16 %v2717
    %v2734 = vunpack.c.l.bf16 %v2718
    %v2735 = vunpack.c.l.bf16 %v2719
    %v2736 = vunpack.c.l.bf16 %v2720
    %v2737 = vunpack.c.l.bf16 %v2721
    %v2738 = vunpack.c.l.bf16 %v2722
    %v2739 = vunpack.c.l.bf16 %v2723
    %v2740 = vunpack.c.l.bf16 %v2724
    %v2741 = vunpack.c.l.bf16 %v2725
    %v2742 = vlaneseq
    %v2743 = vshrl.u32 %v2742, 7
    %v2744 = vsub.s32 0, %v2743
    %v2745 = vrot.slane %v2726, %v2744
    %v2746 = vlaneseq
    %v2747 = vshrl.u32 %v2746, 7
    %v2748 = vsub.s32 0, %v2747
    %v2749 = vrot.slane %v2727, %v2748
    %v2750 = vlaneseq
    %v2751 = vshrl.u32 %v2750, 7
    %v2752 = vsub.s32 0, %v2751
    %v2753 = vrot.slane %v2728, %v2752
    %v2754 = vlaneseq
    %v2755 = vshrl.u32 %v2754, 7
    %v2756 = vsub.s32 0, %v2755
    %v2757 = vrot.slane %v2729, %v2756
    %v2758 = vlaneseq
    %v2759 = vshrl.u32 %v2758, 7
    %v2760 = vsub.s32 0, %v2759
    %v2761 = vrot.slane %v2730, %v2760
    %v2762 = vlaneseq
    %v2763 = vshrl.u32 %v2762, 7
    %v2764 = vsub.s32 0, %v2763
    %v2765 = vrot.slane %v2731, %v2764
    %v2766 = vlaneseq
    %v2767 = vshrl.u32 %v2766, 7
    %v2768 = vsub.s32 0, %v2767
    %v2769 = vrot.slane %v2732, %v2768
    %v2770 = vlaneseq
    %v2771 = vshrl.u32 %v2770, 7
    %v2772 = vsub.s32 0, %v2771
    %v2773 = vrot.slane %v2733, %v2772
    %v2774 = vlaneseq
    %v2775 = vshrl.u32 %v2774, 7
    %v2776 = vsub.s32 0, %v2775
    %v2777 = vrot.slane %v2734, %v2776
    %v2778 = vlaneseq
    %v2779 = vshrl.u32 %v2778, 7
    %v2780 = vsub.s32 0, %v2779
    %v2781 = vrot.slane %v2735, %v2780
    %v2782 = vlaneseq
    %v2783 = vshrl.u32 %v2782, 7
    %v2784 = vsub.s32 0, %v2783
    %v2785 = vrot.slane %v2736, %v2784
    %v2786 = vlaneseq
    %v2787 = vshrl.u32 %v2786, 7
    %v2788 = vsub.s32 0, %v2787
    %v2789 = vrot.slane %v2737, %v2788
    %v2790 = vlaneseq
    %v2791 = vshrl.u32 %v2790, 7
    %v2792 = vsub.s32 0, %v2791
    %v2793 = vrot.slane %v2738, %v2792
    %v2794 = vlaneseq
    %v2795 = vshrl.u32 %v2794, 7
    %v2796 = vsub.s32 0, %v2795
    %v2797 = vrot.slane %v2739, %v2796
    %v2798 = vlaneseq
    %v2799 = vshrl.u32 %v2798, 7
    %v2800 = vsub.s32 0, %v2799
    %v2801 = vrot.slane %v2740, %v2800
    %v2802 = vlaneseq
    %v2803 = vshrl.u32 %v2802, 7
    %v2804 = vsub.s32 0, %v2803
    %v2805 = vrot.slane %v2741, %v2804
    %v2806 = vadd.f32 %v2678, %v2745
    %v2807 = vadd.f32 %v2679, %v2745
    %v2808 = vadd.f32 %v2680, %v2749
    %v2809 = vadd.f32 %v2681, %v2749
    %v2810 = vadd.f32 %v2682, %v2753
    %v2811 = vadd.f32 %v2683, %v2753
    %v2812 = vadd.f32 %v2684, %v2757
    %v2813 = vadd.f32 %v2685, %v2757
    %v2814 = vadd.f32 %v2686, %v2761
    %v2815 = vadd.f32 %v2687, %v2761
    %v2816 = vadd.f32 %v2688, %v2765
    %v2817 = vadd.f32 %v2689, %v2765
    %v2818 = vadd.f32 %v2690, %v2769
    %v2819 = vadd.f32 %v2691, %v2769
    %v2820 = vadd.f32 %v2692, %v2773
    %v2821 = vadd.f32 %v2693, %v2773
    %v2822 = vadd.f32 %v2694, %v2777
    %v2823 = vadd.f32 %v2695, %v2777
    %v2824 = vadd.f32 %v2696, %v2781
    %v2825 = vadd.f32 %v2697, %v2781
    %v2826 = vadd.f32 %v2698, %v2785
    %v2827 = vadd.f32 %v2699, %v2785
    %v2828 = vadd.f32 %v2700, %v2789
    %v2829 = vadd.f32 %v2701, %v2789
    %v2830 = vadd.f32 %v2702, %v2793
    %v2831 = vadd.f32 %v2703, %v2793
    %v2832 = vadd.f32 %v2704, %v2797
    %v2833 = vadd.f32 %v2705, %v2797
    %v2834 = vadd.f32 %v2706, %v2801
    %v2835 = vadd.f32 %v2707, %v2801
    %v2836 = vadd.f32 %v2708, %v2805
    %v2837 = vadd.f32 %v2709, %v2805
    %vm2838 = vcmask 523264
    %v2840 = vsel %vm2838, %v2806, 0
    %v2843 = vsel %vm2838, %v2807, 0
    %v2846 = vsel %vm2838, %v2808, 0
    %v2849 = vsel %vm2838, %v2809, 0
    %v2852 = vsel %vm2838, %v2810, 0
    %v2855 = vsel %vm2838, %v2811, 0
    %v2858 = vsel %vm2838, %v2812, 0
    %v2861 = vsel %vm2838, %v2813, 0
    %v2864 = vsel %vm2838, %v2814, 0
    %v2867 = vsel %vm2838, %v2815, 0
    %v2870 = vsel %vm2838, %v2816, 0
    %v2873 = vsel %vm2838, %v2817, 0
    %v2876 = vsel %vm2838, %v2818, 0
    %v2879 = vsel %vm2838, %v2819, 0
    %v2882 = vsel %vm2838, %v2820, 0
    %v2885 = vsel %vm2838, %v2821, 0
    %v2888 = vsel %vm2838, %v2822, 0
    %v2891 = vsel %vm2838, %v2823, 0
    %v2894 = vsel %vm2838, %v2824, 0
    %v2897 = vsel %vm2838, %v2825, 0
    %v2900 = vsel %vm2838, %v2826, 0
    %v2903 = vsel %vm2838, %v2827, 0
    %v2906 = vsel %vm2838, %v2828, 0
    %v2909 = vsel %vm2838, %v2829, 0
    %v2912 = vsel %vm2838, %v2830, 0
    %v2915 = vsel %vm2838, %v2831, 0
    %v2918 = vsel %vm2838, %v2832, 0
    %v2921 = vsel %vm2838, %v2833, 0
    %v2924 = vsel %vm2838, %v2834, 0
    %v2927 = vsel %vm2838, %v2835, 0
    %v2930 = vsel %vm2838, %v2836, 0
    %v2933 = vsel %vm2838, %v2837, 0
    %2935 = vmatprep.subr.mxu0 0.0
    %2936 = vmatpush1.msra.mxu0 1.0
    %2937 = vmatprep.subr.mxu0 0.0
    %2938 = vmatpush1.msra.mxu0 1.0
    %2939 = vmatprep.subr.mxu0 0.0
    %2940 = vmatpush1.msra.mxu0 1.0
    %2941 = vmatprep.subr.mxu0 0.0
    %2942 = vmatpush1.msra.mxu0 1.0
    %2943 = vmatprep.subr.mxu0 0.0
    %2944 = vmatpush1.msra.mxu0 1.0
    %2945 = vmatprep.subr.mxu0 0.0
    %2946 = vmatpush1.msra.mxu0 1.0
    %2947 = vmatprep.subr.mxu0 0.0
    %2948 = vmatpush1.msra.mxu0 1.0
    %2949 = vmatprep.subr.mxu0 0.0
    %2950 = vmatpush1.msra.mxu0 1.0
    %2951 = vmatprep.subr.mxu0 0.0
    %2952 = vmatpush1.msra.mxu0 0.0
    %2953 = vmatprep.subr.mxu0 0.0
    %2954 = vmatpush1.msra.mxu0 0.0
    %2955 = vmatprep.subr.mxu0 0.0
    %2956 = vmatpush1.msra.mxu0 0.0
    %2957 = vmatprep.subr.mxu0 0.0
    %2958 = vmatpush1.msra.mxu0 0.0
    %2959 = vmatprep.subr.mxu0 0.0
    %2960 = vmatpush1.msra.mxu0 0.0
    %2961 = vmatprep.subr.mxu0 0.0
    %2962 = vmatpush1.msra.mxu0 0.0
    %2963 = vmatprep.subr.mxu0 0.0
    %2964 = vmatpush1.msra.mxu0 0.0
    %2965 = vmatprep.subr.mxu0 0.0
    %2966 = vmatpush1.msra.mxu0 0.0
    %2967 = vmatprep.subr.mxu0 0.0
    %2968 = vmatpush1.msra.mxu0 0.0
    %2969 = vmatprep.subr.mxu0 0.0
    %2970 = vmatpush1.msra.mxu0 0.0
    %2971 = vmatprep.subr.mxu0 0.0
    %2972 = vmatpush1.msra.mxu0 0.0
    %2973 = vmatprep.subr.mxu0 0.0
    %2974 = vmatpush1.msra.mxu0 0.0
    %2975 = vmatprep.subr.mxu0 0.0
    %2976 = vmatpush1.msra.mxu0 0.0
    %2977 = vmatprep.subr.mxu0 0.0
    %2978 = vmatpush1.msra.mxu0 0.0
    %2979 = vmatprep.subr.mxu0 0.0
    %2980 = vmatpush1.msra.mxu0 0.0
    %2981 = vmatprep.subr.mxu0 0.0
    %2982 = vmatpush1.msra.mxu0 0.0
    %2983 = vmatprep.subr.mxu0 0.0
    %2984 = vmatpush1.msra.mxu0 0.0
    %2985 = vmatprep.subr.mxu0 0.0
    %2986 = vmatpush1.msra.mxu0 0.0
    %2987 = vmatprep.subr.mxu0 0.0
    %2988 = vmatpush1.msra.mxu0 0.0
    %2989 = vmatprep.subr.mxu0 0.0
    %2990 = vmatpush1.msra.mxu0 0.0
    %2991 = vmatprep.subr.mxu0 0.0
    %2992 = vmatpush1.msra.mxu0 0.0
    %2993 = vmatprep.subr.mxu0 0.0
    %2994 = vmatpush1.msra.mxu0 0.0
    %2995 = vmatprep.subr.mxu0 0.0
    %2996 = vmatpush1.msra.mxu0 0.0
    %2997 = vmatprep.subr.mxu0 0.0
    %2998 = vmatpush1.msra.mxu0 0.0
    %2999 = vmatprep.mubr.f32.mxu0 0.0
    %3000 = vmatmul.mubr.f32.gmra.mrb[0].mxu0 %v2840
    %v3001 = vpop.f32.mrb[0].mxu0
    %v3002 = vadd.f32 0.0, %v3001
    %v3003 = vpop.f32.mrb[0].mxu0
    %3004 = vmatprep.mubr.f32.mxu0 0.0
    %3005 = vmatmul.mubr.f32.gmra.mrb[0].mxu0 %v2843
    %v3006 = vpop.f32.mrb[0].mxu0
    %v3007 = vadd.f32 0.0, %v3006
    %v3008 = vpop.f32.mrb[0].mxu0
    %3009 = vmatprep.mubr.f32.mxu0 0.0
    %3010 = vmatmul.mubr.f32.gmra.mrb[0].mxu0 %v2846
    %v3011 = vpop.f32.mrb[0].mxu0
    %v3012 = vadd.f32 0.0, %v3011
    %v3013 = vpop.f32.mrb[0].mxu0
    %3014 = vmatprep.mubr.f32.mxu0 0.0
    %3015 = vmatmul.mubr.f32.gmra.mrb[0].mxu0 %v2849
    %v3016 = vpop.f32.mrb[0].mxu0
    %v3017 = vadd.f32 0.0, %v3016
    %v3018 = vpop.f32.mrb[0].mxu0
    %3019 = vmatprep.mubr.f32.mxu0 0.0
    %3020 = vmatmul.mubr.f32.gmra.mrb[0].mxu0 %v2852
    %v3021 = vpop.f32.mrb[0].mxu0
    %v3022 = vadd.f32 0.0, %v3021
    %v3023 = vpop.f32.mrb[0].mxu0
    %3024 = vmatprep.mubr.f32.mxu0 0.0
    %3025 = vmatmul.mubr.f32.gmra.mrb[0].mxu0 %v2855
    %v3026 = vpop.f32.mrb[0].mxu0
    %v3027 = vadd.f32 0.0, %v3026
    %v3028 = vpop.f32.mrb[0].mxu0
    %3029 = vmatprep.mubr.f32.mxu0 0.0
    %3030 = vmatmul.mubr.f32.gmra.mrb[0].mxu0 %v2858
    %v3031 = vpop.f32.mrb[0].mxu0
    %v3032 = vadd.f32 0.0, %v3031
    %v3033 = vpop.f32.mrb[0].mxu0
    %3034 = vmatprep.mubr.f32.mxu0 0.0
    %3035 = vmatmul.mubr.f32.gmra.mrb[0].mxu0 %v2861
    %v3036 = vpop.f32.mrb[0].mxu0
    %v3037 = vadd.f32 0.0, %v3036
    %v3038 = vpop.f32.mrb[0].mxu0
    %3039 = vmatprep.mubr.f32.mxu0 0.0
    %3040 = vmatmul.mubr.f32.gmra.mrb[0].mxu0 %v2864
    %v3041 = vpop.f32.mrb[0].mxu0
    %v3042 = vadd.f32 0.0, %v3041
    %v3043 = vpop.f32.mrb[0].mxu0
    %3044 = vmatprep.mubr.f32.mxu0 0.0
    %3045 = vmatmul.mubr.f32.gmra.mrb[0].mxu0 %v2867
    %v3046 = vpop.f32.mrb[0].mxu0
    %v3047 = vadd.f32 0.0, %v3046
    %v3048 = vpop.f32.mrb[0].mxu0
    %3049 = vmatprep.mubr.f32.mxu0 0.0
    %3050 = vmatmul.mubr.f32.gmra.mrb[0].mxu0 %v2870
    %v3051 = vpop.f32.mrb[0].mxu0
    %v3052 = vadd.f32 0.0, %v3051
    %v3053 = vpop.f32.mrb[0].mxu0
    %3054 = vmatprep.mubr.f32.mxu0 0.0
    %3055 = vmatmul.mubr.f32.gmra.mrb[0].mxu0 %v2873
    %v3056 = vpop.f32.mrb[0].mxu0
    %v3057 = vadd.f32 0.0, %v3056
    %v3058 = vpop.f32.mrb[0].mxu0
    %3059 = vmatprep.mubr.f32.mxu0 0.0
    %3060 = vmatmul.mubr.f32.gmra.mrb[0].mxu0 %v2876
    %v3061 = vpop.f32.mrb[0].mxu0
    %v3062 = vadd.f32 0.0, %v3061
    %v3063 = vpop.f32.mrb[0].mxu0
    %3064 = vmatprep.mubr.f32.mxu0 0.0
    %3065 = vmatmul.mubr.f32.gmra.mrb[0].mxu0 %v2879
    %v3066 = vpop.f32.mrb[0].mxu0
    %v3067 = vadd.f32 0.0, %v3066
    %v3068 = vpop.f32.mrb[0].mxu0
    %3069 = vmatprep.mubr.f32.mxu0 0.0
    %3070 = vmatmul.mubr.f32.gmra.mrb[0].mxu0 %v2882
    %v3071 = vpop.f32.mrb[0].mxu0
    %v3072 = vadd.f32 0.0, %v3071
    %v3073 = vpop.f32.mrb[0].mxu0
    %3074 = vmatprep.mubr.f32.mxu0 0.0
    %3075 = vmatmul.mubr.f32.gmra.mrb[0].mxu0 %v2885
    %v3076 = vpop.f32.mrb[0].mxu0
    %v3077 = vadd.f32 0.0, %v3076
    %v3078 = vpop.f32.mrb[0].mxu0
    %3079 = vmatprep.mubr.f32.mxu0 0.0
    %3080 = vmatmul.mubr.f32.gmra.mrb[0].mxu0 %v2888
    %v3081 = vpop.f32.mrb[0].mxu0
    %v3082 = vadd.f32 0.0, %v3081
    %v3083 = vpop.f32.mrb[0].mxu0
    %3084 = vmatprep.mubr.f32.mxu0 0.0
    %3085 = vmatmul.mubr.f32.gmra.mrb[0].mxu0 %v2891
    %v3086 = vpop.f32.mrb[0].mxu0
    %v3087 = vadd.f32 0.0, %v3086
    %v3088 = vpop.f32.mrb[0].mxu0
    %3089 = vmatprep.mubr.f32.mxu0 0.0
    %3090 = vmatmul.mubr.f32.gmra.mrb[0].mxu0 %v2894
    %v3091 = vpop.f32.mrb[0].mxu0
    %v3092 = vadd.f32 0.0, %v3091
    %v3093 = vpop.f32.mrb[0].mxu0
    %3094 = vmatprep.mubr.f32.mxu0 0.0
    %3095 = vmatmul.mubr.f32.gmra.mrb[0].mxu0 %v2897
    %v3096 = vpop.f32.mrb[0].mxu0
    %v3097 = vadd.f32 0.0, %v3096
    %v3098 = vpop.f32.mrb[0].mxu0
    %3099 = vmatprep.mubr.f32.mxu0 0.0
    %3100 = vmatmul.mubr.f32.gmra.mrb[0].mxu0 %v2900
    %v3101 = vpop.f32.mrb[0].mxu0
    %v3102 = vadd.f32 0.0, %v3101
    %v3103 = vpop.f32.mrb[0].mxu0
    %3104 = vmatprep.mubr.f32.mxu0 0.0
    %3105 = vmatmul.mubr.f32.gmra.mrb[0].mxu0 %v2903
    %v3106 = vpop.f32.mrb[0].mxu0
    %v3107 = vadd.f32 0.0, %v3106
    %v3108 = vpop.f32.mrb[0].mxu0
    %3109 = vmatprep.mubr.f32.mxu0 0.0
    %3110 = vmatmul.mubr.f32.gmra.mrb[0].mxu0 %v2906
    %v3111 = vpop.f32.mrb[0].mxu0
    %v3112 = vadd.f32 0.0, %v3111
    %v3113 = vpop.f32.mrb[0].mxu0
    %3114 = vmatprep.mubr.f32.mxu0 0.0
    %3115 = vmatmul.mubr.f32.gmra.mrb[0].mxu0 %v2909
    %v3116 = vpop.f32.mrb[0].mxu0
    %v3117 = vadd.f32 0.0, %v3116
    %v3118 = vpop.f32.mrb[0].mxu0
    %3119 = vmatprep.mubr.f32.mxu0 0.0
    %3120 = vmatmul.mubr.f32.gmra.mrb[0].mxu0 %v2912
    %v3121 = vpop.f32.mrb[0].mxu0
    %v3122 = vadd.f32 0.0, %v3121
    %v3123 = vpop.f32.mrb[0].mxu0
    %3124 = vmatprep.mubr.f32.mxu0 0.0
    %3125 = vmatmul.mubr.f32.gmra.mrb[0].mxu0 %v2915
    %v3126 = vpop.f32.mrb[0].mxu0
    %v3127 = vadd.f32 0.0, %v3126
    %v3128 = vpop.f32.mrb[0].mxu0
    %3129 = vmatprep.mubr.f32.mxu0 0.0
    %3130 = vmatmul.mubr.f32.gmra.mrb[0].mxu0 %v2918
    %v3131 = vpop.f32.mrb[0].mxu0
    %v3132 = vadd.f32 0.0, %v3131
    %v3133 = vpop.f32.mrb[0].mxu0
    %3134 = vmatprep.mubr.f32.mxu0 0.0
    %3135 = vmatmul.mubr.f32.gmra.mrb[0].mxu0 %v2921
    %v3136 = vpop.f32.mrb[0].mxu0
    %v3137 = vadd.f32 0.0, %v3136
    %v3138 = vpop.f32.mrb[0].mxu0
    %3139 = vmatprep.mubr.f32.mxu0 0.0
    %3140 = vmatmul.mubr.f32.gmra.mrb[0].mxu0 %v2924
    %v3141 = vpop.f32.mrb[0].mxu0
    %v3142 = vadd.f32 0.0, %v3141
    %v3143 = vpop.f32.mrb[0].mxu0
    %3144 = vmatprep.mubr.f32.mxu0 0.0
    %3145 = vmatmul.mubr.f32.gmra.mrb[0].mxu0 %v2927
    %v3146 = vpop.f32.mrb[0].mxu0
    %v3147 = vadd.f32 0.0, %v3146
    %v3148 = vpop.f32.mrb[0].mxu0
    %3149 = vmatprep.mubr.f32.mxu0 0.0
    %3150 = vmatmul.mubr.f32.gmra.mrb[0].mxu0 %v2930
    %v3151 = vpop.f32.mrb[0].mxu0
    %v3152 = vadd.f32 0.0, %v3151
    %v3153 = vpop.f32.mrb[0].mxu0
    %3154 = vmatprep.mubr.f32.mxu0 0.0
    %3155 = vmatmul.mubr.f32.gmra.mrb[0].mxu0 %v2933
    %v3156 = vpop.f32.mrb[0].mxu0
    %v3157 = vadd.f32 0.0, %v3156
    %v3158 = vpop.f32.mrb[0].mxu0
    %3159 = vdwg.mxu0
    %v3160 = vmul.f32 %v2806, %v2806
    %v3161 = vmul.f32 %v2807, %v2807
    %v3162 = vmul.f32 %v2808, %v2808
    %v3163 = vmul.f32 %v2809, %v2809
    %v3164 = vmul.f32 %v2810, %v2810
    %v3165 = vmul.f32 %v2811, %v2811
    %v3166 = vmul.f32 %v2812, %v2812
    %v3167 = vmul.f32 %v2813, %v2813
    %v3168 = vmul.f32 %v2814, %v2814
    %v3169 = vmul.f32 %v2815, %v2815
    %v3170 = vmul.f32 %v2816, %v2816
    %v3171 = vmul.f32 %v2817, %v2817
    %v3172 = vmul.f32 %v2818, %v2818
    %v3173 = vmul.f32 %v2819, %v2819
    %v3174 = vmul.f32 %v2820, %v2820
    %v3175 = vmul.f32 %v2821, %v2821
    %v3176 = vmul.f32 %v2822, %v2822
    %v3177 = vmul.f32 %v2823, %v2823
    %v3178 = vmul.f32 %v2824, %v2824
    %v3179 = vmul.f32 %v2825, %v2825
    %v3180 = vmul.f32 %v2826, %v2826
    %v3181 = vmul.f32 %v2827, %v2827
    %v3182 = vmul.f32 %v2828, %v2828
    %v3183 = vmul.f32 %v2829, %v2829
    %v3184 = vmul.f32 %v2830, %v2830
    %v3185 = vmul.f32 %v2831, %v2831
    %v3186 = vmul.f32 %v2832, %v2832
    %v3187 = vmul.f32 %v2833, %v2833
    %v3188 = vmul.f32 %v2834, %v2834
    %v3189 = vmul.f32 %v2835, %v2835
    %v3190 = vmul.f32 %v2836, %v2836
    %v3191 = vmul.f32 %v2837, %v2837
    %v3193 = vsel %vm2838, %v3160, 0
    %v3196 = vsel %vm2838, %v3161, 0
    %v3199 = vsel %vm2838, %v3162, 0
    %v3202 = vsel %vm2838, %v3163, 0
    %v3205 = vsel %vm2838, %v3164, 0
    %v3208 = vsel %vm2838, %v3165, 0
    %v3211 = vsel %vm2838, %v3166, 0
    %v3214 = vsel %vm2838, %v3167, 0
    %v3217 = vsel %vm2838, %v3168, 0
    %v3220 = vsel %vm2838, %v3169, 0
    %v3223 = vsel %vm2838, %v3170, 0
    %v3226 = vsel %vm2838, %v3171, 0
    %v3229 = vsel %vm2838, %v3172, 0
    %v3232 = vsel %vm2838, %v3173, 0
    %v3235 = vsel %vm2838, %v3174, 0
    %v3238 = vsel %vm2838, %v3175, 0
    %v3241 = vsel %vm2838, %v3176, 0
    %v3244 = vsel %vm2838, %v3177, 0
    %v3247 = vsel %vm2838, %v3178, 0
    %v3250 = vsel %vm2838, %v3179, 0
    %v3253 = vsel %vm2838, %v3180, 0
    %v3256 = vsel %vm2838, %v3181, 0
    %v3259 = vsel %vm2838, %v3182, 0
    %v3262 = vsel %vm2838, %v3183, 0
    %v3265 = vsel %vm2838, %v3184, 0
    %v3268 = vsel %vm2838, %v3185, 0
    %v3271 = vsel %vm2838, %v3186, 0
    %v3274 = vsel %vm2838, %v3187, 0
    %v3277 = vsel %vm2838, %v3188, 0
    %v3280 = vsel %vm2838, %v3189, 0
    %v3283 = vsel %vm2838, %v3190, 0
    %v3286 = vsel %vm2838, %v3191, 0
    %3288 = vmatprep.subr.mxu0 0.0
    %3289 = vmatpush1.msra.mxu0 1.0
    %3290 = vmatprep.subr.mxu0 0.0
    %3291 = vmatpush1.msra.mxu0 1.0
    %3292 = vmatprep.subr.mxu0 0.0
    %3293 = vmatpush1.msra.mxu0 1.0
    %3294 = vmatprep.subr.mxu0 0.0
    %3295 = vmatpush1.msra.mxu0 1.0
    %3296 = vmatprep.subr.mxu0 0.0
    %3297 = vmatpush1.msra.mxu0 1.0
    %3298 = vmatprep.subr.mxu0 0.0
    %3299 = vmatpush1.msra.mxu0 1.0
    %3300 = vmatprep.subr.mxu0 0.0
    %3301 = vmatpush1.msra.mxu0 1.0
    %3302 = vmatprep.subr.mxu0 0.0
    %3303 = vmatpush1.msra.mxu0 1.0
    %3304 = vmatprep.subr.mxu0 0.0
    %3305 = vmatpush1.msra.mxu0 0.0
    %3306 = vmatprep.subr.mxu0 0.0
    %3307 = vmatpush1.msra.mxu0 0.0
    %3308 = vmatprep.subr.mxu0 0.0
    %3309 = vmatpush1.msra.mxu0 0.0
    %3310 = vmatprep.subr.mxu0 0.0
    %3311 = vmatpush1.msra.mxu0 0.0
    %3312 = vmatprep.subr.mxu0 0.0
    %3313 = vmatpush1.msra.mxu0 0.0
    %3314 = vmatprep.subr.mxu0 0.0
    %3315 = vmatpush1.msra.mxu0 0.0
    %3316 = vmatprep.subr.mxu0 0.0
    %3317 = vmatpush1.msra.mxu0 0.0
    %3318 = vmatprep.subr.mxu0 0.0
    %3319 = vmatpush1.msra.mxu0 0.0
    %3320 = vmatprep.subr.mxu0 0.0
    %3321 = vmatpush1.msra.mxu0 0.0
    %3322 = vmatprep.subr.mxu0 0.0
    %3323 = vmatpush1.msra.mxu0 0.0
    %3324 = vmatprep.subr.mxu0 0.0
    %3325 = vmatpush1.msra.mxu0 0.0
    %3326 = vmatprep.subr.mxu0 0.0
    %3327 = vmatpush1.msra.mxu0 0.0
    %3328 = vmatprep.subr.mxu0 0.0
    %3329 = vmatpush1.msra.mxu0 0.0
    %3330 = vmatprep.subr.mxu0 0.0
    %3331 = vmatpush1.msra.mxu0 0.0
    %3332 = vmatprep.subr.mxu0 0.0
    %3333 = vmatpush1.msra.mxu0 0.0
    %3334 = vmatprep.subr.mxu0 0.0
    %3335 = vmatpush1.msra.mxu0 0.0
    %3336 = vmatprep.subr.mxu0 0.0
    %3337 = vmatpush1.msra.mxu0 0.0
    %3338 = vmatprep.subr.mxu0 0.0
    %3339 = vmatpush1.msra.mxu0 0.0
    %3340 = vmatprep.subr.mxu0 0.0
    %3341 = vmatpush1.msra.mxu0 0.0
    %3342 = vmatprep.subr.mxu0 0.0
    %3343 = vmatpush1.msra.mxu0 0.0
    %3344 = vmatprep.subr.mxu0 0.0
    %3345 = vmatpush1.msra.mxu0 0.0
    %3346 = vmatprep.subr.mxu0 0.0
    %3347 = vmatpush1.msra.mxu0 0.0
    %3348 = vmatprep.subr.mxu0 0.0
    %3349 = vmatpush1.msra.mxu0 0.0
    %3350 = vmatprep.subr.mxu0 0.0
    %3351 = vmatpush1.msra.mxu0 0.0
    %3352 = vmatprep.mubr.f32.mxu0 0.0
    %3353 = vmatmul.mubr.f32.gmra.mrb[0].mxu0 %v3193
    %v3354 = vpop.f32.mrb[0].mxu0
    %v3355 = vadd.f32 0.0, %v3354
    %v3356 = vpop.f32.mrb[0].mxu0
    %3357 = vmatprep.mubr.f32.mxu0 0.0
    %3358 = vmatmul.mubr.f32.gmra.mrb[0].mxu0 %v3196
    %v3359 = vpop.f32.mrb[0].mxu0
    %v3360 = vadd.f32 0.0, %v3359
    %v3361 = vpop.f32.mrb[0].mxu0
    %3362 = vmatprep.mubr.f32.mxu0 0.0
    %3363 = vmatmul.mubr.f32.gmra.mrb[0].mxu0 %v3199
    %v3364 = vpop.f32.mrb[0].mxu0
    %v3365 = vadd.f32 0.0, %v3364
    %v3366 = vpop.f32.mrb[0].mxu0
    %3367 = vmatprep.mubr.f32.mxu0 0.0
    %3368 = vmatmul.mubr.f32.gmra.mrb[0].mxu0 %v3202
    %v3369 = vpop.f32.mrb[0].mxu0
    %v3370 = vadd.f32 0.0, %v3369
    %v3371 = vpop.f32.mrb[0].mxu0
    %3372 = vmatprep.mubr.f32.mxu0 0.0
    %3373 = vmatmul.mubr.f32.gmra.mrb[0].mxu0 %v3205
    %v3374 = vpop.f32.mrb[0].mxu0
    %v3375 = vadd.f32 0.0, %v3374
    %v3376 = vpop.f32.mrb[0].mxu0
    %3377 = vmatprep.mubr.f32.mxu0 0.0
    %3378 = vmatmul.mubr.f32.gmra.mrb[0].mxu0 %v3208
    %v3379 = vpop.f32.mrb[0].mxu0
    %v3380 = vadd.f32 0.0, %v3379
    %v3381 = vpop.f32.mrb[0].mxu0
    %3382 = vmatprep.mubr.f32.mxu0 0.0
    %3383 = vmatmul.mubr.f32.gmra.mrb[0].mxu0 %v3211
    %v3384 = vpop.f32.mrb[0].mxu0
    %v3385 = vadd.f32 0.0, %v3384
    %v3386 = vpop.f32.mrb[0].mxu0
    %3387 = vmatprep.mubr.f32.mxu0 0.0
    %3388 = vmatmul.mubr.f32.gmra.mrb[0].mxu0 %v3214
    %v3389 = vpop.f32.mrb[0].mxu0
    %v3390 = vadd.f32 0.0, %v3389
    %v3391 = vpop.f32.mrb[0].mxu0
    %3392 = vmatprep.mubr.f32.mxu0 0.0
    %3393 = vmatmul.mubr.f32.gmra.mrb[0].mxu0 %v3217
    %v3394 = vpop.f32.mrb[0].mxu0
    %v3395 = vadd.f32 0.0, %v3394
    %v3396 = vpop.f32.mrb[0].mxu0
    %3397 = vmatprep.mubr.f32.mxu0 0.0
    %3398 = vmatmul.mubr.f32.gmra.mrb[0].mxu0 %v3220
    %v3399 = vpop.f32.mrb[0].mxu0
    %v3400 = vadd.f32 0.0, %v3399
    %v3401 = vpop.f32.mrb[0].mxu0
    %3402 = vmatprep.mubr.f32.mxu0 0.0
    %3403 = vmatmul.mubr.f32.gmra.mrb[0].mxu0 %v3223
    %v3404 = vpop.f32.mrb[0].mxu0
    %v3405 = vadd.f32 0.0, %v3404
    %v3406 = vpop.f32.mrb[0].mxu0
    %3407 = vmatprep.mubr.f32.mxu0 0.0
    %3408 = vmatmul.mubr.f32.gmra.mrb[0].mxu0 %v3226
    %v3409 = vpop.f32.mrb[0].mxu0
    %v3410 = vadd.f32 0.0, %v3409
    %v3411 = vpop.f32.mrb[0].mxu0
    %3412 = vmatprep.mubr.f32.mxu0 0.0
    %3413 = vmatmul.mubr.f32.gmra.mrb[0].mxu0 %v3229
    %v3414 = vpop.f32.mrb[0].mxu0
    %v3415 = vadd.f32 0.0, %v3414
    %v3416 = vpop.f32.mrb[0].mxu0
    %3417 = vmatprep.mubr.f32.mxu0 0.0
    %3418 = vmatmul.mubr.f32.gmra.mrb[0].mxu0 %v3232
    %v3419 = vpop.f32.mrb[0].mxu0
    %v3420 = vadd.f32 0.0, %v3419
    %v3421 = vpop.f32.mrb[0].mxu0
    %3422 = vmatprep.mubr.f32.mxu0 0.0
    %3423 = vmatmul.mubr.f32.gmra.mrb[0].mxu0 %v3235
    %v3424 = vpop.f32.mrb[0].mxu0
    %v3425 = vadd.f32 0.0, %v3424
    %v3426 = vpop.f32.mrb[0].mxu0
    %3427 = vmatprep.mubr.f32.mxu0 0.0
    %3428 = vmatmul.mubr.f32.gmra.mrb[0].mxu0 %v3238
    %v3429 = vpop.f32.mrb[0].mxu0
    %v3430 = vadd.f32 0.0, %v3429
    %v3431 = vpop.f32.mrb[0].mxu0
    %3432 = vmatprep.mubr.f32.mxu0 0.0
    %3433 = vmatmul.mubr.f32.gmra.mrb[0].mxu0 %v3241
    %v3434 = vpop.f32.mrb[0].mxu0
    %v3435 = vadd.f32 0.0, %v3434
    %v3436 = vpop.f32.mrb[0].mxu0
    %3437 = vmatprep.mubr.f32.mxu0 0.0
    %3438 = vmatmul.mubr.f32.gmra.mrb[0].mxu0 %v3244
    %v3439 = vpop.f32.mrb[0].mxu0
    %v3440 = vadd.f32 0.0, %v3439
    %v3441 = vpop.f32.mrb[0].mxu0
    %3442 = vmatprep.mubr.f32.mxu0 0.0
    %3443 = vmatmul.mubr.f32.gmra.mrb[0].mxu0 %v3247
    %v3444 = vpop.f32.mrb[0].mxu0
    %v3445 = vadd.f32 0.0, %v3444
    %v3446 = vpop.f32.mrb[0].mxu0
    %3447 = vmatprep.mubr.f32.mxu0 0.0
    %3448 = vmatmul.mubr.f32.gmra.mrb[0].mxu0 %v3250
    %v3449 = vpop.f32.mrb[0].mxu0
    %v3450 = vadd.f32 0.0, %v3449
    %v3451 = vpop.f32.mrb[0].mxu0
    %3452 = vmatprep.mubr.f32.mxu0 0.0
    %3453 = vmatmul.mubr.f32.gmra.mrb[0].mxu0 %v3253
    %v3454 = vpop.f32.mrb[0].mxu0
    %v3455 = vadd.f32 0.0, %v3454
    %v3456 = vpop.f32.mrb[0].mxu0
    %3457 = vmatprep.mubr.f32.mxu0 0.0
    %3458 = vmatmul.mubr.f32.gmra.mrb[0].mxu0 %v3256
    %v3459 = vpop.f32.mrb[0].mxu0
    %v3460 = vadd.f32 0.0, %v3459
    %v3461 = vpop.f32.mrb[0].mxu0
    %3462 = vmatprep.mubr.f32.mxu0 0.0
    %3463 = vmatmul.mubr.f32.gmra.mrb[0].mxu0 %v3259
    %v3464 = vpop.f32.mrb[0].mxu0
    %v3465 = vadd.f32 0.0, %v3464
    %v3466 = vpop.f32.mrb[0].mxu0
    %3467 = vmatprep.mubr.f32.mxu0 0.0
    %3468 = vmatmul.mubr.f32.gmra.mrb[0].mxu0 %v3262
    %v3469 = vpop.f32.mrb[0].mxu0
    %v3470 = vadd.f32 0.0, %v3469
    %v3471 = vpop.f32.mrb[0].mxu0
    %3472 = vmatprep.mubr.f32.mxu0 0.0
    %3473 = vmatmul.mubr.f32.gmra.mrb[0].mxu0 %v3265
    %v3474 = vpop.f32.mrb[0].mxu0
    %v3475 = vadd.f32 0.0, %v3474
    %v3476 = vpop.f32.mrb[0].mxu0
    %3477 = vmatprep.mubr.f32.mxu0 0.0
    %3478 = vmatmul.mubr.f32.gmra.mrb[0].mxu0 %v3268
    %v3479 = vpop.f32.mrb[0].mxu0
    %v3480 = vadd.f32 0.0, %v3479
    %v3481 = vpop.f32.mrb[0].mxu0
    %3482 = vmatprep.mubr.f32.mxu0 0.0
    %3483 = vmatmul.mubr.f32.gmra.mrb[0].mxu0 %v3271
    %v3484 = vpop.f32.mrb[0].mxu0
    %v3485 = vadd.f32 0.0, %v3484
    %v3486 = vpop.f32.mrb[0].mxu0
    %3487 = vmatprep.mubr.f32.mxu0 0.0
    %3488 = vmatmul.mubr.f32.gmra.mrb[0].mxu0 %v3274
    %v3489 = vpop.f32.mrb[0].mxu0
    %v3490 = vadd.f32 0.0, %v3489
    %v3491 = vpop.f32.mrb[0].mxu0
    %3492 = vmatprep.mubr.f32.mxu0 0.0
    %3493 = vmatmul.mubr.f32.gmra.mrb[0].mxu0 %v3277
    %v3494 = vpop.f32.mrb[0].mxu0
    %v3495 = vadd.f32 0.0, %v3494
    %v3496 = vpop.f32.mrb[0].mxu0
    %3497 = vmatprep.mubr.f32.mxu0 0.0
    %3498 = vmatmul.mubr.f32.gmra.mrb[0].mxu0 %v3280
    %v3499 = vpop.f32.mrb[0].mxu0
    %v3500 = vadd.f32 0.0, %v3499
    %v3501 = vpop.f32.mrb[0].mxu0
    %3502 = vmatprep.mubr.f32.mxu0 0.0
    %3503 = vmatmul.mubr.f32.gmra.mrb[0].mxu0 %v3283
    %v3504 = vpop.f32.mrb[0].mxu0
    %v3505 = vadd.f32 0.0, %v3504
    %v3506 = vpop.f32.mrb[0].mxu0
    %3507 = vmatprep.mubr.f32.mxu0 0.0
    %3508 = vmatmul.mubr.f32.gmra.mrb[0].mxu0 %v3286
    %v3509 = vpop.f32.mrb[0].mxu0
    %v3510 = vadd.f32 0.0, %v3509
    %v3511 = vpop.f32.mrb[0].mxu0
    %3512 = vdwg.mxu0
    %v3513 = vmul.f32 %v3002, 0.015625
    %v3514 = vmul.f32 %v3007, 0.015625
    %v3515 = vmul.f32 %v3012, 0.015625
    %v3516 = vmul.f32 %v3017, 0.015625
    %v3517 = vmul.f32 %v3022, 0.015625
    %v3518 = vmul.f32 %v3027, 0.015625
    %v3519 = vmul.f32 %v3032, 0.015625
    %v3520 = vmul.f32 %v3037, 0.015625
    %v3521 = vmul.f32 %v3042, 0.015625
    %v3522 = vmul.f32 %v3047, 0.015625
    %v3523 = vmul.f32 %v3052, 0.015625
    %v3524 = vmul.f32 %v3057, 0.015625
    %v3525 = vmul.f32 %v3062, 0.015625
    %v3526 = vmul.f32 %v3067, 0.015625
    %v3527 = vmul.f32 %v3072, 0.015625
    %v3528 = vmul.f32 %v3077, 0.015625
    %v3529 = vmul.f32 %v3082, 0.015625
    %v3530 = vmul.f32 %v3087, 0.015625
    %v3531 = vmul.f32 %v3092, 0.015625
    %v3532 = vmul.f32 %v3097, 0.015625
    %v3533 = vmul.f32 %v3102, 0.015625
    %v3534 = vmul.f32 %v3107, 0.015625
    %v3535 = vmul.f32 %v3112, 0.015625
    %v3536 = vmul.f32 %v3117, 0.015625
    %v3537 = vmul.f32 %v3122, 0.015625
    %v3538 = vmul.f32 %v3127, 0.015625
    %v3539 = vmul.f32 %v3132, 0.015625
    %v3540 = vmul.f32 %v3137, 0.015625
    %v3541 = vmul.f32 %v3142, 0.015625
    %v3542 = vmul.f32 %v3147, 0.015625
    %v3543 = vmul.f32 %v3152, 0.015625
    %v3544 = vmul.f32 %v3157, 0.015625
    %v3545 = vmul.f32 %v3355, 0.015625
    %v3546 = vmul.f32 %v3360, 0.015625
    %v3547 = vmul.f32 %v3365, 0.015625
    %v3548 = vmul.f32 %v3370, 0.015625
    %v3549 = vmul.f32 %v3375, 0.015625
    %v3550 = vmul.f32 %v3380, 0.015625
    %v3551 = vmul.f32 %v3385, 0.015625
    %v3552 = vmul.f32 %v3390, 0.015625
    %v3553 = vmul.f32 %v3395, 0.015625
    %v3554 = vmul.f32 %v3400, 0.015625
    %v3555 = vmul.f32 %v3405, 0.015625
    %v3556 = vmul.f32 %v3410, 0.015625
    %v3557 = vmul.f32 %v3415, 0.015625
    %v3558 = vmul.f32 %v3420, 0.015625
    %v3559 = vmul.f32 %v3425, 0.015625
    %v3560 = vmul.f32 %v3430, 0.015625
    %v3561 = vmul.f32 %v3435, 0.015625
    %v3562 = vmul.f32 %v3440, 0.015625
    %v3563 = vmul.f32 %v3445, 0.015625
    %v3564 = vmul.f32 %v3450, 0.015625
    %v3565 = vmul.f32 %v3455, 0.015625
    %v3566 = vmul.f32 %v3460, 0.015625
    %v3567 = vmul.f32 %v3465, 0.015625
    %v3568 = vmul.f32 %v3470, 0.015625
    %v3569 = vmul.f32 %v3475, 0.015625
    %v3570 = vmul.f32 %v3480, 0.015625
    %v3571 = vmul.f32 %v3485, 0.015625
    %v3572 = vmul.f32 %v3490, 0.015625
    %v3573 = vmul.f32 %v3495, 0.015625
    %v3574 = vmul.f32 %v3500, 0.015625
    %v3575 = vmul.f32 %v3505, 0.015625
    %v3576 = vmul.f32 %v3510, 0.015625
    %v3577 = vmul.f32 %v3513, %v3513
    %v3578 = vmul.f32 %v3514, %v3514
    %v3579 = vmul.f32 %v3515, %v3515
    %v3580 = vmul.f32 %v3516, %v3516
    %v3581 = vmul.f32 %v3517, %v3517
    %v3582 = vmul.f32 %v3518, %v3518
    %v3583 = vmul.f32 %v3519, %v3519
    %v3584 = vmul.f32 %v3520, %v3520
    %v3585 = vmul.f32 %v3521, %v3521
    %v3586 = vmul.f32 %v3522, %v3522
    %v3587 = vmul.f32 %v3523, %v3523
    %v3588 = vmul.f32 %v3524, %v3524
    %v3589 = vmul.f32 %v3525, %v3525
    %v3590 = vmul.f32 %v3526, %v3526
    %v3591 = vmul.f32 %v3527, %v3527
    %v3592 = vmul.f32 %v3528, %v3528
    %v3593 = vmul.f32 %v3529, %v3529
    %v3594 = vmul.f32 %v3530, %v3530
    %v3595 = vmul.f32 %v3531, %v3531
    %v3596 = vmul.f32 %v3532, %v3532
    %v3597 = vmul.f32 %v3533, %v3533
    %v3598 = vmul.f32 %v3534, %v3534
    %v3599 = vmul.f32 %v3535, %v3535
    %v3600 = vmul.f32 %v3536, %v3536
    %v3601 = vmul.f32 %v3537, %v3537
    %v3602 = vmul.f32 %v3538, %v3538
    %v3603 = vmul.f32 %v3539, %v3539
    %v3604 = vmul.f32 %v3540, %v3540
    %v3605 = vmul.f32 %v3541, %v3541
    %v3606 = vmul.f32 %v3542, %v3542
    %v3607 = vmul.f32 %v3543, %v3543
    %v3608 = vmul.f32 %v3544, %v3544
    %v3609 = vsub.f32 %v3545, %v3577
    %v3610 = vsub.f32 %v3546, %v3578
    %v3611 = vsub.f32 %v3547, %v3579
    %v3612 = vsub.f32 %v3548, %v3580
    %v3613 = vsub.f32 %v3549, %v3581
    %v3614 = vsub.f32 %v3550, %v3582
    %v3615 = vsub.f32 %v3551, %v3583
    %v3616 = vsub.f32 %v3552, %v3584
    %v3617 = vsub.f32 %v3553, %v3585
    %v3618 = vsub.f32 %v3554, %v3586
    %v3619 = vsub.f32 %v3555, %v3587
    %v3620 = vsub.f32 %v3556, %v3588
    %v3621 = vsub.f32 %v3557, %v3589
    %v3622 = vsub.f32 %v3558, %v3590
    %v3623 = vsub.f32 %v3559, %v3591
    %v3624 = vsub.f32 %v3560, %v3592
    %v3625 = vsub.f32 %v3561, %v3593
    %v3626 = vsub.f32 %v3562, %v3594
    %v3627 = vsub.f32 %v3563, %v3595
    %v3628 = vsub.f32 %v3564, %v3596
    %v3629 = vsub.f32 %v3565, %v3597
    %v3630 = vsub.f32 %v3566, %v3598
    %v3631 = vsub.f32 %v3567, %v3599
    %v3632 = vsub.f32 %v3568, %v3600
    %v3633 = vsub.f32 %v3569, %v3601
    %v3634 = vsub.f32 %v3570, %v3602
    %v3635 = vsub.f32 %v3571, %v3603
    %v3636 = vsub.f32 %v3572, %v3604
    %v3637 = vsub.f32 %v3573, %v3605
    %v3638 = vsub.f32 %v3574, %v3606
    %v3639 = vsub.f32 %v3575, %v3607
    %v3640 = vsub.f32 %v3576, %v3608
    %v3641 = vmax.f32 %v3609, 0.0
    %v3642 = vmax.f32 %v3610, 0.0
    %v3643 = vmax.f32 %v3611, 0.0
    %v3644 = vmax.f32 %v3612, 0.0
    %v3645 = vmax.f32 %v3613, 0.0
    %v3646 = vmax.f32 %v3614, 0.0
    %v3647 = vmax.f32 %v3615, 0.0
    %v3648 = vmax.f32 %v3616, 0.0
    %v3649 = vmax.f32 %v3617, 0.0
    %v3650 = vmax.f32 %v3618, 0.0
    %v3651 = vmax.f32 %v3619, 0.0
    %v3652 = vmax.f32 %v3620, 0.0
    %v3653 = vmax.f32 %v3621, 0.0
    %v3654 = vmax.f32 %v3622, 0.0
    %v3655 = vmax.f32 %v3623, 0.0
    %v3656 = vmax.f32 %v3624, 0.0
    %v3657 = vmax.f32 %v3625, 0.0
    %v3658 = vmax.f32 %v3626, 0.0
    %v3659 = vmax.f32 %v3627, 0.0
    %v3660 = vmax.f32 %v3628, 0.0
    %v3661 = vmax.f32 %v3629, 0.0
    %v3662 = vmax.f32 %v3630, 0.0
    %v3663 = vmax.f32 %v3631, 0.0
    %v3664 = vmax.f32 %v3632, 0.0
    %v3665 = vmax.f32 %v3633, 0.0
    %v3666 = vmax.f32 %v3634, 0.0
    %v3667 = vmax.f32 %v3635, 0.0
    %v3668 = vmax.f32 %v3636, 0.0
    %v3669 = vmax.f32 %v3637, 0.0
    %v3670 = vmax.f32 %v3638, 0.0
    %v3671 = vmax.f32 %v3639, 0.0
    %v3672 = vmax.f32 %v3640, 0.0
    %3674 = vset.pattern.permute.xlu0 0
    %3675 = vperm.xlu0 %3674, %v3513
    %v3676 = vpop.permute.xlu0 %3675
    %3679 = vset.pattern.permute.xlu0 0
    %3680 = vperm.xlu0 %3679, %v3514
    %v3681 = vpop.permute.xlu0 %3680
    %3684 = vset.pattern.permute.xlu0 0
    %3685 = vperm.xlu0 %3684, %v3515
    %v3686 = vpop.permute.xlu0 %3685
    %3689 = vset.pattern.permute.xlu0 0
    %3690 = vperm.xlu0 %3689, %v3516
    %v3691 = vpop.permute.xlu0 %3690
    %3694 = vset.pattern.permute.xlu0 0
    %3695 = vperm.xlu0 %3694, %v3517
    %v3696 = vpop.permute.xlu0 %3695
    %3699 = vset.pattern.permute.xlu0 0
    %3700 = vperm.xlu0 %3699, %v3518
    %v3701 = vpop.permute.xlu0 %3700
    %3704 = vset.pattern.permute.xlu0 0
    %3705 = vperm.xlu0 %3704, %v3519
    %v3706 = vpop.permute.xlu0 %3705
    %3709 = vset.pattern.permute.xlu0 0
    %3710 = vperm.xlu0 %3709, %v3520
    %v3711 = vpop.permute.xlu0 %3710
    %3714 = vset.pattern.permute.xlu0 0
    %3715 = vperm.xlu0 %3714, %v3521
    %v3716 = vpop.permute.xlu0 %3715
    %3719 = vset.pattern.permute.xlu0 0
    %3720 = vperm.xlu0 %3719, %v3522
    %v3721 = vpop.permute.xlu0 %3720
    %3724 = vset.pattern.permute.xlu0 0
    %3725 = vperm.xlu0 %3724, %v3523
    %v3726 = vpop.permute.xlu0 %3725
    %3729 = vset.pattern.permute.xlu0 0
    %3730 = vperm.xlu0 %3729, %v3524
    %v3731 = vpop.permute.xlu0 %3730
    %3734 = vset.pattern.permute.xlu0 0
    %3735 = vperm.xlu0 %3734, %v3525
    %v3736 = vpop.permute.xlu0 %3735
    %3739 = vset.pattern.permute.xlu0 0
    %3740 = vperm.xlu0 %3739, %v3526
    %v3741 = vpop.permute.xlu0 %3740
    %3744 = vset.pattern.permute.xlu0 0
    %3745 = vperm.xlu0 %3744, %v3527
    %v3746 = vpop.permute.xlu0 %3745
    %3749 = vset.pattern.permute.xlu0 0
    %3750 = vperm.xlu0 %3749, %v3528
    %v3751 = vpop.permute.xlu0 %3750
    %3754 = vset.pattern.permute.xlu0 0
    %3755 = vperm.xlu0 %3754, %v3529
    %v3756 = vpop.permute.xlu0 %3755
    %3759 = vset.pattern.permute.xlu0 0
    %3760 = vperm.xlu0 %3759, %v3530
    %v3761 = vpop.permute.xlu0 %3760
    %3764 = vset.pattern.permute.xlu0 0
    %3765 = vperm.xlu0 %3764, %v3531
    %v3766 = vpop.permute.xlu0 %3765
    %3769 = vset.pattern.permute.xlu0 0
    %3770 = vperm.xlu0 %3769, %v3532
    %v3771 = vpop.permute.xlu0 %3770
    %3774 = vset.pattern.permute.xlu0 0
    %3775 = vperm.xlu0 %3774, %v3533
    %v3776 = vpop.permute.xlu0 %3775
    %3779 = vset.pattern.permute.xlu0 0
    %3780 = vperm.xlu0 %3779, %v3534
    %v3781 = vpop.permute.xlu0 %3780
    %3784 = vset.pattern.permute.xlu0 0
    %3785 = vperm.xlu0 %3784, %v3535
    %v3786 = vpop.permute.xlu0 %3785
    %3789 = vset.pattern.permute.xlu0 0
    %3790 = vperm.xlu0 %3789, %v3536
    %v3791 = vpop.permute.xlu0 %3790
    %3794 = vset.pattern.permute.xlu0 0
    %3795 = vperm.xlu0 %3794, %v3537
    %v3796 = vpop.permute.xlu0 %3795
    %3799 = vset.pattern.permute.xlu0 0
    %3800 = vperm.xlu0 %3799, %v3538
    %v3801 = vpop.permute.xlu0 %3800
    %3804 = vset.pattern.permute.xlu0 0
    %3805 = vperm.xlu0 %3804, %v3539
    %v3806 = vpop.permute.xlu0 %3805
    %3809 = vset.pattern.permute.xlu0 0
    %3810 = vperm.xlu0 %3809, %v3540
    %v3811 = vpop.permute.xlu0 %3810
    %3814 = vset.pattern.permute.xlu0 0
    %3815 = vperm.xlu0 %3814, %v3541
    %v3816 = vpop.permute.xlu0 %3815
    %3819 = vset.pattern.permute.xlu0 0
    %3820 = vperm.xlu0 %3819, %v3542
    %v3821 = vpop.permute.xlu0 %3820
    %3824 = vset.pattern.permute.xlu0 0
    %3825 = vperm.xlu0 %3824, %v3543
    %v3826 = vpop.permute.xlu0 %3825
    %3829 = vset.pattern.permute.xlu0 0
    %3830 = vperm.xlu0 %3829, %v3544
    %v3831 = vpop.permute.xlu0 %3830
    %v3833 = vsub.f32 %v2806, %v3676
    %v3834 = vsub.f32 %v2807, %v3681
    %v3835 = vsub.f32 %v2808, %v3686
    %v3836 = vsub.f32 %v2809, %v3691
    %v3837 = vsub.f32 %v2810, %v3696
    %v3838 = vsub.f32 %v2811, %v3701
    %v3839 = vsub.f32 %v2812, %v3706
    %v3840 = vsub.f32 %v2813, %v3711
    %v3841 = vsub.f32 %v2814, %v3716
    %v3842 = vsub.f32 %v2815, %v3721
    %v3843 = vsub.f32 %v2816, %v3726
    %v3844 = vsub.f32 %v2817, %v3731
    %v3845 = vsub.f32 %v2818, %v3736
    %v3846 = vsub.f32 %v2819, %v3741
    %v3847 = vsub.f32 %v2820, %v3746
    %v3848 = vsub.f32 %v2821, %v3751
    %v3849 = vsub.f32 %v2822, %v3756
    %v3850 = vsub.f32 %v2823, %v3761
    %v3851 = vsub.f32 %v2824, %v3766
    %v3852 = vsub.f32 %v2825, %v3771
    %v3853 = vsub.f32 %v2826, %v3776
    %v3854 = vsub.f32 %v2827, %v3781
    %v3855 = vsub.f32 %v2828, %v3786
    %v3856 = vsub.f32 %v2829, %v3791
    %v3857 = vsub.f32 %v2830, %v3796
    %v3858 = vsub.f32 %v2831, %v3801
    %v3859 = vsub.f32 %v2832, %v3806
    %v3860 = vsub.f32 %v2833, %v3811
    %v3861 = vsub.f32 %v2834, %v3816
    %v3862 = vsub.f32 %v2835, %v3821
    %v3863 = vsub.f32 %v2836, %v3826
    %v3864 = vsub.f32 %v2837, %v3831
    %v3865 = vadd.f32 %v3641, 1e-05
    %v3866 = vadd.f32 %v3642, 1e-05
    %v3867 = vadd.f32 %v3643, 1e-05
    %v3868 = vadd.f32 %v3644, 1e-05
    %v3869 = vadd.f32 %v3645, 1e-05
    %v3870 = vadd.f32 %v3646, 1e-05
    %v3871 = vadd.f32 %v3647, 1e-05
    %v3872 = vadd.f32 %v3648, 1e-05
    %v3873 = vadd.f32 %v3649, 1e-05
    %v3874 = vadd.f32 %v3650, 1e-05
    %v3875 = vadd.f32 %v3651, 1e-05
    %v3876 = vadd.f32 %v3652, 1e-05
    %v3877 = vadd.f32 %v3653, 1e-05
    %v3878 = vadd.f32 %v3654, 1e-05
    %v3879 = vadd.f32 %v3655, 1e-05
    %v3880 = vadd.f32 %v3656, 1e-05
    %v3881 = vadd.f32 %v3657, 1e-05
    %v3882 = vadd.f32 %v3658, 1e-05
    %v3883 = vadd.f32 %v3659, 1e-05
    %v3884 = vadd.f32 %v3660, 1e-05
    %v3885 = vadd.f32 %v3661, 1e-05
    %v3886 = vadd.f32 %v3662, 1e-05
    %v3887 = vadd.f32 %v3663, 1e-05
    %v3888 = vadd.f32 %v3664, 1e-05
    %v3889 = vadd.f32 %v3665, 1e-05
    %v3890 = vadd.f32 %v3666, 1e-05
    %v3891 = vadd.f32 %v3667, 1e-05
    %v3892 = vadd.f32 %v3668, 1e-05
    %v3893 = vadd.f32 %v3669, 1e-05
    %v3894 = vadd.f32 %v3670, 1e-05
    %v3895 = vadd.f32 %v3671, 1e-05
    %v3896 = vadd.f32 %v3672, 1e-05
    %v3897 = vrsqrt.pop %v3865
    %v3898 = vrsqrt.pop %v3866
    %v3899 = vrsqrt.pop %v3867
    %v3900 = vrsqrt.pop %v3868
    %v3901 = vrsqrt.pop %v3869
    %v3902 = vrsqrt.pop %v3870
    %v3903 = vrsqrt.pop %v3871
    %v3904 = vrsqrt.pop %v3872
    %v3905 = vrsqrt.pop %v3873
    %v3906 = vrsqrt.pop %v3874
    %v3907 = vrsqrt.pop %v3875
    %v3908 = vrsqrt.pop %v3876
    %v3909 = vrsqrt.pop %v3877
    %v3910 = vrsqrt.pop %v3878
    %v3911 = vrsqrt.pop %v3879
    %v3912 = vrsqrt.pop %v3880
    %v3913 = vrsqrt.pop %v3881
    %v3914 = vrsqrt.pop %v3882
    %v3915 = vrsqrt.pop %v3883
    %v3916 = vrsqrt.pop %v3884
    %v3917 = vrsqrt.pop %v3885
    %v3918 = vrsqrt.pop %v3886
    %v3919 = vrsqrt.pop %v3887
    %v3920 = vrsqrt.pop %v3888
    %v3921 = vrsqrt.pop %v3889
    %v3922 = vrsqrt.pop %v3890
    %v3923 = vrsqrt.pop %v3891
    %v3924 = vrsqrt.pop %v3892
    %v3925 = vrsqrt.pop %v3893
    %v3926 = vrsqrt.pop %v3894
    %v3927 = vrsqrt.pop %v3895
    %v3928 = vrsqrt.pop %v3896
    %3930 = vset.pattern.permute.xlu0 0
    %3931 = vperm.xlu0 %3930, %v3897
    %v3932 = vpop.permute.xlu0 %3931
    %3935 = vset.pattern.permute.xlu0 0
    %3936 = vperm.xlu0 %3935, %v3898
    %v3937 = vpop.permute.xlu0 %3936
    %3940 = vset.pattern.permute.xlu0 0
    %3941 = vperm.xlu0 %3940, %v3899
    %v3942 = vpop.permute.xlu0 %3941
    %3945 = vset.pattern.permute.xlu0 0
    %3946 = vperm.xlu0 %3945, %v3900
    %v3947 = vpop.permute.xlu0 %3946
    %3950 = vset.pattern.permute.xlu0 0
    %3951 = vperm.xlu0 %3950, %v3901
    %v3952 = vpop.permute.xlu0 %3951
    %3955 = vset.pattern.permute.xlu0 0
    %3956 = vperm.xlu0 %3955, %v3902
    %v3957 = vpop.permute.xlu0 %3956
    %3960 = vset.pattern.permute.xlu0 0
    %3961 = vperm.xlu0 %3960, %v3903
    %v3962 = vpop.permute.xlu0 %3961
    %3965 = vset.pattern.permute.xlu0 0
    %3966 = vperm.xlu0 %3965, %v3904
    %v3967 = vpop.permute.xlu0 %3966
    %3970 = vset.pattern.permute.xlu0 0
    %3971 = vperm.xlu0 %3970, %v3905
    %v3972 = vpop.permute.xlu0 %3971
    %3975 = vset.pattern.permute.xlu0 0
    %3976 = vperm.xlu0 %3975, %v3906
    %v3977 = vpop.permute.xlu0 %3976
    %3980 = vset.pattern.permute.xlu0 0
    %3981 = vperm.xlu0 %3980, %v3907
    %v3982 = vpop.permute.xlu0 %3981
    %3985 = vset.pattern.permute.xlu0 0
    %3986 = vperm.xlu0 %3985, %v3908
    %v3987 = vpop.permute.xlu0 %3986
    %3990 = vset.pattern.permute.xlu0 0
    %3991 = vperm.xlu0 %3990, %v3909
    %v3992 = vpop.permute.xlu0 %3991
    %3995 = vset.pattern.permute.xlu0 0
    %3996 = vperm.xlu0 %3995, %v3910
    %v3997 = vpop.permute.xlu0 %3996
    %4000 = vset.pattern.permute.xlu0 0
    %4001 = vperm.xlu0 %4000, %v3911
    %v4002 = vpop.permute.xlu0 %4001
    %4005 = vset.pattern.permute.xlu0 0
    %4006 = vperm.xlu0 %4005, %v3912
    %v4007 = vpop.permute.xlu0 %4006
    %4010 = vset.pattern.permute.xlu0 0
    %4011 = vperm.xlu0 %4010, %v3913
    %v4012 = vpop.permute.xlu0 %4011
    %4015 = vset.pattern.permute.xlu0 0
    %4016 = vperm.xlu0 %4015, %v3914
    %v4017 = vpop.permute.xlu0 %4016
    %4020 = vset.pattern.permute.xlu0 0
    %4021 = vperm.xlu0 %4020, %v3915
    %v4022 = vpop.permute.xlu0 %4021
    %4025 = vset.pattern.permute.xlu0 0
    %4026 = vperm.xlu0 %4025, %v3916
    %v4027 = vpop.permute.xlu0 %4026
    %4030 = vset.pattern.permute.xlu0 0
    %4031 = vperm.xlu0 %4030, %v3917
    %v4032 = vpop.permute.xlu0 %4031
    %4035 = vset.pattern.permute.xlu0 0
    %4036 = vperm.xlu0 %4035, %v3918
    %v4037 = vpop.permute.xlu0 %4036
    %4040 = vset.pattern.permute.xlu0 0
    %4041 = vperm.xlu0 %4040, %v3919
    %v4042 = vpop.permute.xlu0 %4041
    %4045 = vset.pattern.permute.xlu0 0
    %4046 = vperm.xlu0 %4045, %v3920
    %v4047 = vpop.permute.xlu0 %4046
    %4050 = vset.pattern.permute.xlu0 0
    %4051 = vperm.xlu0 %4050, %v3921
    %v4052 = vpop.permute.xlu0 %4051
    %4055 = vset.pattern.permute.xlu0 0
    %4056 = vperm.xlu0 %4055, %v3922
    %v4057 = vpop.permute.xlu0 %4056
    %4060 = vset.pattern.permute.xlu0 0
    %4061 = vperm.xlu0 %4060, %v3923
    %v4062 = vpop.permute.xlu0 %4061
    %4065 = vset.pattern.permute.xlu0 0
    %4066 = vperm.xlu0 %4065, %v3924
    %v4067 = vpop.permute.xlu0 %4066
    %4070 = vset.pattern.permute.xlu0 0
    %4071 = vperm.xlu0 %4070, %v3925
    %v4072 = vpop.permute.xlu0 %4071
    %4075 = vset.pattern.permute.xlu0 0
    %4076 = vperm.xlu0 %4075, %v3926
    %v4077 = vpop.permute.xlu0 %4076
    %4080 = vset.pattern.permute.xlu0 0
    %4081 = vperm.xlu0 %4080, %v3927
    %v4082 = vpop.permute.xlu0 %4081
    %4085 = vset.pattern.permute.xlu0 0
    %4086 = vperm.xlu0 %4085, %v3928
    %v4087 = vpop.permute.xlu0 %4086
    %v4089 = vmul.f32 %v3833, %v3932
    %v4090 = vmul.f32 %v3834, %v3937
    %v4091 = vmul.f32 %v3835, %v3942
    %v4092 = vmul.f32 %v3836, %v3947
    %v4093 = vmul.f32 %v3837, %v3952
    %v4094 = vmul.f32 %v3838, %v3957
    %v4095 = vmul.f32 %v3839, %v3962
    %v4096 = vmul.f32 %v3840, %v3967
    %v4097 = vmul.f32 %v3841, %v3972
    %v4098 = vmul.f32 %v3842, %v3977
    %v4099 = vmul.f32 %v3843, %v3982
    %v4100 = vmul.f32 %v3844, %v3987
    %v4101 = vmul.f32 %v3845, %v3992
    %v4102 = vmul.f32 %v3846, %v3997
    %v4103 = vmul.f32 %v3847, %v4002
    %v4104 = vmul.f32 %v3848, %v4007
    %v4105 = vmul.f32 %v3849, %v4012
    %v4106 = vmul.f32 %v3850, %v4017
    %v4107 = vmul.f32 %v3851, %v4022
    %v4108 = vmul.f32 %v3852, %v4027
    %v4109 = vmul.f32 %v3853, %v4032
    %v4110 = vmul.f32 %v3854, %v4037
    %v4111 = vmul.f32 %v3855, %v4042
    %v4112 = vmul.f32 %v3856, %v4047
    %v4113 = vmul.f32 %v3857, %v4052
    %v4114 = vmul.f32 %v3858, %v4057
    %v4115 = vmul.f32 %v3859, %v4062
    %v4116 = vmul.f32 %v3860, %v4067
    %v4117 = vmul.f32 %v3861, %v4072
    %v4118 = vmul.f32 %v3862, %v4077
    %v4119 = vmul.f32 %v3863, %v4082
    %v4120 = vmul.f32 %v3864, %v4087
    %v4121 = vld [vmem:[%s11] sm:$0x1]
    %v4123 = vlaneseq
    %v4124 = vshrl.u32 %v4123, 7
    %v4125 = vsub.s32 0, %v4124
    %v4126 = vrot.slane %v4121, %v4125
    %v4128 = vmul.f32 %v4089, %v4126
    %v4129 = vmul.f32 %v4090, %v4126
    %v4130 = vmul.f32 %v4091, %v4126
    %v4131 = vmul.f32 %v4092, %v4126
    %v4132 = vmul.f32 %v4093, %v4126
    %v4133 = vmul.f32 %v4094, %v4126
    %v4134 = vmul.f32 %v4095, %v4126
    %v4135 = vmul.f32 %v4096, %v4126
    %v4136 = vmul.f32 %v4097, %v4126
    %v4137 = vmul.f32 %v4098, %v4126
    %v4138 = vmul.f32 %v4099, %v4126
    %v4139 = vmul.f32 %v4100, %v4126
    %v4140 = vmul.f32 %v4101, %v4126
    %v4141 = vmul.f32 %v4102, %v4126
    %v4142 = vmul.f32 %v4103, %v4126
    %v4143 = vmul.f32 %v4104, %v4126
    %v4144 = vmul.f32 %v4105, %v4126
    %v4145 = vmul.f32 %v4106, %v4126
    %v4146 = vmul.f32 %v4107, %v4126
    %v4147 = vmul.f32 %v4108, %v4126
    %v4148 = vmul.f32 %v4109, %v4126
    %v4149 = vmul.f32 %v4110, %v4126
    %v4150 = vmul.f32 %v4111, %v4126
    %v4151 = vmul.f32 %v4112, %v4126
    %v4152 = vmul.f32 %v4113, %v4126
    %v4153 = vmul.f32 %v4114, %v4126
    %v4154 = vmul.f32 %v4115, %v4126
    %v4155 = vmul.f32 %v4116, %v4126
    %v4156 = vmul.f32 %v4117, %v4126
    %v4157 = vmul.f32 %v4118, %v4126
    %v4158 = vmul.f32 %v4119, %v4126
    %v4159 = vmul.f32 %v4120, %v4126
    %v4160 = vld [vmem:[%s12] sm:$0x1]
    %v4162 = vlaneseq
    %v4163 = vshrl.u32 %v4162, 7
    %v4164 = vsub.s32 0, %v4163
    %v4165 = vrot.slane %v4160, %v4164
    %v4167 = vadd.f32 %v4128, %v4165
    %v4168 = vadd.f32 %v4129, %v4165
    %v4169 = vadd.f32 %v4130, %v4165
    %v4170 = vadd.f32 %v4131, %v4165
    %v4171 = vadd.f32 %v4132, %v4165
    %v4172 = vadd.f32 %v4133, %v4165
    %v4173 = vadd.f32 %v4134, %v4165
    %v4174 = vadd.f32 %v4135, %v4165
    %v4175 = vadd.f32 %v4136, %v4165
    %v4176 = vadd.f32 %v4137, %v4165
    %v4177 = vadd.f32 %v4138, %v4165
    %v4178 = vadd.f32 %v4139, %v4165
    %v4179 = vadd.f32 %v4140, %v4165
    %v4180 = vadd.f32 %v4141, %v4165
    %v4181 = vadd.f32 %v4142, %v4165
    %v4182 = vadd.f32 %v4143, %v4165
    %v4183 = vadd.f32 %v4144, %v4165
    %v4184 = vadd.f32 %v4145, %v4165
    %v4185 = vadd.f32 %v4146, %v4165
    %v4186 = vadd.f32 %v4147, %v4165
    %v4187 = vadd.f32 %v4148, %v4165
    %v4188 = vadd.f32 %v4149, %v4165
    %v4189 = vadd.f32 %v4150, %v4165
    %v4190 = vadd.f32 %v4151, %v4165
    %v4191 = vadd.f32 %v4152, %v4165
    %v4192 = vadd.f32 %v4153, %v4165
    %v4193 = vadd.f32 %v4154, %v4165
    %v4194 = vadd.f32 %v4155, %v4165
    %v4195 = vadd.f32 %v4156, %v4165
    %v4196 = vadd.f32 %v4157, %v4165
    %v4197 = vadd.f32 %v4158, %v4165
    %v4198 = vadd.f32 %v4159, %v4165
    %v4199 = vpack.c.bf16 %v4168, %v4167
    %v4200 = vpack.c.bf16 %v4170, %v4169
    %v4201 = vpack.c.bf16 %v4172, %v4171
    %v4202 = vpack.c.bf16 %v4174, %v4173
    %v4203 = vpack.c.bf16 %v4176, %v4175
    %v4204 = vpack.c.bf16 %v4178, %v4177
    %v4205 = vpack.c.bf16 %v4180, %v4179
    %v4206 = vpack.c.bf16 %v4182, %v4181
    %v4207 = vpack.c.bf16 %v4184, %v4183
    %v4208 = vpack.c.bf16 %v4186, %v4185
    %v4209 = vpack.c.bf16 %v4188, %v4187
    %v4210 = vpack.c.bf16 %v4190, %v4189
    %v4211 = vpack.c.bf16 %v4192, %v4191
    %v4212 = vpack.c.bf16 %v4194, %v4193
    %v4213 = vpack.c.bf16 %v4196, %v4195
    %v4214 = vpack.c.bf16 %v4198, %v4197
    %v4231 = vunpack.c.l.b16 %v4199
    %v4232 = vunpack.c.h.b16 %v4199
    %v4233 = vunpack.c.l.b16 %v4200
    %v4234 = vunpack.c.h.b16 %v4200
    %v4235 = vunpack.c.l.b16 %v4201
    %v4236 = vunpack.c.h.b16 %v4201
    %v4237 = vunpack.c.l.b16 %v4202
    %v4238 = vunpack.c.h.b16 %v4202
    %v4239 = vunpack.c.l.b16 %v4203
    %v4240 = vunpack.c.h.b16 %v4203
    %v4241 = vunpack.c.l.b16 %v4204
    %v4242 = vunpack.c.h.b16 %v4204
    %v4243 = vunpack.c.l.b16 %v4205
    %v4244 = vunpack.c.h.b16 %v4205
    %v4245 = vunpack.c.l.b16 %v4206
    %v4246 = vunpack.c.h.b16 %v4206
    %v4247 = vunpack.c.l.b16 %v4207
    %v4248 = vunpack.c.h.b16 %v4207
    %v4249 = vunpack.c.l.b16 %v4208
    %v4250 = vunpack.c.h.b16 %v4208
    %v4251 = vunpack.c.l.b16 %v4209
    %v4252 = vunpack.c.h.b16 %v4209
    %v4253 = vunpack.c.l.b16 %v4210
    %v4254 = vunpack.c.h.b16 %v4210
    %v4255 = vunpack.c.l.b16 %v4211
    %v4256 = vunpack.c.h.b16 %v4211
    %v4257 = vunpack.c.l.b16 %v4212
    %v4258 = vunpack.c.h.b16 %v4212
    %v4259 = vunpack.c.l.b16 %v4213
    %v4260 = vunpack.c.h.b16 %v4213
    %v4261 = vunpack.c.l.b16 %v4214
    %v4262 = vunpack.c.h.b16 %v4214
    %v4263 = vpack.c.b16 %v4231, %v4231
    %v4264 = vpack.c.b16 %v4232, %v4232
    %v4265 = vpack.c.b16 %v4233, %v4233
    %v4266 = vpack.c.b16 %v4234, %v4234
    %v4267 = vpack.c.b16 %v4235, %v4235
    %v4268 = vpack.c.b16 %v4236, %v4236
    %v4269 = vpack.c.b16 %v4237, %v4237
    %v4270 = vpack.c.b16 %v4238, %v4238
    %v4271 = vpack.c.b16 %v4239, %v4239
    %v4272 = vpack.c.b16 %v4240, %v4240
    %v4273 = vpack.c.b16 %v4241, %v4241
    %v4274 = vpack.c.b16 %v4242, %v4242
    %v4275 = vpack.c.b16 %v4243, %v4243
    %v4276 = vpack.c.b16 %v4244, %v4244
    %v4277 = vpack.c.b16 %v4245, %v4245
    %v4278 = vpack.c.b16 %v4246, %v4246
    %v4279 = vpack.c.b16 %v4247, %v4247
    %v4280 = vpack.c.b16 %v4248, %v4248
    %v4281 = vpack.c.b16 %v4249, %v4249
    %v4282 = vpack.c.b16 %v4250, %v4250
    %v4283 = vpack.c.b16 %v4251, %v4251
    %v4284 = vpack.c.b16 %v4252, %v4252
    %v4285 = vpack.c.b16 %v4253, %v4253
    %v4286 = vpack.c.b16 %v4254, %v4254
    %v4287 = vpack.c.b16 %v4255, %v4255
    %v4288 = vpack.c.b16 %v4256, %v4256
    %v4289 = vpack.c.b16 %v4257, %v4257
    %v4290 = vpack.c.b16 %v4258, %v4258
    %v4291 = vpack.c.b16 %v4259, %v4259
    %v4292 = vpack.c.b16 %v4260, %v4260
    %v4293 = vpack.c.b16 %v4261, %v4261
    %v4294 = vpack.c.b16 %v4262, %v4262
    %vm4327 = vcmask 519168
    %4328 = vst.msk [vmem:[#allocation2] sm:$0xf] %vm4327, %v4263
    %4329 = vst.msk [vmem:[#allocation2 + $0x4] sm:$0xf] %vm4327, %v4264
    %4330 = vst.msk [vmem:[#allocation2 + $0x8] sm:$0xf] %vm4327, %v4265
    %4331 = vst.msk [vmem:[#allocation2 + $0xc] sm:$0xf] %vm4327, %v4266
    %4332 = vst.msk [vmem:[#allocation2 + $0x10] sm:$0xf] %vm4327, %v4267
    %4333 = vst.msk [vmem:[#allocation2 + $0x14] sm:$0xf] %vm4327, %v4268
    %4334 = vst.msk [vmem:[#allocation2 + $0x18] sm:$0xf] %vm4327, %v4269
    %4335 = vst.msk [vmem:[#allocation2 + $0x1c] sm:$0xf] %vm4327, %v4270
    %4336 = vst.msk [vmem:[#allocation2 + $0x20] sm:$0xf] %vm4327, %v4271
    %4337 = vst.msk [vmem:[#allocation2 + $0x24] sm:$0xf] %vm4327, %v4272
    %4338 = vst.msk [vmem:[#allocation2 + $0x28] sm:$0xf] %vm4327, %v4273
    %4339 = vst.msk [vmem:[#allocation2 + $0x2c] sm:$0xf] %vm4327, %v4274
    %4340 = vst.msk [vmem:[#allocation2 + $0x30] sm:$0xf] %vm4327, %v4275
    %4341 = vst.msk [vmem:[#allocation2 + $0x34] sm:$0xf] %vm4327, %v4276
    %4342 = vst.msk [vmem:[#allocation2 + $0x38] sm:$0xf] %vm4327, %v4277
    %4343 = vst.msk [vmem:[#allocation2 + $0x3c] sm:$0xf] %vm4327, %v4278
    %4344 = vst.msk [vmem:[#allocation2 + $0x40] sm:$0xf] %vm4327, %v4279
    %4345 = vst.msk [vmem:[#allocation2 + $0x44] sm:$0xf] %vm4327, %v4280
    %4346 = vst.msk [vmem:[#allocation2 + $0x48] sm:$0xf] %vm4327, %v4281
    %4347 = vst.msk [vmem:[#allocation2 + $0x4c] sm:$0xf] %vm4327, %v4282
    %4348 = vst.msk [vmem:[#allocation2 + $0x50] sm:$0xf] %vm4327, %v4283
    %4349 = vst.msk [vmem:[#allocation2 + $0x54] sm:$0xf] %vm4327, %v4284
    %4350 = vst.msk [vmem:[#allocation2 + $0x58] sm:$0xf] %vm4327, %v4285
    %4351 = vst.msk [vmem:[#allocation2 + $0x5c] sm:$0xf] %vm4327, %v4286
    %4352 = vst.msk [vmem:[#allocation2 + $0x60] sm:$0xf] %vm4327, %v4287
    %4353 = vst.msk [vmem:[#allocation2 + $0x64] sm:$0xf] %vm4327, %v4288
    %4354 = vst.msk [vmem:[#allocation2 + $0x68] sm:$0xf] %vm4327, %v4289
    %4355 = vst.msk [vmem:[#allocation2 + $0x6c] sm:$0xf] %vm4327, %v4290
    %4356 = vst.msk [vmem:[#allocation2 + $0x70] sm:$0xf] %vm4327, %v4291
    %4357 = vst.msk [vmem:[#allocation2 + $0x74] sm:$0xf] %vm4327, %v4292
    %4358 = vst.msk [vmem:[#allocation2 + $0x78] sm:$0xf] %vm4327, %v4293
    %4359 = vst.msk [vmem:[#allocation2 + $0x7c] sm:$0xf] %vm4327, %v4294
    // Predicated region
    $region54: #{single_template_embedding_forward.1} parent=1 // pred_check
      _
    $region55: #{single_template_embedding_forward.1} parent=1 // pred_check_branch
      %4361 = sbr.rel (0) target = $region57
    $region56: #{single_template_embedding_forward.1} parent=1 // pred_region
      %s4363 = ssub.s32 2048, 2048
      %4364 = vsyncadd [#allocation3], %s4363
      %s4365 = sshll.u32 [#allocation2], 4
      %s4366 = int_to_ptr.vmem [resolvable:$true] %s4365
      %4371 = dma.vmem_to_hbm [thread:$0]  %s4366, 2048, %s13, [#allocation3], 64, 64, 4
    $region57: #{single_template_embedding_forward.1} parent=1 // pred_fallthru
      _
    // Predicated region
    $region58: #{single_template_embedding_forward.1} parent=1 // pred_check
      _
    $region59: #{single_template_embedding_forward.1} parent=1 // pred_check_branch
      %4373 = sbr.rel (0) target = $region61
    $region60: #{single_template_embedding_forward.1} parent=1 // pred_region
      %4374 = dma.done [#allocation3], 2048
    $region61: #{single_template_embedding_forward.1} parent=1 // pred_fallthru
      _
    %4375 = vsyncpa [#allocation3], 1

</llo_original>
